<compile_context>
chip_gen: v5e
topology: v5e:2x2
jax: 0.10.0
libtpu: 0.0.40
codegen_flags: <defaults>
</compile_context>

<pallas_src>
import functools

import jax
import jax.numpy as jnp
from jax import lax
from jax.experimental import pallas as pl
from jax.experimental.pallas import tpu as pltpu

LANE = 128


def _round_up(x, m):
    return (x + m - 1) // m * m


def _pick_row_chunk(H, W, target_m=512):
    """Largest divisor of H with row_chunk*W <= target_m, preferring sublane-aligned m."""
    divisors = [d for d in range(1, H + 1) if H % d == 0 and d * W <= target_m]
    if not divisors:
        return 1
    for align in (16, 8, 1):          # 16 for bf16 packing, 8 for f32 sublanes
        good = [d for d in divisors if (d * W) % align == 0]
        if good:
            return max(good)
    return max(divisors)


def _resblock_kernel(x_ref, w1_ref, b1_ref, w2_ref, b2_ref, out_ref, y1scr,
                     *, row_chunk):
    """Fused ResBlock for one image: out = relu(BN2(conv2(relu(BN1(conv1(x))))) + x).

    x_ref/out_ref: (1, H, W, Cp) blocks (lane-dense NHWC).
    w*_ref: (3, 3*Cp, Cp) weight slabs with BN scale folded in; b*_ref: (1, Cp) bias.
    y1scr: (H+2, W, Cp) row-padded VMEM scratch for the intermediate (never hits HBM).
    """
    _, H, W, cp = x_ref.shape
    rc = row_chunk
    m = rc * W                         # flattened MXU M per chunk (~256-512)
    n_chunks = H // rc
    cdt = w1_ref.dtype                 # MXU operand dtype (bf16 or f32)

    # Zero the halo rows of the y1 scratch once.
    zy = jnp.zeros((W, cp), y1scr.dtype)
    y1scr[0] = zy
    y1scr[H + 1] = zy

    b1 = b1_ref[...]                   # (1, cp) f32
    b2 = b2_ref[...]

    # Column-edge masks, hoisted out of the chunk loops (JAX doesn't CSE iota).
    col = lax.broadcasted_iota(jnp.int32, (m, 1), 0) % W
    not_first = col != 0               # w > 0   (left neighbour exists)
    not_last = col != (W - 1)          # w < W-1 (right neighbour exists)

    def window_taps(win_flat):
        # win_flat: ((rc+2)*W, cp) f32 window covering rows [r0-1, r0+rc].
        # dy tap = rows [r0+dy-1, r0+dy-1+rc)  ==  flat rows [dy*W, dy*W+m).
        return tuple(win_flat[dy * W: dy * W + m] for dy in range(3))

    def conv_chunk(taps, w_ref, bias):
        # taps: 3 x (m, cp) f32 dy-row-sets.  dx taps are built with pltpu.roll
        # (XLU) + edge-column masks and concatenated on the lane axis, so each
        # dy tap is a single (m, 3*cp) @ (3*cp, cp) MXU matmul.
        acc = jnp.zeros((m, cp), jnp.float32)
        for dy in range(3):
            t = taps[dy]
            left = jnp.where(not_first, pltpu.roll(t, 1, axis=0), 0.0)
            right = jnp.where(not_last, pltpu.roll(t, m - 1, axis=0), 0.0)
            patch = jnp.concatenate([left, t, right], axis=-1).astype(cdt)
            acc = acc + jnp.dot(patch, w_ref[dy],
                                preferred_element_type=jnp.float32)
        return acc + bias              # BN scale already folded into w_ref

    # ---- conv1 + BN1 + ReLU -> y1 scratch (row-padded, stays in VMEM). ----
    @pl.loop(0, n_chunks)
    def _(i):
        r0 = pl.multiple_of(i * rc, rc)
        center = x_ref[0, pl.ds(r0, rc)].astype(jnp.float32).reshape(m, cp)
        above = x_ref[0, pl.ds(jnp.maximum(r0 - 1, 0), 1)]
        above = jnp.where(r0 > 0, above.astype(jnp.float32).reshape(W, cp), 0.0)
        below = x_ref[0, pl.ds(jnp.minimum(r0 + rc, H - 1), 1)]
        below = jnp.where(r0 + rc < H,
                          below.astype(jnp.float32).reshape(W, cp), 0.0)
        win = jnp.concatenate([above, center, below], axis=0)   # ((rc+2)*W, cp)
        y = jnp.maximum(conv_chunk(window_taps(win), w1_ref, b1), 0.0)
        y1scr[pl.ds(r0 + 1, rc)] = y.reshape(rc, W, cp).astype(y1scr.dtype)

    # ---- conv2 + BN2 + identity residual + ReLU -> output block. ----------
    @pl.loop(0, n_chunks)
    def _(i):
        r0 = pl.multiple_of(i * rc, rc)
        win = y1scr[pl.ds(r0, rc + 2)].astype(jnp.float32)
        win = win.reshape((rc + 2) * W, cp)
        y = conv_chunk(window_taps(win), w2_ref, b2)
        res = x_ref[0, pl.ds(r0, rc)].astype(jnp.float32).reshape(m, cp)
        y = jnp.maximum(y + res, 0.0)
        out_ref[0, pl.ds(r0, rc)] = y.reshape(rc, W, cp).astype(out_ref.dtype)


def _fold_bn(bn, eps, c_pad):
    """Eval-mode BN -> (per-channel scale (C,), bias zero-padded to (1, c_pad))."""
    gamma, beta, mean, var = bn
    scale = gamma.astype(jnp.float32) * lax.rsqrt(var.astype(jnp.float32) + eps)
    bias = beta.astype(jnp.float32) - mean.astype(jnp.float32) * scale
    c = gamma.shape[0]
    b = jnp.zeros((1, c_pad), jnp.float32).at[0, :c].set(bias)
    return scale, b


def _prep_conv_weight(w_oihw, scale, cin_pad, cout_pad, dtype):
    """OIHW (Cout,Cin,3,3) -> (3, 3*Cin_pad, Cout_pad) slab, BN scale folded in.

    K-axis layout per dy row: [dx=0 (left) | dx=1 (center) | dx=2 (right)],
    matching the in-kernel patch concatenation.
    """
    w_hwio = jnp.transpose(w_oihw, (2, 3, 1, 0)).astype(jnp.float32)  # (3,3,Cin,Cout)
    w_hwio = w_hwio * scale[None, None, None, :]                      # fold BN scale
    kh, kw, cin, cout = w_hwio.shape
    w_pad = jnp.zeros((kh, kw, cin_pad, cout_pad), jnp.float32)
    w_pad = w_pad.at[:, :, :cin, :cout].set(w_hwio)
    return w_pad.reshape(kh, kw * cin_pad, cout_pad).astype(dtype)


@functools.partial(jax.jit, static_argnames=("act_dtype",))
def resblock_forward(x_nchw, w1, bn1, w2, bn2, eps=1e-5,
                     act_dtype=jnp.bfloat16):
    """ResBlock forward (stride=1, identity shortcut). x_nchw: (N,C,H,W) f32."""
    N, C, H, W = x_nchw.shape
    cout = w1.shape[0]
    if C != cout:
        raise NotImplementedError(
            "only the stride=1 identity-shortcut ResBlock is implemented")
    cp = _round_up(C, LANE)

    # Layout glue (once per block here; once per network in a full Resnet):
    # NCHW -> NHWC, channels zero-padded to a 128-lane multiple, cast to bf16.
    x_nhwc = jnp.transpose(x_nchw, (0, 2, 3, 1))
    x_p = jnp.zeros((N, H, W, cp), act_dtype).at[..., :C].set(
        x_nhwc.astype(act_dtype))

    s1, b1 = _fold_bn(bn1, eps, cp)
    s2, b2 = _fold_bn(bn2, eps, cp)
    w1_k = _prep_conv_weight(w1, s1, cp, cp, act_dtype)
    w2_k = _prep_conv_weight(w2, s2, cp, cp, act_dtype)

    row_chunk = _pick_row_chunk(H, W)   # target m = rc*W in ~256..512
    kernel = functools.partial(_resblock_kernel, row_chunk=row_chunk)

    # Grid-invariant weight slabs are single-buffered (no 2x VMEM on v7x).
    w_spec = pl.BlockSpec((3, 3 * cp, cp), lambda n: (0, 0, 0),
                          pipeline_mode=pl.Buffered(1))
    b_spec = pl.BlockSpec((1, cp), lambda n: (0, 0))

    grid_spec = pltpu.PrefetchScalarGridSpec(
        num_scalar_prefetch=0,
        grid=(N,),
        in_specs=[
            pl.BlockSpec((1, H, W, cp), lambda n: (n, 0, 0, 0)),  # x (NHWC)
            w_spec,                                               # conv1 slab
            b_spec,                                               # BN1 bias
            w_spec,                                               # conv2 slab
            b_spec,                                               # BN2 bias
        ],
        out_specs=pl.BlockSpec((1, H, W, cp), lambda n: (n, 0, 0, 0)),
        scratch_shapes=[
            pltpu.VMEM((H + 2, W, cp), act_dtype),  # row-padded y1 (on-chip only)
        ],
    )

    out_p = pl.pallas_call(
        kernel,
        out_shape=jax.ShapeDtypeStruct((N, H, W, cp), act_dtype),
        grid_spec=grid_spec,
        compiler_params=pltpu.CompilerParams(
            dimension_semantics=("parallel",),       # images independent
            vmem_limit_bytes=48 * 1024 * 1024,       # >16MiB v5e default, <64MiB v7x
        ),
    )(x_p, w1_k, b1, w2_k, b2)

    # Drop the lane padding and go back to PyTorch's NCHW (f32).
    return jnp.transpose(out_p[..., :C].astype(jnp.float32), (0, 3, 1, 2))


# ---------------------------------------------------------------------------
# Pure-JAX reference (semantics check) ---------------------------------------
def resblock_reference(x, w1, bn1, w2, bn2, eps=1e-5):
    def conv(a, w):
        return lax.conv_general_dilated(
            a, w, window_strides=(1, 1), padding=((1, 1), (1, 1)),
            dimension_numbers=("NCHW", "OIHW", "NCHW"))

    def bn(a, p):
        g, b, m, v = (t[None, :, None, None] for t in p)
        return (a - m) / jnp.sqrt(v + eps) * g + b

    y = jax.nn.relu(bn(conv(x, w1), bn1))
    y = bn(conv(y, w2), bn2)
    return jax.nn.relu(y + x)


if __name__ == "__main__":
    key = jax.random.PRNGKey(0)
    N, C, H, W = 2, 4, 16, 16        # in_channel == out_channel, stride=1, shortcut=None

    k = jax.random.split(key, 8)
    x = jax.random.normal(k[0], (N, C, H, W), jnp.float32)
    w1 = jax.random.normal(k[1], (C, C, 3, 3), jnp.float32) * 0.1
    w2 = jax.random.normal(k[2], (C, C, 3, 3), jnp.float32) * 0.1
    bn1 = (1.0 + 0.1 * jax.random.normal(k[3], (C,), jnp.float32),   # gamma
           0.1 * jax.random.normal(k[4], (C,), jnp.float32),         # beta
           0.1 * jax.random.normal(k[5], (C,), jnp.float32),         # running_mean
           1.0 + 0.1 * jax.random.uniform(k[6], (C,), jnp.float32))  # running_var
    bn2 = (jnp.ones((C,), jnp.float32), jnp.zeros((C,), jnp.float32),
           jnp.zeros((C,), jnp.float32), jnp.ones((C,), jnp.float32))

    ref = resblock_reference(x, w1, bn1, w2, bn2)

    # f32 path: tight structural check against the reference.
    out_f32 = jax.block_until_ready(
        resblock_forward(x, w1, bn1, w2, bn2, act_dtype=jnp.float32))
    assert out_f32.shape == (N, C, H, W)
    err_f32 = float(jnp.max(jnp.abs(out_f32 - ref)))
    assert jnp.allclose(out_f32, ref, atol=2e-3, rtol=2e-3), err_f32

    # bf16 path (the performance default): looser tolerance, f32 accumulation.
    out_bf16 = jax.block_until_ready(resblock_forward(x, w1, bn1, w2, bn2))
    assert out_bf16.shape == (N, C, H, W)
    err_bf16 = float(jnp.max(jnp.abs(out_bf16 - ref)))
    assert jnp.allclose(out_bf16, ref, atol=8e-2, rtol=8e-2), err_bf16

    print("KERNEL_OK")
</pallas_src>

<mosaic_0001>
module attributes {stable_mosaic.version = 11 : i64} {
  func.func @_resblock_kernel(%arg0: i32, %arg1: memref<1x16x16x128xf32, #tpu.memory_space<vmem>>, %arg2: memref<3x384x128xf32, #tpu.memory_space<vmem>>, %arg3: memref<1x128xf32, #tpu.memory_space<vmem>>, %arg4: memref<3x384x128xf32, #tpu.memory_space<vmem>>, %arg5: memref<1x128xf32, #tpu.memory_space<vmem>>, %arg6: memref<1x16x16x128xf32, #tpu.memory_space<vmem>>, %arg7: memref<18x16x128xf32, #tpu.memory_space<vmem>>) attributes {dimension_semantics = [#tpu.dimension_semantics<parallel>], iteration_bounds = array<i64: 2>, scalar_prefetch = 0 : i64, scratch_operands = 1 : i64, tpu.core_type = #tpu.core_type<tc>, window_params = [{transform_indices = @transform_0, window_bounds = array<i64: 1, 16, 16, 128>}, {pipeline_mode = #tpu.pipeline_mode<synchronous>, transform_indices = @transform_1, window_bounds = array<i64: 3, 384, 128>}, {pipeline_mode = #tpu.pipeline_mode<synchronous>, transform_indices = @transform_2, window_bounds = array<i64: 1, 128>}, {pipeline_mode = #tpu.pipeline_mode<synchronous>, transform_indices = @transform_3, window_bounds = array<i64: 3, 384, 128>}, {pipeline_mode = #tpu.pipeline_mode<synchronous>, transform_indices = @transform_4, window_bounds = array<i64: 1, 128>}, {transform_indices = @transform_5, window_bounds = array<i64: 1, 16, 16, 128>}]} {
    %cst = arith.constant 0.000000e+00 : f32
    %0 = vector.broadcast %cst : f32 to vector<16x128xf32>
    %c0 = arith.constant 0 : index
    %c0_0 = arith.constant 0 : index
    %c0_1 = arith.constant 0 : index
    %1 = vector.load %arg7[%c0, %c0_0, %c0_1] : memref<18x16x128xf32, #tpu.memory_space<vmem>>, vector<1x16x128xf32>
    %2 = vector.shape_cast %1 : vector<1x16x128xf32> to vector<16x128xf32>
    %3 = vector.shape_cast %0 : vector<16x128xf32> to vector<1x16x128xf32>
    tpu.vector_store %arg7[%c0, %c0_0, %c0_1], %3 {strides = array<i32>} : memref<18x16x128xf32, #tpu.memory_space<vmem>>, vector<1x16x128xf32>,
    %c17 = arith.constant 17 : index
    %c0_2 = arith.constant 0 : index
    %c0_3 = arith.constant 0 : index
    %4 = vector.load %arg7[%c17, %c0_2, %c0_3] : memref<18x16x128xf32, #tpu.memory_space<vmem>>, vector<1x16x128xf32>
    %5 = vector.shape_cast %4 : vector<1x16x128xf32> to vector<16x128xf32>
    %6 = vector.shape_cast %0 : vector<16x128xf32> to vector<1x16x128xf32>
    tpu.vector_store %arg7[%c17, %c0_2, %c0_3], %6 {strides = array<i32>} : memref<18x16x128xf32, #tpu.memory_space<vmem>>, vector<1x16x128xf32>,
    %c0_4 = arith.constant 0 : index
    %c0_5 = arith.constant 0 : index
    %7 = vector.load %arg3[%c0_4, %c0_5] : memref<1x128xf32, #tpu.memory_space<vmem>>, vector<1x128xf32>
    %c0_6 = arith.constant 0 : index
    %c0_7 = arith.constant 0 : index
    %8 = vector.load %arg5[%c0_6, %c0_7] : memref<1x128xf32, #tpu.memory_space<vmem>>, vector<1x128xf32>
    %9 = tpu.iota {dimensions = array<i32: 0>} : vector<256x1xi32>
    %c16_i32 = arith.constant 16 : i32
    %c0_i32 = arith.constant 0 : i32
    %10 = arith.cmpi eq, %c16_i32, %c0_i32 : i32
    %c1_i32 = arith.constant 1 : i32
    %11 = arith.select %10, %c1_i32, %c16_i32 : i32
    %12 = vector.broadcast %11 : i32 to vector<256x1xi32>
    %13 = arith.remsi %9, %12 : vector<256x1xi32>
    %c0_i32_8 = arith.constant 0 : i32
    %14 = vector.broadcast %c0_i32_8 : i32 to vector<256x1xi32>
    %15 = arith.cmpi ne, %13, %14 : vector<256x1xi32>
    %c0_i32_9 = arith.constant 0 : i32
    %16 = vector.broadcast %c0_i32_9 : i32 to vector<256x1xi32>
    %17 = arith.cmpi slt, %13, %16 : vector<256x1xi32>
    %c0_i32_10 = arith.constant 0 : i32
    %18 = arith.cmpi slt, %11, %c0_i32_10 : i32
    %19 = vector.broadcast %18 : i1 to vector<256x1xi1>
    %20 = vector.broadcast %19 : vector<256x1xi1> to vector<256x1xi1>
    %21 = arith.xori %17, %20 : vector<256x1xi1>
    %22 = arith.andi %21, %15 : vector<256x1xi1>
    %23 = vector.broadcast %11 : i32 to vector<256x1xi32>
    %24 = arith.addi %13, %23 : vector<256x1xi32>
    %25 = arith.select %22, %24, %13 : vector<256x1xi1>, vector<256x1xi32>
    %c0_i32_11 = arith.constant 0 : i32
    %26 = vector.broadcast %c0_i32_11 : i32 to vector<256x1xi32>
    %27 = arith.cmpi ne, %25, %26 : vector<256x1xi32>
    %c15_i32 = arith.constant 15 : i32
    %28 = vector.broadcast %c15_i32 : i32 to vector<256x1xi32>
    %29 = arith.cmpi ne, %25, %28 : vector<256x1xi32>
    %c0_i32_12 = arith.constant 0 : i32
    %c1_i32_13 = arith.constant 1 : i32
    %30 = arith.muli %c0_i32_12, %c1_i32_13 : i32
    %c0_i32_14 = arith.constant 0 : i32
    %31 = arith.addi %c0_i32_14, %30 : i32
    %c16_i32_15 = arith.constant 16 : i32
    %32 = arith.muli %31, %c16_i32_15 : i32
    %33 = tpu.assume_multiple %32, 16 : i32
    %c0_16 = arith.constant 0 : index
    %34 = arith.index_cast %33 : i32 to index
    %c0_17 = arith.constant 0 : index
    %c0_18 = arith.constant 0 : index
    %35 = vector.load %arg1[%c0_16, %34, %c0_17, %c0_18] : memref<1x16x16x128xf32, #tpu.memory_space<vmem>>, vector<1x16x16x128xf32>
    %36 = vector.shape_cast %35 : vector<1x16x16x128xf32> to vector<16x16x128xf32>
    %37 = vector.shape_cast %36 : vector<16x16x128xf32> to vector<256x128xf32>
    %c1_i32_19 = arith.constant 1 : i32
    %38 = arith.subi %33, %c1_i32_19 : i32
    %c0_i32_20 = arith.constant 0 : i32
    %39 = arith.maxsi %38, %c0_i32_20 : i32
    %c0_21 = arith.constant 0 : index
    %40 = arith.index_cast %39 : i32 to index
    %c0_22 = arith.constant 0 : index
    %c0_23 = arith.constant 0 : index
    %41 = vector.load %arg1[%c0_21, %40, %c0_22, %c0_23] : memref<1x16x16x128xf32, #tpu.memory_space<vmem>>, vector<1x1x16x128xf32>
    %42 = vector.shape_cast %41 : vector<1x1x16x128xf32> to vector<1x16x128xf32>
    %c0_i32_24 = arith.constant 0 : i32
    %43 = arith.cmpi sgt, %33, %c0_i32_24 : i32
    %44 = vector.shape_cast %42 : vector<1x16x128xf32> to vector<16x128xf32>
    %cst_25 = arith.constant 0.000000e+00 : f32
    %45 = vector.broadcast %cst_25 : f32 to vector<16x128xf32>
    %46 = arith.select %43, %44, %45 : vector<16x128xf32>
    %c16_i32_26 = arith.constant 16 : i32
    %47 = arith.addi %33, %c16_i32_26 : i32
    %c15_i32_27 = arith.constant 15 : i32
    %48 = arith.minsi %47, %c15_i32_27 : i32
    %c0_28 = arith.constant 0 : index
    %49 = arith.index_cast %48 : i32 to index
    %c0_29 = arith.constant 0 : index
    %c0_30 = arith.constant 0 : index
    %50 = vector.load %arg1[%c0_28, %49, %c0_29, %c0_30] : memref<1x16x16x128xf32, #tpu.memory_space<vmem>>, vector<1x1x16x128xf32>
    %51 = vector.shape_cast %50 : vector<1x1x16x128xf32> to vector<1x16x128xf32>
    %c16_i32_31 = arith.constant 16 : i32
    %52 = arith.addi %33, %c16_i32_31 : i32
    %c16_i32_32 = arith.constant 16 : i32
    %53 = arith.cmpi slt, %52, %c16_i32_32 : i32
    %54 = vector.shape_cast %51 : vector<1x16x128xf32> to vector<16x128xf32>
    %cst_33 = arith.constant 0.000000e+00 : f32
    %55 = vector.broadcast %cst_33 : f32 to vector<16x128xf32>
    %56 = arith.select %53, %54, %55 : vector<16x128xf32>
    %57 = tpu.concatenate %46, %37, %56 in 0 : vector<16x128xf32>, vector<256x128xf32>, vector<16x128xf32> -> vector<288x128xf32>
    %58 = vector.extract_strided_slice %57 {offsets = [0, 0], sizes = [256, 128], strides = [1, 1]} : vector<288x128xf32> to vector<256x128xf32>
    %59 = vector.extract_strided_slice %57 {offsets = [16, 0], sizes = [256, 128], strides = [1, 1]} : vector<288x128xf32> to vector<256x128xf32>
    %60 = vector.extract_strided_slice %57 {offsets = [32, 0], sizes = [256, 128], strides = [1, 1]} : vector<288x128xf32> to vector<256x128xf32>
    %cst_34 = arith.constant 0.000000e+00 : f32
    %61 = vector.broadcast %cst_34 : f32 to vector<256x128xf32>
    %c1_i32_35 = arith.constant 1 : i32
    %62 = tpu.dynamic_rotate %58 by %c1_i32_35 dim 0 : vector<256x128xf32>, i32 -> vector<256x128xf32>
    %cst_36 = arith.constant 0.000000e+00 : f32
    %63 = vector.shape_cast %27 : vector<256x1xi1> to vector<256x1xi1>
    %64 = vector.broadcast %63 : vector<256x1xi1> to vector<256x128xi1>
    %65 = vector.broadcast %cst_36 : f32 to vector<256x128xf32>
    %66 = arith.select %64, %62, %65 : vector<256x128xi1>, vector<256x128xf32>
    %c255_i32 = arith.constant 255 : i32
    %67 = tpu.dynamic_rotate %58 by %c255_i32 dim 0 : vector<256x128xf32>, i32 -> vector<256x128xf32>
    %cst_37 = arith.constant 0.000000e+00 : f32
    %68 = vector.shape_cast %29 : vector<256x1xi1> to vector<256x1xi1>
    %69 = vector.broadcast %68 : vector<256x1xi1> to vector<256x128xi1>
    %70 = vector.broadcast %cst_37 : f32 to vector<256x128xf32>
    %71 = arith.select %69, %67, %70 : vector<256x128xi1>, vector<256x128xf32>
    %72 = tpu.concatenate %66, %58, %71 in 1 : vector<256x128xf32>, vector<256x128xf32>, vector<256x128xf32> -> vector<256x384xf32>
    %c0_38 = arith.constant 0 : index
    %c0_39 = arith.constant 0 : index
    %c0_40 = arith.constant 0 : index
    %73 = vector.load %arg2[%c0_38, %c0_39, %c0_40] : memref<3x384x128xf32, #tpu.memory_space<vmem>>, vector<1x384x128xf32>
    %74 = vector.shape_cast %73 : vector<1x384x128xf32> to vector<384x128xf32>
    %cst_41 = arith.constant dense<0.000000e+00> : vector<256x128xf32>
    %75 = tpu.matmul %72, %74, %cst_41 {dimension_numbers = #tpu.dot_dimension_numbers<[1], [0], [0], [1], [0, 0, 1, 1], [], []>} : vector<256x384xf32>, vector<384x128xf32>, vector<256x128xf32> -> vector<256x128xf32>
    %76 = arith.addf %61, %75 : vector<256x128xf32>
    %c1_i32_42 = arith.constant 1 : i32
    %77 = tpu.dynamic_rotate %59 by %c1_i32_42 dim 0 : vector<256x128xf32>, i32 -> vector<256x128xf32>
    %cst_43 = arith.constant 0.000000e+00 : f32
    %78 = vector.shape_cast %27 : vector<256x1xi1> to vector<256x1xi1>
    %79 = vector.broadcast %78 : vector<256x1xi1> to vector<256x128xi1>
    %80 = vector.broadcast %cst_43 : f32 to vector<256x128xf32>
    %81 = arith.select %79, %77, %80 : vector<256x128xi1>, vector<256x128xf32>
    %c255_i32_44 = arith.constant 255 : i32
    %82 = tpu.dynamic_rotate %59 by %c255_i32_44 dim 0 : vector<256x128xf32>, i32 -> vector<256x128xf32>
    %cst_45 = arith.constant 0.000000e+00 : f32
    %83 = vector.shape_cast %29 : vector<256x1xi1> to vector<256x1xi1>
    %84 = vector.broadcast %83 : vector<256x1xi1> to vector<256x128xi1>
    %85 = vector.broadcast %cst_45 : f32 to vector<256x128xf32>
    %86 = arith.select %84, %82, %85 : vector<256x128xi1>, vector<256x128xf32>
    %87 = tpu.concatenate %81, %59, %86 in 1 : vector<256x128xf32>, vector<256x128xf32>, vector<256x128xf32> -> vector<256x384xf32>
    %c1 = arith.constant 1 : index
    %c0_46 = arith.constant 0 : index
    %c0_47 = arith.constant 0 : index
    %88 = vector.load %arg2[%c1, %c0_46, %c0_47] : memref<3x384x128xf32, #tpu.memory_space<vmem>>, vector<1x384x128xf32>
    %89 = vector.shape_cast %88 : vector<1x384x128xf32> to vector<384x128xf32>
    %cst_48 = arith.constant dense<0.000000e+00> : vector<256x128xf32>
    %90 = tpu.matmul %87, %89, %cst_48 {dimension_numbers = #tpu.dot_dimension_numbers<[1], [0], [0], [1], [0, 0, 1, 1], [], []>} : vector<256x384xf32>, vector<384x128xf32>, vector<256x128xf32> -> vector<256x128xf32>
    %91 = arith.addf %76, %90 : vector<256x128xf32>
    %c1_i32_49 = arith.constant 1 : i32
    %92 = tpu.dynamic_rotate %60 by %c1_i32_49 dim 0 : vector<256x128xf32>, i32 -> vector<256x128xf32>
    %cst_50 = arith.constant 0.000000e+00 : f32
    %93 = vector.shape_cast %27 : vector<256x1xi1> to vector<256x1xi1>
    %94 = vector.broadcast %93 : vector<256x1xi1> to vector<256x128xi1>
    %95 = vector.broadcast %cst_50 : f32 to vector<256x128xf32>
    %96 = arith.select %94, %92, %95 : vector<256x128xi1>, vector<256x128xf32>
    %c255_i32_51 = arith.constant 255 : i32
    %97 = tpu.dynamic_rotate %60 by %c255_i32_51 dim 0 : vector<256x128xf32>, i32 -> vector<256x128xf32>
    %cst_52 = arith.constant 0.000000e+00 : f32
    %98 = vector.shape_cast %29 : vector<256x1xi1> to vector<256x1xi1>
    %99 = vector.broadcast %98 : vector<256x1xi1> to vector<256x128xi1>
    %100 = vector.broadcast %cst_52 : f32 to vector<256x128xf32>
    %101 = arith.select %99, %97, %100 : vector<256x128xi1>, vector<256x128xf32>
    %102 = tpu.concatenate %96, %60, %101 in 1 : vector<256x128xf32>, vector<256x128xf32>, vector<256x128xf32> -> vector<256x384xf32>
    %c2 = arith.constant 2 : index
    %c0_53 = arith.constant 0 : index
    %c0_54 = arith.constant 0 : index
    %103 = vector.load %arg2[%c2, %c0_53, %c0_54] : memref<3x384x128xf32, #tpu.memory_space<vmem>>, vector<1x384x128xf32>
    %104 = vector.shape_cast %103 : vector<1x384x128xf32> to vector<384x128xf32>
    %cst_55 = arith.constant dense<0.000000e+00> : vector<256x128xf32>
    %105 = tpu.matmul %102, %104, %cst_55 {dimension_numbers = #tpu.dot_dimension_numbers<[1], [0], [0], [1], [0, 0, 1, 1], [], []>} : vector<256x384xf32>, vector<384x128xf32>, vector<256x128xf32> -> vector<256x128xf32>
    %106 = arith.addf %91, %105 : vector<256x128xf32>
    %107 = vector.broadcast %7 : vector<1x128xf32> to vector<256x128xf32>
    %108 = arith.addf %106, %107 : vector<256x128xf32>
    %cst_56 = arith.constant 0.000000e+00 : f32
    %109 = vector.broadcast %cst_56 : f32 to vector<256x128xf32>
    %110 = arith.maximumf %108, %109 : vector<256x128xf32>
    %111 = vector.shape_cast %110 : vector<256x128xf32> to vector<16x16x128xf32>
    %c1_i32_57 = arith.constant 1 : i32
    %112 = arith.addi %33, %c1_i32_57 : i32
    %113 = arith.index_cast %112 : i32 to index
    %c0_58 = arith.constant 0 : index
    %c0_59 = arith.constant 0 : index
    %114 = vector.load %arg7[%113, %c0_58, %c0_59] : memref<18x16x128xf32, #tpu.memory_space<vmem>>, vector<16x16x128xf32>
    tpu.vector_store %arg7[%113, %c0_58, %c0_59], %111 {strides = array<i32>} : memref<18x16x128xf32, #tpu.memory_space<vmem>>, vector<16x16x128xf32>,
    %c1_i32_60 = arith.constant 1 : i32
    %c0_i32_61 = arith.constant 0 : i32
    %c1_i32_62 = arith.constant 1 : i32
    %115 = arith.muli %c0_i32_61, %c1_i32_62 : i32
    %c0_i32_63 = arith.constant 0 : i32
    %116 = arith.addi %c0_i32_63, %115 : i32
    %c16_i32_64 = arith.constant 16 : i32
    %117 = arith.muli %116, %c16_i32_64 : i32
    %118 = tpu.assume_multiple %117, 16 : i32
    %119 = arith.index_cast %118 : i32 to index
    %c0_65 = arith.constant 0 : index
    %c0_66 = arith.constant 0 : index
    %120 = vector.load %arg7[%119, %c0_65, %c0_66] : memref<18x16x128xf32, #tpu.memory_space<vmem>>, vector<18x16x128xf32>
    %121 = vector.shape_cast %120 : vector<18x16x128xf32> to vector<288x128xf32>
    %122 = vector.extract_strided_slice %121 {offsets = [0, 0], sizes = [256, 128], strides = [1, 1]} : vector<288x128xf32> to vector<256x128xf32>
    %123 = vector.extract_strided_slice %121 {offsets = [16, 0], sizes = [256, 128], strides = [1, 1]} : vector<288x128xf32> to vector<256x128xf32>
    %124 = vector.extract_strided_slice %121 {offsets = [32, 0], sizes = [256, 128], strides = [1, 1]} : vector<288x128xf32> to vector<256x128xf32>
    %cst_67 = arith.constant 0.000000e+00 : f32
    %125 = vector.broadcast %cst_67 : f32 to vector<256x128xf32>
    %c1_i32_68 = arith.constant 1 : i32
    %126 = tpu.dynamic_rotate %122 by %c1_i32_68 dim 0 : vector<256x128xf32>, i32 -> vector<256x128xf32>
    %cst_69 = arith.constant 0.000000e+00 : f32
    %127 = vector.shape_cast %27 : vector<256x1xi1> to vector<256x1xi1>
    %128 = vector.broadcast %127 : vector<256x1xi1> to vector<256x128xi1>
    %129 = vector.broadcast %cst_69 : f32 to vector<256x128xf32>
    %130 = arith.select %128, %126, %129 : vector<256x128xi1>, vector<256x128xf32>
    %c255_i32_70 = arith.constant 255 : i32
    %131 = tpu.dynamic_rotate %122 by %c255_i32_70 dim 0 : vector<256x128xf32>, i32 -> vector<256x128xf32>
    %cst_71 = arith.constant 0.000000e+00 : f32
    %132 = vector.shape_cast %29 : vector<256x1xi1> to vector<256x1xi1>
    %133 = vector.broadcast %132 : vector<256x1xi1> to vector<256x128xi1>
    %134 = vector.broadcast %cst_71 : f32 to vector<256x128xf32>
    %135 = arith.select %133, %131, %134 : vector<256x128xi1>, vector<256x128xf32>
    %136 = tpu.concatenate %130, %122, %135 in 1 : vector<256x128xf32>, vector<256x128xf32>, vector<256x128xf32> -> vector<256x384xf32>
    %c0_72 = arith.constant 0 : index
    %c0_73 = arith.constant 0 : index
    %c0_74 = arith.constant 0 : index
    %137 = vector.load %arg4[%c0_72, %c0_73, %c0_74] : memref<3x384x128xf32, #tpu.memory_space<vmem>>, vector<1x384x128xf32>
    %138 = vector.shape_cast %137 : vector<1x384x128xf32> to vector<384x128xf32>
    %cst_75 = arith.constant dense<0.000000e+00> : vector<256x128xf32>
    %139 = tpu.matmul %136, %138, %cst_75 {dimension_numbers = #tpu.dot_dimension_numbers<[1], [0], [0], [1], [0, 0, 1, 1], [], []>} : vector<256x384xf32>, vector<384x128xf32>, vector<256x128xf32> -> vector<256x128xf32>
    %140 = arith.addf %125, %139 : vector<256x128xf32>
    %c1_i32_76 = arith.constant 1 : i32
    %141 = tpu.dynamic_rotate %123 by %c1_i32_76 dim 0 : vector<256x128xf32>, i32 -> vector<256x128xf32>
    %cst_77 = arith.constant 0.000000e+00 : f32
    %142 = vector.shape_cast %27 : vector<256x1xi1> to vector<256x1xi1>
    %143 = vector.broadcast %142 : vector<256x1xi1> to vector<256x128xi1>
    %144 = vector.broadcast %cst_77 : f32 to vector<256x128xf32>
    %145 = arith.select %143, %141, %144 : vector<256x128xi1>, vector<256x128xf32>
    %c255_i32_78 = arith.constant 255 : i32
    %146 = tpu.dynamic_rotate %123 by %c255_i32_78 dim 0 : vector<256x128xf32>, i32 -> vector<256x128xf32>
    %cst_79 = arith.constant 0.000000e+00 : f32
    %147 = vector.shape_cast %29 : vector<256x1xi1> to vector<256x1xi1>
    %148 = vector.broadcast %147 : vector<256x1xi1> to vector<256x128xi1>
    %149 = vector.broadcast %cst_79 : f32 to vector<256x128xf32>
    %150 = arith.select %148, %146, %149 : vector<256x128xi1>, vector<256x128xf32>
    %151 = tpu.concatenate %145, %123, %150 in 1 : vector<256x128xf32>, vector<256x128xf32>, vector<256x128xf32> -> vector<256x384xf32>
    %c1_80 = arith.constant 1 : index
    %c0_81 = arith.constant 0 : index
    %c0_82 = arith.constant 0 : index
    %152 = vector.load %arg4[%c1_80, %c0_81, %c0_82] : memref<3x384x128xf32, #tpu.memory_space<vmem>>, vector<1x384x128xf32>
    %153 = vector.shape_cast %152 : vector<1x384x128xf32> to vector<384x128xf32>
    %cst_83 = arith.constant dense<0.000000e+00> : vector<256x128xf32>
    %154 = tpu.matmul %151, %153, %cst_83 {dimension_numbers = #tpu.dot_dimension_numbers<[1], [0], [0], [1], [0, 0, 1, 1], [], []>} : vector<256x384xf32>, vector<384x128xf32>, vector<256x128xf32> -> vector<256x128xf32>
    %155 = arith.addf %140, %154 : vector<256x128xf32>
    %c1_i32_84 = arith.constant 1 : i32
    %156 = tpu.dynamic_rotate %124 by %c1_i32_84 dim 0 : vector<256x128xf32>, i32 -> vector<256x128xf32>
    %cst_85 = arith.constant 0.000000e+00 : f32
    %157 = vector.shape_cast %27 : vector<256x1xi1> to vector<256x1xi1>
    %158 = vector.broadcast %157 : vector<256x1xi1> to vector<256x128xi1>
    %159 = vector.broadcast %cst_85 : f32 to vector<256x128xf32>
    %160 = arith.select %158, %156, %159 : vector<256x128xi1>, vector<256x128xf32>
    %c255_i32_86 = arith.constant 255 : i32
    %161 = tpu.dynamic_rotate %124 by %c255_i32_86 dim 0 : vector<256x128xf32>, i32 -> vector<256x128xf32>
    %cst_87 = arith.constant 0.000000e+00 : f32
    %162 = vector.shape_cast %29 : vector<256x1xi1> to vector<256x1xi1>
    %163 = vector.broadcast %162 : vector<256x1xi1> to vector<256x128xi1>
    %164 = vector.broadcast %cst_87 : f32 to vector<256x128xf32>
    %165 = arith.select %163, %161, %164 : vector<256x128xi1>, vector<256x128xf32>
    %166 = tpu.concatenate %160, %124, %165 in 1 : vector<256x128xf32>, vector<256x128xf32>, vector<256x128xf32> -> vector<256x384xf32>
    %c2_88 = arith.constant 2 : index
    %c0_89 = arith.constant 0 : index
    %c0_90 = arith.constant 0 : index
    %167 = vector.load %arg4[%c2_88, %c0_89, %c0_90] : memref<3x384x128xf32, #tpu.memory_space<vmem>>, vector<1x384x128xf32>
    %168 = vector.shape_cast %167 : vector<1x384x128xf32> to vector<384x128xf32>
    %cst_91 = arith.constant dense<0.000000e+00> : vector<256x128xf32>
    %169 = tpu.matmul %166, %168, %cst_91 {dimension_numbers = #tpu.dot_dimension_numbers<[1], [0], [0], [1], [0, 0, 1, 1], [], []>} : vector<256x384xf32>, vector<384x128xf32>, vector<256x128xf32> -> vector<256x128xf32>
    %170 = arith.addf %155, %169 : vector<256x128xf32>
    %171 = vector.broadcast %8 : vector<1x128xf32> to vector<256x128xf32>
    %172 = arith.addf %170, %171 : vector<256x128xf32>
    %c0_92 = arith.constant 0 : index
    %173 = arith.index_cast %118 : i32 to index
    %c0_93 = arith.constant 0 : index
    %c0_94 = arith.constant 0 : index
    %174 = vector.load %arg1[%c0_92, %173, %c0_93, %c0_94] : memref<1x16x16x128xf32, #tpu.memory_space<vmem>>, vector<1x16x16x128xf32>
    %175 = vector.shape_cast %174 : vector<1x16x16x128xf32> to vector<16x16x128xf32>
    %176 = vector.shape_cast %175 : vector<16x16x128xf32> to vector<256x128xf32>
    %177 = arith.addf %172, %176 : vector<256x128xf32>
    %cst_95 = arith.constant 0.000000e+00 : f32
    %178 = vector.broadcast %cst_95 : f32 to vector<256x128xf32>
    %179 = arith.maximumf %177, %178 : vector<256x128xf32>
    %180 = vector.shape_cast %179 : vector<256x128xf32> to vector<16x16x128xf32>
    %c0_96 = arith.constant 0 : index
    %181 = arith.index_cast %118 : i32 to index
    %c0_97 = arith.constant 0 : index
    %c0_98 = arith.constant 0 : index
    %182 = vector.load %arg6[%c0_96, %181, %c0_97, %c0_98] : memref<1x16x16x128xf32, #tpu.memory_space<vmem>>, vector<1x16x16x128xf32>
    %183 = vector.shape_cast %182 : vector<1x16x16x128xf32> to vector<16x16x128xf32>
    %184 = vector.shape_cast %180 : vector<16x16x128xf32> to vector<1x16x16x128xf32>
    tpu.vector_store %arg6[%c0_96, %181, %c0_97, %c0_98], %184 {strides = array<i32>} : memref<1x16x16x128xf32, #tpu.memory_space<vmem>>, vector<1x16x16x128xf32>,
    %c1_i32_99 = arith.constant 1 : i32
    return
  }
  func.func @transform_0(%arg0: i32) -> (i32, i32, i32, i32) {
    %c0_i32 = arith.constant 0 : i32
    %c0_i32_0 = arith.constant 0 : i32
    %c0_i32_1 = arith.constant 0 : i32
    %c0_i32_2 = arith.constant 0 : i32
    return %arg0, %c0_i32, %c0_i32_0, %c0_i32_1 : i32, i32, i32, i32
  }
  func.func @transform_1(%arg0: i32) -> (i32, i32, i32) {
    %c0_i32 = arith.constant 0 : i32
    %c0_i32_0 = arith.constant 0 : i32
    %c0_i32_1 = arith.constant 0 : i32
    %c0_i32_2 = arith.constant 0 : i32
    return %c0_i32, %c0_i32_0, %c0_i32_1 : i32, i32, i32
  }
  func.func @transform_2(%arg0: i32) -> (i32, i32) {
    %c0_i32 = arith.constant 0 : i32
    %c0_i32_0 = arith.constant 0 : i32
    %c0_i32_1 = arith.constant 0 : i32
    return %c0_i32, %c0_i32_0 : i32, i32
  }
  func.func @transform_3(%arg0: i32) -> (i32, i32, i32) {
    %c0_i32 = arith.constant 0 : i32
    %c0_i32_0 = arith.constant 0 : i32
    %c0_i32_1 = arith.constant 0 : i32
    %c0_i32_2 = arith.constant 0 : i32
    return %c0_i32, %c0_i32_0, %c0_i32_1 : i32, i32, i32
  }
  func.func @transform_4(%arg0: i32) -> (i32, i32) {
    %c0_i32 = arith.constant 0 : i32
    %c0_i32_0 = arith.constant 0 : i32
    %c0_i32_1 = arith.constant 0 : i32
    return %c0_i32, %c0_i32_0 : i32, i32
  }
  func.func @transform_5(%arg0: i32) -> (i32, i32, i32, i32) {
    %c0_i32 = arith.constant 0 : i32
    %c0_i32_0 = arith.constant 0 : i32
    %c0_i32_1 = arith.constant 0 : i32
    %c0_i32_2 = arith.constant 0 : i32
    return %arg0, %c0_i32, %c0_i32_0, %c0_i32_1 : i32, i32, i32, i32
  }
}

</mosaic_0001>

<llo_original>
// kernel: resblock_forward.1
$region0: #{resblock_forward.1}
  #allocation0 [shape = 'u32[]', space=smem, size = 0x4, offset = 0x4, fixed_abs, tag = 'smem constant byte address 0x4 - core index']
  #allocation1 [shape = 'u32[72,128]{1,0:T(1,128)}', space=vmem, size = 0x9000, scoped, tag = 'internal scratch']
  #allocation2 [shape = 'f32[18,16,128]{2,1,0:T(8,128)}', space=vmem, size = 0x24000, scoped, tag = 'scratch operand']
  %s0 = inlined_call_operand.vmem [shape: f32[2,16,16,128], index: 0, kind: input, shape index: {}]
  %s1 = inlined_call_operand.vmem [shape: f32[3,384,128], index: 1, kind: input, shape index: {}]
  %s2 = inlined_call_operand.vmem [shape: f32[1,128], index: 2, kind: input, shape index: {}]
  %s3 = inlined_call_operand.vmem [shape: f32[3,384,128], index: 3, kind: input, shape index: {}]
  %s4 = inlined_call_operand.vmem [shape: f32[1,128], index: 4, kind: input, shape index: {}]
  %s5 = inlined_call_operand.vmem [shape: f32[2,16,16,128], index: 5, kind: output, shape index: {}]
  %s6 = sld [smem:[#allocation0]]
  $region53: #{resblock_forward.1} parent=0
    _
  %s8 = ssub.s32 1, %s6
  %s9 = scalar_select 0, %s8, %s6
  loop: start=0, step=1, limit=4
  $region2: #{resblock_forward.1} parent=0 // loop_pre_header
    _
  $region3: #{resblock_forward.1} parent=0 // loop_header
    %s11 = sphi 0, %s15
    %p12 = scmp.ge.s32.totalorder %s11, 4
    %s21 = sphi 0, %s23
    %s24 = sphi 0, %s21
    %s25 = sphi 0, %s24
    %s41 = sphi 0, %s25
    %s45 = sphi 0, %s45
    %s47 = sphi 0, %s45
    %s48 = sphi 0, %s47
    %s62 = sphi 0, %s48
    %s66 = sphi 0, %s66
    %s68 = sphi 0, %s66
    %s69 = sphi 0, %s68
    %s83 = sphi 0, %s69
    %s87 = sphi 0, %s87
    %s89 = sphi 0, %s87
    %s90 = sphi 0, %s89
    %s104 = sphi 0, %s90
    %s108 = sphi 0, %s108
    %s110 = sphi 0, %s108
    %s111 = sphi 0, %s110
    %s125 = sphi 0, %s111
    %s131 = sphi 0, %s133
    %s134 = sphi 0, %s131
    %s135 = sphi 0, %s134
    %s151 = sphi 0, %s135
  $region4: #{resblock_forward.1} parent=0 // loop_header_branch
    %14 = sbr.rel (%p12) target = $region8
  $region5: #{resblock_forward.1} parent=0 // loop_body
    %s16 = ssub.s32 %s11, 1
    %s17 = ssub.s32 %s11, 2
    %s18 = sadd.s32 %s11, 1
    %s19 = ssub.s32 %s11, %s18
    %p20 = scmp.eq.s32.totalorder %s19, 0
    %s22 = sadd.s32 %s21, 1
    %s23 = scalar_select %p20, %s21, %s22
    %p26 = pneg %p20
    %p27 = scmp.eq.s32.totalorder %s11, 1
    %p28 = por %p26, %p27
    %p29 = scmp.ne.s32.totalorder %s21, %s24
    %p30 = scmp.eq.s32.totalorder %s11, 0
    %p31 = por %p29, %p30
    %p32 = scmp.ne.s32.totalorder %s21, %s24
    %p33 = scmp.eq.s32.totalorder %s16, 1
    %p34 = por %p32, %p33
    %p35 = scmp.ne.s32.totalorder %s24, %s25
    %p36 = scmp.eq.s32.totalorder %s16, 0
    %p37 = por %p35, %p36
    %p38 = scmp.ne.s32.totalorder %s24, %s25
    %p39 = scmp.eq.s32.totalorder %s17, 1
    %p40 = por %p38, %p39
    %p42 = scmp.ne.s32.totalorder %s25, %s41
    %p43 = scmp.eq.s32.totalorder %s17, 0
    %p44 = por %p42, %p43
    %s46 = sadd.s32 %s45, 1
    %p49 = scmp.eq.s32.totalorder %s11, 1
    %p50 = scmp.ne.s32.totalorder %s45, %s47
    %p51 = scmp.eq.s32.totalorder %s11, 0
    %p52 = por %p50, %p51
    %p53 = scmp.ne.s32.totalorder %s45, %s47
    %p54 = scmp.eq.s32.totalorder %s16, 1
    %p55 = por %p53, %p54
    %p56 = scmp.ne.s32.totalorder %s47, %s48
    %p57 = scmp.eq.s32.totalorder %s16, 0
    %p58 = por %p56, %p57
    %p59 = scmp.ne.s32.totalorder %s47, %s48
    %p60 = scmp.eq.s32.totalorder %s17, 1
    %p61 = por %p59, %p60
    %p63 = scmp.ne.s32.totalorder %s48, %s62
    %p64 = scmp.eq.s32.totalorder %s17, 0
    %p65 = por %p63, %p64
    %s67 = sadd.s32 %s66, 1
    %p70 = scmp.eq.s32.totalorder %s11, 1
    %p71 = scmp.ne.s32.totalorder %s66, %s68
    %p72 = scmp.eq.s32.totalorder %s11, 0
    %p73 = por %p71, %p72
    %p74 = scmp.ne.s32.totalorder %s66, %s68
    %p75 = scmp.eq.s32.totalorder %s16, 1
    %p76 = por %p74, %p75
    %p77 = scmp.ne.s32.totalorder %s68, %s69
    %p78 = scmp.eq.s32.totalorder %s16, 0
    %p79 = por %p77, %p78
    %p80 = scmp.ne.s32.totalorder %s68, %s69
    %p81 = scmp.eq.s32.totalorder %s17, 1
    %p82 = por %p80, %p81
    %p84 = scmp.ne.s32.totalorder %s69, %s83
    %p85 = scmp.eq.s32.totalorder %s17, 0
    %p86 = por %p84, %p85
    %s88 = sadd.s32 %s87, 1
    %p91 = scmp.eq.s32.totalorder %s11, 1
    %p92 = scmp.ne.s32.totalorder %s87, %s89
    %p93 = scmp.eq.s32.totalorder %s11, 0
    %p94 = por %p92, %p93
    %p95 = scmp.ne.s32.totalorder %s87, %s89
    %p96 = scmp.eq.s32.totalorder %s16, 1
    %p97 = por %p95, %p96
    %p98 = scmp.ne.s32.totalorder %s89, %s90
    %p99 = scmp.eq.s32.totalorder %s16, 0
    %p100 = por %p98, %p99
    %p101 = scmp.ne.s32.totalorder %s89, %s90
    %p102 = scmp.eq.s32.totalorder %s17, 1
    %p103 = por %p101, %p102
    %p105 = scmp.ne.s32.totalorder %s90, %s104
    %p106 = scmp.eq.s32.totalorder %s17, 0
    %p107 = por %p105, %p106
    %s109 = sadd.s32 %s108, 1
    %p112 = scmp.eq.s32.totalorder %s11, 1
    %p113 = scmp.ne.s32.totalorder %s108, %s110
    %p114 = scmp.eq.s32.totalorder %s11, 0
    %p115 = por %p113, %p114
    %p116 = scmp.ne.s32.totalorder %s108, %s110
    %p117 = scmp.eq.s32.totalorder %s16, 1
    %p118 = por %p116, %p117
    %p119 = scmp.ne.s32.totalorder %s110, %s111
    %p120 = scmp.eq.s32.totalorder %s16, 0
    %p121 = por %p119, %p120
    %p122 = scmp.ne.s32.totalorder %s110, %s111
    %p123 = scmp.eq.s32.totalorder %s17, 1
    %p124 = por %p122, %p123
    %p126 = scmp.ne.s32.totalorder %s111, %s125
    %p127 = scmp.eq.s32.totalorder %s17, 0
    %p128 = por %p126, %p127
    %s129 = ssub.s32 %s11, %s18
    %p130 = scmp.eq.s32.totalorder %s129, 0
    %s132 = sadd.s32 %s131, 1
    %s133 = scalar_select %p130, %s131, %s132
    %p136 = pneg %p130
    %p137 = scmp.eq.s32.totalorder %s11, 1
    %p138 = por %p136, %p137
    %p139 = scmp.ne.s32.totalorder %s131, %s134
    %p140 = scmp.eq.s32.totalorder %s11, 0
    %p141 = por %p139, %p140
    %p142 = scmp.ne.s32.totalorder %s131, %s134
    %p143 = scmp.eq.s32.totalorder %s16, 1
    %p144 = por %p142, %p143
    %p145 = scmp.ne.s32.totalorder %s134, %s135
    %p146 = scmp.eq.s32.totalorder %s16, 0
    %p147 = por %p145, %p146
    %p148 = scmp.ne.s32.totalorder %s134, %s135
    %p149 = scmp.eq.s32.totalorder %s17, 1
    %p150 = por %p148, %p149
    %p152 = scmp.ne.s32.totalorder %s135, %s151
    %p153 = scmp.eq.s32.totalorder %s17, 0
    %p154 = por %p152, %p153
    %p155 = scmp.le.s32.totalorder 1, %s11
    %p156 = scmp.lt.s32.totalorder %s11, 3
    %p157 = pnand %p155, %p156
    %p158 = pneg %p157
    // Predicated region
    $region9: #{resblock_forward.1} parent=5 // pred_check
      _
    $region10: #{resblock_forward.1} parent=5 // pred_check_branch
      %160 = sbr.rel (%p157) target = $region12
    $region11: #{resblock_forward.1} parent=5 // pred_region
      %s161 = ssub.s32 %s11, 1
      // Predicated region
      $region13: #{resblock_forward.1} parent=11 // pred_check
        %p162 = pneg %p58
      $region14: #{resblock_forward.1} parent=11 // pred_check_branch
        %164 = sbr.rel (%p162) target = $region16
      $region15: #{resblock_forward.1} parent=11 // pred_region
        _
      $region16: #{resblock_forward.1} parent=11 // pred_fallthru
        _
      // Predicated region
      $region17: #{resblock_forward.1} parent=11 // pred_check
        %p165 = pneg %p79
      $region18: #{resblock_forward.1} parent=11 // pred_check_branch
        %167 = sbr.rel (%p165) target = $region20
      $region19: #{resblock_forward.1} parent=11 // pred_region
        _
      $region20: #{resblock_forward.1} parent=11 // pred_fallthru
        _
      // Predicated region
      $region21: #{resblock_forward.1} parent=11 // pred_check
        %p168 = pneg %p100
      $region22: #{resblock_forward.1} parent=11 // pred_check_branch
        %170 = sbr.rel (%p168) target = $region24
      $region23: #{resblock_forward.1} parent=11 // pred_region
        _
      $region24: #{resblock_forward.1} parent=11 // pred_fallthru
        _
      // Predicated region
      $region25: #{resblock_forward.1} parent=11 // pred_check
        %p171 = pneg %p121
      $region26: #{resblock_forward.1} parent=11 // pred_check_branch
        %173 = sbr.rel (%p171) target = $region28
      $region27: #{resblock_forward.1} parent=11 // pred_region
        _
      $region28: #{resblock_forward.1} parent=11 // pred_fallthru
        _
    $region12: #{resblock_forward.1} parent=5 // pred_fallthru
      _
    %p174 = scmp.lt.s32.totalorder %s11, 2
    // Predicated region
    $region29: #{resblock_forward.1} parent=5 // pred_check
      %p175 = pneg %p174
    $region30: #{resblock_forward.1} parent=5 // pred_check_branch
      %177 = sbr.rel (%p175) target = $region32
    $region31: #{resblock_forward.1} parent=5 // pred_region
      // Predicated region
      $region33: #{resblock_forward.1} parent=31 // pred_check
        %p178 = pneg %p31
      $region34: #{resblock_forward.1} parent=31 // pred_check_branch
        %180 = sbr.rel (%p178) target = $region36
      $region35: #{resblock_forward.1} parent=31 // pred_region
        %p181 = scmp.lt.s32.totalorder %s11, 1
        %s182 = scalar_select %p181, %s11, 1
        %s183 = smul.addr %s182, 32
        %s184 = smul.addr %s183, 8
        %s185 = scalar_lea.vmem %s0, %s184
      $region36: #{resblock_forward.1} parent=31 // pred_fallthru
        _
    $region32: #{resblock_forward.1} parent=5 // pred_fallthru
      _
    %p186 = scmp.le.s32.totalorder 1, %s11
    %p187 = scmp.lt.s32.totalorder %s11, 3
    %p188 = pnand %p186, %p187
    %p189 = pneg %p188
    // Predicated region
    $region37: #{resblock_forward.1} parent=5 // pred_check
      _
    $region38: #{resblock_forward.1} parent=5 // pred_check_branch
      %191 = sbr.rel (%p188) target = $region40
    $region39: #{resblock_forward.1} parent=5 // pred_region
      %s192 = ssub.s32 %s11, 1
      %p193 = scmp.lt.s32.totalorder %s16, 1
      %s194 = scalar_select %p193, %s16, 1
      %s195 = smul.addr %s194, 32
      %s196 = smul.addr %s195, 8
      %s197 = scalar_lea.vmem %s0, %s196
      %p198 = pneg %p37
      %p199 = pneg %p34
      %p200 = pneg %p58
      %p201 = pneg %p55
      %p202 = pneg %p79
      %p203 = pneg %p76
      %p204 = pneg %p100
      %p205 = pneg %p97
      %p206 = pneg %p121
      %p207 = pneg %p118
      %p208 = pneg %p147
      %p209 = pneg %p144
      %p210 = scmp.lt.s32.totalorder %s16, 1
      %s211 = scalar_select %p210, %s16, 1
      %s212 = smul.addr %s211, 32
      %s213 = smul.addr %s212, 8
      %s214 = scalar_lea.vmem %s5, %s213
      %p215 = scmp.lt.s32.totalorder %s16, 1
      %s216 = scalar_select %p215, %s16, 1
      %s217 = smul.addr %s216, 32
      %s218 = smul.addr %s217, 8
      %s219 = scalar_lea.vmem %s0, %s218
      %p220 = scmp.lt.s32.totalorder %s16, 1
      %s221 = scalar_select %p220, %s16, 1
      %s222 = smul.addr %s221, 32
      %s223 = smul.addr %s222, 8
      %s224 = scalar_lea.vmem %s5, %s223
      %225 = vst [vmem:[#allocation2] sm:$0xff] 0.0
      %226 = vst [vmem:[#allocation2 + $0x8] sm:$0xff] 0.0
      %s227 = scalar_lea.vmem [#allocation2], 272
      %228 = vst [vmem:[%s227] sm:$0xff] 0.0
      %229 = vst [vmem:[%s227 + $0x8] sm:$0xff] 0.0
      %v230 = vld [vmem:[%s2] sm:$0x1]
      %v231 = vld [vmem:[%s4] sm:$0x1]
      %v232 = vlaneseq
      %v233 = vshrl.u32 %v232, 7
      %v234 = vadd.s32 %v233, 8
      %v235 = vadd.s32 %v233, 16
      %v236 = vadd.s32 %v233, 24
      %v237 = vadd.s32 %v233, 32
      %v238 = vadd.s32 %v233, 40
      %v239 = vadd.s32 %v233, 48
      %v240 = vadd.s32 %v233, 56
      %v241 = vadd.s32 %v233, 64
      %v242 = vadd.s32 %v233, 72
      %v243 = vadd.s32 %v233, 80
      %v244 = vadd.s32 %v233, 88
      %v245 = vadd.s32 %v233, 96
      %v246 = vadd.s32 %v233, 104
      %v247 = vadd.s32 %v233, 112
      %v248 = vadd.s32 %v233, 120
      %v249 = vadd.s32 %v233, 128
      %v250 = vadd.s32 %v233, 136
      %v251 = vadd.s32 %v233, 144
      %v252 = vadd.s32 %v233, 152
      %v253 = vadd.s32 %v233, 160
      %v254 = vadd.s32 %v233, 168
      %v255 = vadd.s32 %v233, 176
      %v256 = vadd.s32 %v233, 184
      %v257 = vadd.s32 %v233, 192
      %v258 = vadd.s32 %v233, 200
      %v259 = vadd.s32 %v233, 208
      %v260 = vadd.s32 %v233, 216
      %v261 = vadd.s32 %v233, 224
      %v262 = vadd.s32 %v233, 232
      %v263 = vadd.s32 %v233, 240
      %v264 = vadd.s32 %v233, 248
      %vm265 = vcmp.lt.s32.totalorder %v233, 0
      %v266 = vsub.s32 0, %v233
      %v267 = vsel %vm265, %v266, %v233
      %v268 = vshrl.u32 %v267, 4
      %v269 = vand.u32 %v267, 15
      %v270 = vsub.s32 0, %v269
      %v271 = vsel %vm265, %v270, %v269
      %vm272 = vcmp.lt.s32.totalorder %v234, 0
      %v273 = vsub.s32 0, %v234
      %v274 = vsel %vm272, %v273, %v234
      %v275 = vshrl.u32 %v274, 4
      %v276 = vand.u32 %v274, 15
      %v277 = vsub.s32 0, %v276
      %v278 = vsel %vm272, %v277, %v276
      %vm279 = vcmp.lt.s32.totalorder %v235, 0
      %v280 = vsub.s32 0, %v235
      %v281 = vsel %vm279, %v280, %v235
      %v282 = vshrl.u32 %v281, 4
      %v283 = vand.u32 %v281, 15
      %v284 = vsub.s32 0, %v283
      %v285 = vsel %vm279, %v284, %v283
      %vm286 = vcmp.lt.s32.totalorder %v236, 0
      %v287 = vsub.s32 0, %v236
      %v288 = vsel %vm286, %v287, %v236
      %v289 = vshrl.u32 %v288, 4
      %v290 = vand.u32 %v288, 15
      %v291 = vsub.s32 0, %v290
      %v292 = vsel %vm286, %v291, %v290
      %vm293 = vcmp.lt.s32.totalorder %v237, 0
      %v294 = vsub.s32 0, %v237
      %v295 = vsel %vm293, %v294, %v237
      %v296 = vshrl.u32 %v295, 4
      %v297 = vand.u32 %v295, 15
      %v298 = vsub.s32 0, %v297
      %v299 = vsel %vm293, %v298, %v297
      %vm300 = vcmp.lt.s32.totalorder %v238, 0
      %v301 = vsub.s32 0, %v238
      %v302 = vsel %vm300, %v301, %v238
      %v303 = vshrl.u32 %v302, 4
      %v304 = vand.u32 %v302, 15
      %v305 = vsub.s32 0, %v304
      %v306 = vsel %vm300, %v305, %v304
      %vm307 = vcmp.lt.s32.totalorder %v239, 0
      %v308 = vsub.s32 0, %v239
      %v309 = vsel %vm307, %v308, %v239
      %v310 = vshrl.u32 %v309, 4
      %v311 = vand.u32 %v309, 15
      %v312 = vsub.s32 0, %v311
      %v313 = vsel %vm307, %v312, %v311
      %vm314 = vcmp.lt.s32.totalorder %v240, 0
      %v315 = vsub.s32 0, %v240
      %v316 = vsel %vm314, %v315, %v240
      %v317 = vshrl.u32 %v316, 4
      %v318 = vand.u32 %v316, 15
      %v319 = vsub.s32 0, %v318
      %v320 = vsel %vm314, %v319, %v318
      %vm321 = vcmp.lt.s32.totalorder %v241, 0
      %v322 = vsub.s32 0, %v241
      %v323 = vsel %vm321, %v322, %v241
      %v324 = vshrl.u32 %v323, 4
      %v325 = vand.u32 %v323, 15
      %v326 = vsub.s32 0, %v325
      %v327 = vsel %vm321, %v326, %v325
      %vm328 = vcmp.lt.s32.totalorder %v242, 0
      %v329 = vsub.s32 0, %v242
      %v330 = vsel %vm328, %v329, %v242
      %v331 = vshrl.u32 %v330, 4
      %v332 = vand.u32 %v330, 15
      %v333 = vsub.s32 0, %v332
      %v334 = vsel %vm328, %v333, %v332
      %vm335 = vcmp.lt.s32.totalorder %v243, 0
      %v336 = vsub.s32 0, %v243
      %v337 = vsel %vm335, %v336, %v243
      %v338 = vshrl.u32 %v337, 4
      %v339 = vand.u32 %v337, 15
      %v340 = vsub.s32 0, %v339
      %v341 = vsel %vm335, %v340, %v339
      %vm342 = vcmp.lt.s32.totalorder %v244, 0
      %v343 = vsub.s32 0, %v244
      %v344 = vsel %vm342, %v343, %v244
      %v345 = vshrl.u32 %v344, 4
      %v346 = vand.u32 %v344, 15
      %v347 = vsub.s32 0, %v346
      %v348 = vsel %vm342, %v347, %v346
      %vm349 = vcmp.lt.s32.totalorder %v245, 0
      %v350 = vsub.s32 0, %v245
      %v351 = vsel %vm349, %v350, %v245
      %v352 = vshrl.u32 %v351, 4
      %v353 = vand.u32 %v351, 15
      %v354 = vsub.s32 0, %v353
      %v355 = vsel %vm349, %v354, %v353
      %vm356 = vcmp.lt.s32.totalorder %v246, 0
      %v357 = vsub.s32 0, %v246
      %v358 = vsel %vm356, %v357, %v246
      %v359 = vshrl.u32 %v358, 4
      %v360 = vand.u32 %v358, 15
      %v361 = vsub.s32 0, %v360
      %v362 = vsel %vm356, %v361, %v360
      %vm363 = vcmp.lt.s32.totalorder %v247, 0
      %v364 = vsub.s32 0, %v247
      %v365 = vsel %vm363, %v364, %v247
      %v366 = vshrl.u32 %v365, 4
      %v367 = vand.u32 %v365, 15
      %v368 = vsub.s32 0, %v367
      %v369 = vsel %vm363, %v368, %v367
      %vm370 = vcmp.lt.s32.totalorder %v248, 0
      %v371 = vsub.s32 0, %v248
      %v372 = vsel %vm370, %v371, %v248
      %v373 = vshrl.u32 %v372, 4
      %v374 = vand.u32 %v372, 15
      %v375 = vsub.s32 0, %v374
      %v376 = vsel %vm370, %v375, %v374
      %vm377 = vcmp.lt.s32.totalorder %v249, 0
      %v378 = vsub.s32 0, %v249
      %v379 = vsel %vm377, %v378, %v249
      %v380 = vshrl.u32 %v379, 4
      %v381 = vand.u32 %v379, 15
      %v382 = vsub.s32 0, %v381
      %v383 = vsel %vm377, %v382, %v381
      %vm384 = vcmp.lt.s32.totalorder %v250, 0
      %v385 = vsub.s32 0, %v250
      %v386 = vsel %vm384, %v385, %v250
      %v387 = vshrl.u32 %v386, 4
      %v388 = vand.u32 %v386, 15
      %v389 = vsub.s32 0, %v388
      %v390 = vsel %vm384, %v389, %v388
      %vm391 = vcmp.lt.s32.totalorder %v251, 0
      %v392 = vsub.s32 0, %v251
      %v393 = vsel %vm391, %v392, %v251
      %v394 = vshrl.u32 %v393, 4
      %v395 = vand.u32 %v393, 15
      %v396 = vsub.s32 0, %v395
      %v397 = vsel %vm391, %v396, %v395
      %vm398 = vcmp.lt.s32.totalorder %v252, 0
      %v399 = vsub.s32 0, %v252
      %v400 = vsel %vm398, %v399, %v252
      %v401 = vshrl.u32 %v400, 4
      %v402 = vand.u32 %v400, 15
      %v403 = vsub.s32 0, %v402
      %v404 = vsel %vm398, %v403, %v402
      %vm405 = vcmp.lt.s32.totalorder %v253, 0
      %v406 = vsub.s32 0, %v253
      %v407 = vsel %vm405, %v406, %v253
      %v408 = vshrl.u32 %v407, 4
      %v409 = vand.u32 %v407, 15
      %v410 = vsub.s32 0, %v409
      %v411 = vsel %vm405, %v410, %v409
      %vm412 = vcmp.lt.s32.totalorder %v254, 0
      %v413 = vsub.s32 0, %v254
      %v414 = vsel %vm412, %v413, %v254
      %v415 = vshrl.u32 %v414, 4
      %v416 = vand.u32 %v414, 15
      %v417 = vsub.s32 0, %v416
      %v418 = vsel %vm412, %v417, %v416
      %vm419 = vcmp.lt.s32.totalorder %v255, 0
      %v420 = vsub.s32 0, %v255
      %v421 = vsel %vm419, %v420, %v255
      %v422 = vshrl.u32 %v421, 4
      %v423 = vand.u32 %v421, 15
      %v424 = vsub.s32 0, %v423
      %v425 = vsel %vm419, %v424, %v423
      %vm426 = vcmp.lt.s32.totalorder %v256, 0
      %v427 = vsub.s32 0, %v256
      %v428 = vsel %vm426, %v427, %v256
      %v429 = vshrl.u32 %v428, 4
      %v430 = vand.u32 %v428, 15
      %v431 = vsub.s32 0, %v430
      %v432 = vsel %vm426, %v431, %v430
      %vm433 = vcmp.lt.s32.totalorder %v257, 0
      %v434 = vsub.s32 0, %v257
      %v435 = vsel %vm433, %v434, %v257
      %v436 = vshrl.u32 %v435, 4
      %v437 = vand.u32 %v435, 15
      %v438 = vsub.s32 0, %v437
      %v439 = vsel %vm433, %v438, %v437
      %vm440 = vcmp.lt.s32.totalorder %v258, 0
      %v441 = vsub.s32 0, %v258
      %v442 = vsel %vm440, %v441, %v258
      %v443 = vshrl.u32 %v442, 4
      %v444 = vand.u32 %v442, 15
      %v445 = vsub.s32 0, %v444
      %v446 = vsel %vm440, %v445, %v444
      %vm447 = vcmp.lt.s32.totalorder %v259, 0
      %v448 = vsub.s32 0, %v259
      %v449 = vsel %vm447, %v448, %v259
      %v450 = vshrl.u32 %v449, 4
      %v451 = vand.u32 %v449, 15
      %v452 = vsub.s32 0, %v451
      %v453 = vsel %vm447, %v452, %v451
      %vm454 = vcmp.lt.s32.totalorder %v260, 0
      %v455 = vsub.s32 0, %v260
      %v456 = vsel %vm454, %v455, %v260
      %v457 = vshrl.u32 %v456, 4
      %v458 = vand.u32 %v456, 15
      %v459 = vsub.s32 0, %v458
      %v460 = vsel %vm454, %v459, %v458
      %vm461 = vcmp.lt.s32.totalorder %v261, 0
      %v462 = vsub.s32 0, %v261
      %v463 = vsel %vm461, %v462, %v261
      %v464 = vshrl.u32 %v463, 4
      %v465 = vand.u32 %v463, 15
      %v466 = vsub.s32 0, %v465
      %v467 = vsel %vm461, %v466, %v465
      %vm468 = vcmp.lt.s32.totalorder %v262, 0
      %v469 = vsub.s32 0, %v262
      %v470 = vsel %vm468, %v469, %v262
      %v471 = vshrl.u32 %v470, 4
      %v472 = vand.u32 %v470, 15
      %v473 = vsub.s32 0, %v472
      %v474 = vsel %vm468, %v473, %v472
      %vm475 = vcmp.lt.s32.totalorder %v263, 0
      %v476 = vsub.s32 0, %v263
      %v477 = vsel %vm475, %v476, %v263
      %v478 = vshrl.u32 %v477, 4
      %v479 = vand.u32 %v477, 15
      %v480 = vsub.s32 0, %v479
      %v481 = vsel %vm475, %v480, %v479
      %vm482 = vcmp.lt.s32.totalorder %v264, 0
      %v483 = vsub.s32 0, %v264
      %v484 = vsel %vm482, %v483, %v264
      %v485 = vshrl.u32 %v484, 4
      %v486 = vand.u32 %v484, 15
      %v487 = vsub.s32 0, %v486
      %v488 = vsel %vm482, %v487, %v486
      %vm489 = vcmp.ne.s32.totalorder %v271, 0
      %vm490 = vcmp.ne.s32.totalorder %v278, 0
      %vm491 = vcmp.ne.s32.totalorder %v285, 0
      %vm492 = vcmp.ne.s32.totalorder %v292, 0
      %vm493 = vcmp.ne.s32.totalorder %v299, 0
      %vm494 = vcmp.ne.s32.totalorder %v306, 0
      %vm495 = vcmp.ne.s32.totalorder %v313, 0
      %vm496 = vcmp.ne.s32.totalorder %v320, 0
      %vm497 = vcmp.ne.s32.totalorder %v327, 0
      %vm498 = vcmp.ne.s32.totalorder %v334, 0
      %vm499 = vcmp.ne.s32.totalorder %v341, 0
      %vm500 = vcmp.ne.s32.totalorder %v348, 0
      %vm501 = vcmp.ne.s32.totalorder %v355, 0
      %vm502 = vcmp.ne.s32.totalorder %v362, 0
      %vm503 = vcmp.ne.s32.totalorder %v369, 0
      %vm504 = vcmp.ne.s32.totalorder %v376, 0
      %vm505 = vcmp.ne.s32.totalorder %v383, 0
      %vm506 = vcmp.ne.s32.totalorder %v390, 0
      %vm507 = vcmp.ne.s32.totalorder %v397, 0
      %vm508 = vcmp.ne.s32.totalorder %v404, 0
      %vm509 = vcmp.ne.s32.totalorder %v411, 0
      %vm510 = vcmp.ne.s32.totalorder %v418, 0
      %vm511 = vcmp.ne.s32.totalorder %v425, 0
      %vm512 = vcmp.ne.s32.totalorder %v432, 0
      %vm513 = vcmp.ne.s32.totalorder %v439, 0
      %vm514 = vcmp.ne.s32.totalorder %v446, 0
      %vm515 = vcmp.ne.s32.totalorder %v453, 0
      %vm516 = vcmp.ne.s32.totalorder %v460, 0
      %vm517 = vcmp.ne.s32.totalorder %v467, 0
      %vm518 = vcmp.ne.s32.totalorder %v474, 0
      %vm519 = vcmp.ne.s32.totalorder %v481, 0
      %vm520 = vcmp.ne.s32.totalorder %v488, 0
      %vm521 = vcmp.lt.s32.totalorder %v271, 0
      %vm522 = vcmp.lt.s32.totalorder %v278, 0
      %vm523 = vcmp.lt.s32.totalorder %v285, 0
      %vm524 = vcmp.lt.s32.totalorder %v292, 0
      %vm525 = vcmp.lt.s32.totalorder %v299, 0
      %vm526 = vcmp.lt.s32.totalorder %v306, 0
      %vm527 = vcmp.lt.s32.totalorder %v313, 0
      %vm528 = vcmp.lt.s32.totalorder %v320, 0
      %vm529 = vcmp.lt.s32.totalorder %v327, 0
      %vm530 = vcmp.lt.s32.totalorder %v334, 0
      %vm531 = vcmp.lt.s32.totalorder %v341, 0
      %vm532 = vcmp.lt.s32.totalorder %v348, 0
      %vm533 = vcmp.lt.s32.totalorder %v355, 0
      %vm534 = vcmp.lt.s32.totalorder %v362, 0
      %vm535 = vcmp.lt.s32.totalorder %v369, 0
      %vm536 = vcmp.lt.s32.totalorder %v376, 0
      %vm537 = vcmp.lt.s32.totalorder %v383, 0
      %vm538 = vcmp.lt.s32.totalorder %v390, 0
      %vm539 = vcmp.lt.s32.totalorder %v397, 0
      %vm540 = vcmp.lt.s32.totalorder %v404, 0
      %vm541 = vcmp.lt.s32.totalorder %v411, 0
      %vm542 = vcmp.lt.s32.totalorder %v418, 0
      %vm543 = vcmp.lt.s32.totalorder %v425, 0
      %vm544 = vcmp.lt.s32.totalorder %v432, 0
      %vm545 = vcmp.lt.s32.totalorder %v439, 0
      %vm546 = vcmp.lt.s32.totalorder %v446, 0
      %vm547 = vcmp.lt.s32.totalorder %v453, 0
      %vm548 = vcmp.lt.s32.totalorder %v460, 0
      %vm549 = vcmp.lt.s32.totalorder %v467, 0
      %vm550 = vcmp.lt.s32.totalorder %v474, 0
      %vm551 = vcmp.lt.s32.totalorder %v481, 0
      %vm552 = vcmp.lt.s32.totalorder %v488, 0
      %vm553 = vmand %vm521, %vm489
      %vm554 = vmand %vm522, %vm490
      %vm555 = vmand %vm523, %vm491
      %vm556 = vmand %vm524, %vm492
      %vm557 = vmand %vm525, %vm493
      %vm558 = vmand %vm526, %vm494
      %vm559 = vmand %vm527, %vm495
      %vm560 = vmand %vm528, %vm496
      %vm561 = vmand %vm529, %vm497
      %vm562 = vmand %vm530, %vm498
      %vm563 = vmand %vm531, %vm499
      %vm564 = vmand %vm532, %vm500
      %vm565 = vmand %vm533, %vm501
      %vm566 = vmand %vm534, %vm502
      %vm567 = vmand %vm535, %vm503
      %vm568 = vmand %vm536, %vm504
      %vm569 = vmand %vm537, %vm505
      %vm570 = vmand %vm538, %vm506
      %vm571 = vmand %vm539, %vm507
      %vm572 = vmand %vm540, %vm508
      %vm573 = vmand %vm541, %vm509
      %vm574 = vmand %vm542, %vm510
      %vm575 = vmand %vm543, %vm511
      %vm576 = vmand %vm544, %vm512
      %vm577 = vmand %vm545, %vm513
      %vm578 = vmand %vm546, %vm514
      %vm579 = vmand %vm547, %vm515
      %vm580 = vmand %vm548, %vm516
      %vm581 = vmand %vm549, %vm517
      %vm582 = vmand %vm550, %vm518
      %vm583 = vmand %vm551, %vm519
      %vm584 = vmand %vm552, %vm520
      %v585 = vadd.s32 %v271, 16
      %v586 = vadd.s32 %v278, 16
      %v587 = vadd.s32 %v285, 16
      %v588 = vadd.s32 %v292, 16
      %v589 = vadd.s32 %v299, 16
      %v590 = vadd.s32 %v306, 16
      %v591 = vadd.s32 %v313, 16
      %v592 = vadd.s32 %v320, 16
      %v593 = vadd.s32 %v327, 16
      %v594 = vadd.s32 %v334, 16
      %v595 = vadd.s32 %v341, 16
      %v596 = vadd.s32 %v348, 16
      %v597 = vadd.s32 %v355, 16
      %v598 = vadd.s32 %v362, 16
      %v599 = vadd.s32 %v369, 16
      %v600 = vadd.s32 %v376, 16
      %v601 = vadd.s32 %v383, 16
      %v602 = vadd.s32 %v390, 16
      %v603 = vadd.s32 %v397, 16
      %v604 = vadd.s32 %v404, 16
      %v605 = vadd.s32 %v411, 16
      %v606 = vadd.s32 %v418, 16
      %v607 = vadd.s32 %v425, 16
      %v608 = vadd.s32 %v432, 16
      %v609 = vadd.s32 %v439, 16
      %v610 = vadd.s32 %v446, 16
      %v611 = vadd.s32 %v453, 16
      %v612 = vadd.s32 %v460, 16
      %v613 = vadd.s32 %v467, 16
      %v614 = vadd.s32 %v474, 16
      %v615 = vadd.s32 %v481, 16
      %v616 = vadd.s32 %v488, 16
      %v617 = vsel %vm553, %v585, %v271
      %v618 = vsel %vm554, %v586, %v278
      %v619 = vsel %vm555, %v587, %v285
      %v620 = vsel %vm556, %v588, %v292
      %v621 = vsel %vm557, %v589, %v299
      %v622 = vsel %vm558, %v590, %v306
      %v623 = vsel %vm559, %v591, %v313
      %v624 = vsel %vm560, %v592, %v320
      %v625 = vsel %vm561, %v593, %v327
      %v626 = vsel %vm562, %v594, %v334
      %v627 = vsel %vm563, %v595, %v341
      %v628 = vsel %vm564, %v596, %v348
      %v629 = vsel %vm565, %v597, %v355
      %v630 = vsel %vm566, %v598, %v362
      %v631 = vsel %vm567, %v599, %v369
      %v632 = vsel %vm568, %v600, %v376
      %v633 = vsel %vm569, %v601, %v383
      %v634 = vsel %vm570, %v602, %v390
      %v635 = vsel %vm571, %v603, %v397
      %v636 = vsel %vm572, %v604, %v404
      %v637 = vsel %vm573, %v605, %v411
      %v638 = vsel %vm574, %v606, %v418
      %v639 = vsel %vm575, %v607, %v425
      %v640 = vsel %vm576, %v608, %v432
      %v641 = vsel %vm577, %v609, %v439
      %v642 = vsel %vm578, %v610, %v446
      %v643 = vsel %vm579, %v611, %v453
      %v644 = vsel %vm580, %v612, %v460
      %v645 = vsel %vm581, %v613, %v467
      %v646 = vsel %vm582, %v614, %v474
      %v647 = vsel %vm583, %v615, %v481
      %v648 = vsel %vm584, %v616, %v488
      %vm649 = vcmp.ne.s32.totalorder %v617, 0
      %vm650 = vcmp.ne.s32.totalorder %v618, 0
      %vm651 = vcmp.ne.s32.totalorder %v619, 0
      %vm652 = vcmp.ne.s32.totalorder %v620, 0
      %vm653 = vcmp.ne.s32.totalorder %v621, 0
      %vm654 = vcmp.ne.s32.totalorder %v622, 0
      %vm655 = vcmp.ne.s32.totalorder %v623, 0
      %vm656 = vcmp.ne.s32.totalorder %v624, 0
      %vm657 = vcmp.ne.s32.totalorder %v625, 0
      %vm658 = vcmp.ne.s32.totalorder %v626, 0
      %vm659 = vcmp.ne.s32.totalorder %v627, 0
      %vm660 = vcmp.ne.s32.totalorder %v628, 0
      %vm661 = vcmp.ne.s32.totalorder %v629, 0
      %vm662 = vcmp.ne.s32.totalorder %v630, 0
      %vm663 = vcmp.ne.s32.totalorder %v631, 0
      %vm664 = vcmp.ne.s32.totalorder %v632, 0
      %vm665 = vcmp.ne.s32.totalorder %v633, 0
      %vm666 = vcmp.ne.s32.totalorder %v634, 0
      %vm667 = vcmp.ne.s32.totalorder %v635, 0
      %vm668 = vcmp.ne.s32.totalorder %v636, 0
      %vm669 = vcmp.ne.s32.totalorder %v637, 0
      %vm670 = vcmp.ne.s32.totalorder %v638, 0
      %vm671 = vcmp.ne.s32.totalorder %v639, 0
      %vm672 = vcmp.ne.s32.totalorder %v640, 0
      %vm673 = vcmp.ne.s32.totalorder %v641, 0
      %vm674 = vcmp.ne.s32.totalorder %v642, 0
      %vm675 = vcmp.ne.s32.totalorder %v643, 0
      %vm676 = vcmp.ne.s32.totalorder %v644, 0
      %vm677 = vcmp.ne.s32.totalorder %v645, 0
      %vm678 = vcmp.ne.s32.totalorder %v646, 0
      %vm679 = vcmp.ne.s32.totalorder %v647, 0
      %vm680 = vcmp.ne.s32.totalorder %v648, 0
      %vm681 = vcmp.ne.s32.totalorder %v617, 15
      %vm682 = vcmp.ne.s32.totalorder %v618, 15
      %vm683 = vcmp.ne.s32.totalorder %v619, 15
      %vm684 = vcmp.ne.s32.totalorder %v620, 15
      %vm685 = vcmp.ne.s32.totalorder %v621, 15
      %vm686 = vcmp.ne.s32.totalorder %v622, 15
      %vm687 = vcmp.ne.s32.totalorder %v623, 15
      %vm688 = vcmp.ne.s32.totalorder %v624, 15
      %vm689 = vcmp.ne.s32.totalorder %v625, 15
      %vm690 = vcmp.ne.s32.totalorder %v626, 15
      %vm691 = vcmp.ne.s32.totalorder %v627, 15
      %vm692 = vcmp.ne.s32.totalorder %v628, 15
      %vm693 = vcmp.ne.s32.totalorder %v629, 15
      %vm694 = vcmp.ne.s32.totalorder %v630, 15
      %vm695 = vcmp.ne.s32.totalorder %v631, 15
      %vm696 = vcmp.ne.s32.totalorder %v632, 15
      %vm697 = vcmp.ne.s32.totalorder %v633, 15
      %vm698 = vcmp.ne.s32.totalorder %v634, 15
      %vm699 = vcmp.ne.s32.totalorder %v635, 15
      %vm700 = vcmp.ne.s32.totalorder %v636, 15
      %vm701 = vcmp.ne.s32.totalorder %v637, 15
      %vm702 = vcmp.ne.s32.totalorder %v638, 15
      %vm703 = vcmp.ne.s32.totalorder %v639, 15
      %vm704 = vcmp.ne.s32.totalorder %v640, 15
      %vm705 = vcmp.ne.s32.totalorder %v641, 15
      %vm706 = vcmp.ne.s32.totalorder %v642, 15
      %vm707 = vcmp.ne.s32.totalorder %v643, 15
      %vm708 = vcmp.ne.s32.totalorder %v644, 15
      %vm709 = vcmp.ne.s32.totalorder %v645, 15
      %vm710 = vcmp.ne.s32.totalorder %v646, 15
      %vm711 = vcmp.ne.s32.totalorder %v647, 15
      %vm712 = vcmp.ne.s32.totalorder %v648, 15
      %s713 = smul.u32 0, 16
      %s714 = scalar_lea.vmem %s219, %s713
      %v715 = vld [vmem:[%s714] sm:$0xff]
      %v716 = vld [vmem:[%s714 + $0x8] sm:$0xff]
      %v717 = vld [vmem:[%s714 + $0x10] sm:$0xff]
      %v718 = vld [vmem:[%s714 + $0x18] sm:$0xff]
      %v719 = vld [vmem:[%s714 + $0x20] sm:$0xff]
      %v720 = vld [vmem:[%s714 + $0x28] sm:$0xff]
      %v721 = vld [vmem:[%s714 + $0x30] sm:$0xff]
      %v722 = vld [vmem:[%s714 + $0x38] sm:$0xff]
      %v723 = vld [vmem:[%s714 + $0x40] sm:$0xff]
      %v724 = vld [vmem:[%s714 + $0x48] sm:$0xff]
      %v725 = vld [vmem:[%s714 + $0x50] sm:$0xff]
      %v726 = vld [vmem:[%s714 + $0x58] sm:$0xff]
      %v727 = vld [vmem:[%s714 + $0x60] sm:$0xff]
      %v728 = vld [vmem:[%s714 + $0x68] sm:$0xff]
      %v729 = vld [vmem:[%s714 + $0x70] sm:$0xff]
      %v730 = vld [vmem:[%s714 + $0x78] sm:$0xff]
      %v731 = vld [vmem:[%s714 + $0x80] sm:$0xff]
      %v732 = vld [vmem:[%s714 + $0x88] sm:$0xff]
      %v733 = vld [vmem:[%s714 + $0x90] sm:$0xff]
      %v734 = vld [vmem:[%s714 + $0x98] sm:$0xff]
      %v735 = vld [vmem:[%s714 + $0xa0] sm:$0xff]
      %v736 = vld [vmem:[%s714 + $0xa8] sm:$0xff]
      %v737 = vld [vmem:[%s714 + $0xb0] sm:$0xff]
      %v738 = vld [vmem:[%s714 + $0xb8] sm:$0xff]
      %v739 = vld [vmem:[%s714 + $0xc0] sm:$0xff]
      %v740 = vld [vmem:[%s714 + $0xc8] sm:$0xff]
      %v741 = vld [vmem:[%s714 + $0xd0] sm:$0xff]
      %v742 = vld [vmem:[%s714 + $0xd8] sm:$0xff]
      %v743 = vld [vmem:[%s714 + $0xe0] sm:$0xff]
      %v744 = vld [vmem:[%s714 + $0xe8] sm:$0xff]
      %v745 = vld [vmem:[%s714 + $0xf0] sm:$0xff]
      %v746 = vld [vmem:[%s714 + $0xf8] sm:$0xff]
      %s747 = ssub.s32 0, 1
      %p748 = scmp.gt.s32.totalorder %s747, 0
      %s749 = scalar_select %p748, %s747, 0
      %s750 = smul.u32 %s749, 16
      %s751 = scalar_lea.vmem %s219, %s750
      %v752 = vld [vmem:[%s751] sm:$0xff]
      %v753 = vld [vmem:[%s751 + $0x8] sm:$0xff]
      %p754 = scmp.gt.s32.totalorder 0, 0
      %s755 = scalar_select %p754, 1, 0
      %v756 = vstv %s755
      %vm757 = vcmp.eq.s32.totalorder %v756, 1
      %v758 = vsel %vm757, %v752, 0.0
      %v759 = vsel %vm757, %v753, 0.0
      %s760 = sadd.s32 0, 16
      %p761 = scmp.lt.s32.totalorder %s760, 15
      %s762 = scalar_select %p761, %s760, 15
      %s763 = smul.u32 %s762, 16
      %s764 = scalar_lea.vmem %s219, %s763
      %v765 = vld [vmem:[%s764] sm:$0xff]
      %v766 = vld [vmem:[%s764 + $0x8] sm:$0xff]
      %p767 = scmp.lt.s32.totalorder %s760, 16
      %s768 = scalar_select %p767, 1, 0
      %v769 = vstv %s768
      %vm770 = vcmp.eq.s32.totalorder %v769, 1
      %v771 = vsel %vm770, %v765, 0.0
      %v772 = vsel %vm770, %v766, 0.0
      %v773 = vrot.slane %v758, 7
      %v774 = vrot.slane %v759, 7
      %v775 = vrot.slane %v715, 7
      %v776 = vrot.slane %v716, 7
      %v777 = vrot.slane %v717, 7
      %v778 = vrot.slane %v718, 7
      %v779 = vrot.slane %v719, 7
      %v780 = vrot.slane %v720, 7
      %v781 = vrot.slane %v721, 7
      %v782 = vrot.slane %v722, 7
      %v783 = vrot.slane %v723, 7
      %v784 = vrot.slane %v724, 7
      %v785 = vrot.slane %v725, 7
      %v786 = vrot.slane %v726, 7
      %v787 = vrot.slane %v727, 7
      %v788 = vrot.slane %v728, 7
      %v789 = vrot.slane %v729, 7
      %v790 = vrot.slane %v730, 7
      %v791 = vrot.slane %v731, 7
      %v792 = vrot.slane %v732, 7
      %v793 = vrot.slane %v733, 7
      %v794 = vrot.slane %v734, 7
      %v795 = vrot.slane %v735, 7
      %v796 = vrot.slane %v736, 7
      %v797 = vrot.slane %v737, 7
      %v798 = vrot.slane %v738, 7
      %v799 = vrot.slane %v739, 7
      %v800 = vrot.slane %v740, 7
      %v801 = vrot.slane %v741, 7
      %v802 = vrot.slane %v742, 7
      %v803 = vrot.slane %v743, 7
      %v804 = vrot.slane %v744, 7
      %vm805 = vcmp.lt.s32.totalorder %v233, 1
      %v806 = vsel %vm805, %v803, %v804
      %v807 = vsel %vm805, %v802, %v803
      %v808 = vsel %vm805, %v801, %v802
      %v809 = vsel %vm805, %v800, %v801
      %v810 = vsel %vm805, %v799, %v800
      %v811 = vsel %vm805, %v798, %v799
      %v812 = vsel %vm805, %v797, %v798
      %v813 = vsel %vm805, %v796, %v797
      %v814 = vsel %vm805, %v795, %v796
      %v815 = vsel %vm805, %v794, %v795
      %v816 = vsel %vm805, %v793, %v794
      %v817 = vsel %vm805, %v792, %v793
      %v818 = vsel %vm805, %v791, %v792
      %v819 = vsel %vm805, %v790, %v791
      %v820 = vsel %vm805, %v789, %v790
      %v821 = vsel %vm805, %v788, %v789
      %v822 = vsel %vm805, %v787, %v788
      %v823 = vsel %vm805, %v786, %v787
      %v824 = vsel %vm805, %v785, %v786
      %v825 = vsel %vm805, %v784, %v785
      %v826 = vsel %vm805, %v783, %v784
      %v827 = vsel %vm805, %v782, %v783
      %v828 = vsel %vm805, %v781, %v782
      %v829 = vsel %vm805, %v780, %v781
      %v830 = vsel %vm805, %v779, %v780
      %v831 = vsel %vm805, %v778, %v779
      %v832 = vsel %vm805, %v777, %v778
      %v833 = vsel %vm805, %v776, %v777
      %v834 = vsel %vm805, %v775, %v776
      %v835 = vsel %vm805, %v774, %v775
      %v836 = vsel %vm805, %v773, %v774
      %v837 = vsel %vm805, %v804, %v773
      %v838 = vsel %vm649, 1, 0
      %v839 = vsel %vm650, 1, 0
      %v840 = vsel %vm651, 1, 0
      %v841 = vsel %vm652, 1, 0
      %v842 = vsel %vm653, 1, 0
      %v843 = vsel %vm654, 1, 0
      %v844 = vsel %vm655, 1, 0
      %v845 = vsel %vm656, 1, 0
      %v846 = vsel %vm657, 1, 0
      %v847 = vsel %vm658, 1, 0
      %v848 = vsel %vm659, 1, 0
      %v849 = vsel %vm660, 1, 0
      %v850 = vsel %vm661, 1, 0
      %v851 = vsel %vm662, 1, 0
      %v852 = vsel %vm663, 1, 0
      %v853 = vsel %vm664, 1, 0
      %v854 = vsel %vm665, 1, 0
      %v855 = vsel %vm666, 1, 0
      %v856 = vsel %vm667, 1, 0
      %v857 = vsel %vm668, 1, 0
      %v858 = vsel %vm669, 1, 0
      %v859 = vsel %vm670, 1, 0
      %v860 = vsel %vm671, 1, 0
      %v861 = vsel %vm672, 1, 0
      %v862 = vsel %vm673, 1, 0
      %v863 = vsel %vm674, 1, 0
      %v864 = vsel %vm675, 1, 0
      %v865 = vsel %vm676, 1, 0
      %v866 = vsel %vm677, 1, 0
      %v867 = vsel %vm678, 1, 0
      %v868 = vsel %vm679, 1, 0
      %v869 = vsel %vm680, 1, 0
      %vm870 = vcmp.eq.s32.totalorder %v838, 1
      %vm871 = vcmp.eq.s32.totalorder %v839, 1
      %vm872 = vcmp.eq.s32.totalorder %v840, 1
      %vm873 = vcmp.eq.s32.totalorder %v841, 1
      %vm874 = vcmp.eq.s32.totalorder %v842, 1
      %vm875 = vcmp.eq.s32.totalorder %v843, 1
      %vm876 = vcmp.eq.s32.totalorder %v844, 1
      %vm877 = vcmp.eq.s32.totalorder %v845, 1
      %vm878 = vcmp.eq.s32.totalorder %v846, 1
      %vm879 = vcmp.eq.s32.totalorder %v847, 1
      %vm880 = vcmp.eq.s32.totalorder %v848, 1
      %vm881 = vcmp.eq.s32.totalorder %v849, 1
      %vm882 = vcmp.eq.s32.totalorder %v850, 1
      %vm883 = vcmp.eq.s32.totalorder %v851, 1
      %vm884 = vcmp.eq.s32.totalorder %v852, 1
      %vm885 = vcmp.eq.s32.totalorder %v853, 1
      %vm886 = vcmp.eq.s32.totalorder %v854, 1
      %vm887 = vcmp.eq.s32.totalorder %v855, 1
      %vm888 = vcmp.eq.s32.totalorder %v856, 1
      %vm889 = vcmp.eq.s32.totalorder %v857, 1
      %vm890 = vcmp.eq.s32.totalorder %v858, 1
      %vm891 = vcmp.eq.s32.totalorder %v859, 1
      %vm892 = vcmp.eq.s32.totalorder %v860, 1
      %vm893 = vcmp.eq.s32.totalorder %v861, 1
      %vm894 = vcmp.eq.s32.totalorder %v862, 1
      %vm895 = vcmp.eq.s32.totalorder %v863, 1
      %vm896 = vcmp.eq.s32.totalorder %v864, 1
      %vm897 = vcmp.eq.s32.totalorder %v865, 1
      %vm898 = vcmp.eq.s32.totalorder %v866, 1
      %vm899 = vcmp.eq.s32.totalorder %v867, 1
      %vm900 = vcmp.eq.s32.totalorder %v868, 1
      %vm901 = vcmp.eq.s32.totalorder %v869, 1
      %v902 = vsel %vm870, %v837, 0.0
      %v903 = vsel %vm871, %v836, 0.0
      %v904 = vsel %vm872, %v835, 0.0
      %v905 = vsel %vm873, %v834, 0.0
      %v906 = vsel %vm874, %v833, 0.0
      %v907 = vsel %vm875, %v832, 0.0
      %v908 = vsel %vm876, %v831, 0.0
      %v909 = vsel %vm877, %v830, 0.0
      %v910 = vsel %vm878, %v829, 0.0
      %v911 = vsel %vm879, %v828, 0.0
      %v912 = vsel %vm880, %v827, 0.0
      %v913 = vsel %vm881, %v826, 0.0
      %v914 = vsel %vm882, %v825, 0.0
      %v915 = vsel %vm883, %v824, 0.0
      %v916 = vsel %vm884, %v823, 0.0
      %v917 = vsel %vm885, %v822, 0.0
      %v918 = vsel %vm886, %v821, 0.0
      %v919 = vsel %vm887, %v820, 0.0
      %v920 = vsel %vm888, %v819, 0.0
      %v921 = vsel %vm889, %v818, 0.0
      %v922 = vsel %vm890, %v817, 0.0
      %v923 = vsel %vm891, %v816, 0.0
      %v924 = vsel %vm892, %v815, 0.0
      %v925 = vsel %vm893, %v814, 0.0
      %v926 = vsel %vm894, %v813, 0.0
      %v927 = vsel %vm895, %v812, 0.0
      %v928 = vsel %vm896, %v811, 0.0
      %v929 = vsel %vm897, %v810, 0.0
      %v930 = vsel %vm898, %v809, 0.0
      %v931 = vsel %vm899, %v808, 0.0
      %v932 = vsel %vm900, %v807, 0.0
      %v933 = vsel %vm901, %v806, 0.0
      %v934 = vrot.slane %v758, 1
      %v935 = vrot.slane %v759, 1
      %v936 = vrot.slane %v715, 1
      %v937 = vrot.slane %v716, 1
      %v938 = vrot.slane %v717, 1
      %v939 = vrot.slane %v718, 1
      %v940 = vrot.slane %v719, 1
      %v941 = vrot.slane %v720, 1
      %v942 = vrot.slane %v721, 1
      %v943 = vrot.slane %v722, 1
      %v944 = vrot.slane %v723, 1
      %v945 = vrot.slane %v724, 1
      %v946 = vrot.slane %v725, 1
      %v947 = vrot.slane %v726, 1
      %v948 = vrot.slane %v727, 1
      %v949 = vrot.slane %v728, 1
      %v950 = vrot.slane %v729, 1
      %v951 = vrot.slane %v730, 1
      %v952 = vrot.slane %v731, 1
      %v953 = vrot.slane %v732, 1
      %v954 = vrot.slane %v733, 1
      %v955 = vrot.slane %v734, 1
      %v956 = vrot.slane %v735, 1
      %v957 = vrot.slane %v736, 1
      %v958 = vrot.slane %v737, 1
      %v959 = vrot.slane %v738, 1
      %v960 = vrot.slane %v739, 1
      %v961 = vrot.slane %v740, 1
      %v962 = vrot.slane %v741, 1
      %v963 = vrot.slane %v742, 1
      %v964 = vrot.slane %v743, 1
      %v965 = vrot.slane %v744, 1
      %vm966 = vcmp.lt.s32.totalorder %v233, 7
      %v967 = vsel %vm966, %v964, %v965
      %v968 = vsel %vm966, %v963, %v964
      %v969 = vsel %vm966, %v962, %v963
      %v970 = vsel %vm966, %v961, %v962
      %v971 = vsel %vm966, %v960, %v961
      %v972 = vsel %vm966, %v959, %v960
      %v973 = vsel %vm966, %v958, %v959
      %v974 = vsel %vm966, %v957, %v958
      %v975 = vsel %vm966, %v956, %v957
      %v976 = vsel %vm966, %v955, %v956
      %v977 = vsel %vm966, %v954, %v955
      %v978 = vsel %vm966, %v953, %v954
      %v979 = vsel %vm966, %v952, %v953
      %v980 = vsel %vm966, %v951, %v952
      %v981 = vsel %vm966, %v950, %v951
      %v982 = vsel %vm966, %v949, %v950
      %v983 = vsel %vm966, %v948, %v949
      %v984 = vsel %vm966, %v947, %v948
      %v985 = vsel %vm966, %v946, %v947
      %v986 = vsel %vm966, %v945, %v946
      %v987 = vsel %vm966, %v944, %v945
      %v988 = vsel %vm966, %v943, %v944
      %v989 = vsel %vm966, %v942, %v943
      %v990 = vsel %vm966, %v941, %v942
      %v991 = vsel %vm966, %v940, %v941
      %v992 = vsel %vm966, %v939, %v940
      %v993 = vsel %vm966, %v938, %v939
      %v994 = vsel %vm966, %v937, %v938
      %v995 = vsel %vm966, %v936, %v937
      %v996 = vsel %vm966, %v935, %v936
      %v997 = vsel %vm966, %v934, %v935
      %v998 = vsel %vm966, %v965, %v934
      %v999 = vsel %vm681, 1, 0
      %v1000 = vsel %vm682, 1, 0
      %v1001 = vsel %vm683, 1, 0
      %v1002 = vsel %vm684, 1, 0
      %v1003 = vsel %vm685, 1, 0
      %v1004 = vsel %vm686, 1, 0
      %v1005 = vsel %vm687, 1, 0
      %v1006 = vsel %vm688, 1, 0
      %v1007 = vsel %vm689, 1, 0
      %v1008 = vsel %vm690, 1, 0
      %v1009 = vsel %vm691, 1, 0
      %v1010 = vsel %vm692, 1, 0
      %v1011 = vsel %vm693, 1, 0
      %v1012 = vsel %vm694, 1, 0
      %v1013 = vsel %vm695, 1, 0
      %v1014 = vsel %vm696, 1, 0
      %v1015 = vsel %vm697, 1, 0
      %v1016 = vsel %vm698, 1, 0
      %v1017 = vsel %vm699, 1, 0
      %v1018 = vsel %vm700, 1, 0
      %v1019 = vsel %vm701, 1, 0
      %v1020 = vsel %vm702, 1, 0
      %v1021 = vsel %vm703, 1, 0
      %v1022 = vsel %vm704, 1, 0
      %v1023 = vsel %vm705, 1, 0
      %v1024 = vsel %vm706, 1, 0
      %v1025 = vsel %vm707, 1, 0
      %v1026 = vsel %vm708, 1, 0
      %v1027 = vsel %vm709, 1, 0
      %v1028 = vsel %vm710, 1, 0
      %v1029 = vsel %vm711, 1, 0
      %v1030 = vsel %vm712, 1, 0
      %vm1031 = vcmp.eq.s32.totalorder %v999, 1
      %vm1032 = vcmp.eq.s32.totalorder %v1000, 1
      %vm1033 = vcmp.eq.s32.totalorder %v1001, 1
      %vm1034 = vcmp.eq.s32.totalorder %v1002, 1
      %vm1035 = vcmp.eq.s32.totalorder %v1003, 1
      %vm1036 = vcmp.eq.s32.totalorder %v1004, 1
      %vm1037 = vcmp.eq.s32.totalorder %v1005, 1
      %vm1038 = vcmp.eq.s32.totalorder %v1006, 1
      %vm1039 = vcmp.eq.s32.totalorder %v1007, 1
      %vm1040 = vcmp.eq.s32.totalorder %v1008, 1
      %vm1041 = vcmp.eq.s32.totalorder %v1009, 1
      %vm1042 = vcmp.eq.s32.totalorder %v1010, 1
      %vm1043 = vcmp.eq.s32.totalorder %v1011, 1
      %vm1044 = vcmp.eq.s32.totalorder %v1012, 1
      %vm1045 = vcmp.eq.s32.totalorder %v1013, 1
      %vm1046 = vcmp.eq.s32.totalorder %v1014, 1
      %vm1047 = vcmp.eq.s32.totalorder %v1015, 1
      %vm1048 = vcmp.eq.s32.totalorder %v1016, 1
      %vm1049 = vcmp.eq.s32.totalorder %v1017, 1
      %vm1050 = vcmp.eq.s32.totalorder %v1018, 1
      %vm1051 = vcmp.eq.s32.totalorder %v1019, 1
      %vm1052 = vcmp.eq.s32.totalorder %v1020, 1
      %vm1053 = vcmp.eq.s32.totalorder %v1021, 1
      %vm1054 = vcmp.eq.s32.totalorder %v1022, 1
      %vm1055 = vcmp.eq.s32.totalorder %v1023, 1
      %vm1056 = vcmp.eq.s32.totalorder %v1024, 1
      %vm1057 = vcmp.eq.s32.totalorder %v1025, 1
      %vm1058 = vcmp.eq.s32.totalorder %v1026, 1
      %vm1059 = vcmp.eq.s32.totalorder %v1027, 1
      %vm1060 = vcmp.eq.s32.totalorder %v1028, 1
      %vm1061 = vcmp.eq.s32.totalorder %v1029, 1
      %vm1062 = vcmp.eq.s32.totalorder %v1030, 1
      %v1063 = vsel %vm1031, %v997, 0.0
      %v1064 = vsel %vm1032, %v996, 0.0
      %v1065 = vsel %vm1033, %v995, 0.0
      %v1066 = vsel %vm1034, %v994, 0.0
      %v1067 = vsel %vm1035, %v993, 0.0
      %v1068 = vsel %vm1036, %v992, 0.0
      %v1069 = vsel %vm1037, %v991, 0.0
      %v1070 = vsel %vm1038, %v990, 0.0
      %v1071 = vsel %vm1039, %v989, 0.0
      %v1072 = vsel %vm1040, %v988, 0.0
      %v1073 = vsel %vm1041, %v987, 0.0
      %v1074 = vsel %vm1042, %v986, 0.0
      %v1075 = vsel %vm1043, %v985, 0.0
      %v1076 = vsel %vm1044, %v984, 0.0
      %v1077 = vsel %vm1045, %v983, 0.0
      %v1078 = vsel %vm1046, %v982, 0.0
      %v1079 = vsel %vm1047, %v981, 0.0
      %v1080 = vsel %vm1048, %v980, 0.0
      %v1081 = vsel %vm1049, %v979, 0.0
      %v1082 = vsel %vm1050, %v978, 0.0
      %v1083 = vsel %vm1051, %v977, 0.0
      %v1084 = vsel %vm1052, %v976, 0.0
      %v1085 = vsel %vm1053, %v975, 0.0
      %v1086 = vsel %vm1054, %v974, 0.0
      %v1087 = vsel %vm1055, %v973, 0.0
      %v1088 = vsel %vm1056, %v972, 0.0
      %v1089 = vsel %vm1057, %v971, 0.0
      %v1090 = vsel %vm1058, %v970, 0.0
      %v1091 = vsel %vm1059, %v969, 0.0
      %v1092 = vsel %vm1060, %v968, 0.0
      %v1093 = vsel %vm1061, %v967, 0.0
      %v1094 = vsel %vm1062, %v998, 0.0
      %v1095 = vld [vmem:[%s1] sm:$0xff]
      %v1096 = vld [vmem:[%s1 + $0x8] sm:$0xff]
      %v1097 = vld [vmem:[%s1 + $0x10] sm:$0xff]
      %v1098 = vld [vmem:[%s1 + $0x18] sm:$0xff]
      %v1099 = vld [vmem:[%s1 + $0x20] sm:$0xff]
      %v1100 = vld [vmem:[%s1 + $0x28] sm:$0xff]
      %v1101 = vld [vmem:[%s1 + $0x30] sm:$0xff]
      %v1102 = vld [vmem:[%s1 + $0x38] sm:$0xff]
      %v1103 = vld [vmem:[%s1 + $0x40] sm:$0xff]
      %v1104 = vld [vmem:[%s1 + $0x48] sm:$0xff]
      %v1105 = vld [vmem:[%s1 + $0x50] sm:$0xff]
      %v1106 = vld [vmem:[%s1 + $0x58] sm:$0xff]
      %v1107 = vld [vmem:[%s1 + $0x60] sm:$0xff]
      %v1108 = vld [vmem:[%s1 + $0x68] sm:$0xff]
      %v1109 = vld [vmem:[%s1 + $0x70] sm:$0xff]
      %v1110 = vld [vmem:[%s1 + $0x78] sm:$0xff]
      %v1111 = vld [vmem:[%s1 + $0x80] sm:$0xff]
      %v1112 = vld [vmem:[%s1 + $0x88] sm:$0xff]
      %v1113 = vld [vmem:[%s1 + $0x90] sm:$0xff]
      %v1114 = vld [vmem:[%s1 + $0x98] sm:$0xff]
      %v1115 = vld [vmem:[%s1 + $0xa0] sm:$0xff]
      %v1116 = vld [vmem:[%s1 + $0xa8] sm:$0xff]
      %v1117 = vld [vmem:[%s1 + $0xb0] sm:$0xff]
      %v1118 = vld [vmem:[%s1 + $0xb8] sm:$0xff]
      %v1119 = vld [vmem:[%s1 + $0xc0] sm:$0xff]
      %v1120 = vld [vmem:[%s1 + $0xc8] sm:$0xff]
      %v1121 = vld [vmem:[%s1 + $0xd0] sm:$0xff]
      %v1122 = vld [vmem:[%s1 + $0xd8] sm:$0xff]
      %v1123 = vld [vmem:[%s1 + $0xe0] sm:$0xff]
      %v1124 = vld [vmem:[%s1 + $0xe8] sm:$0xff]
      %v1125 = vld [vmem:[%s1 + $0xf0] sm:$0xff]
      %v1126 = vld [vmem:[%s1 + $0xf8] sm:$0xff]
      %v1127 = vld [vmem:[%s1 + $0x100] sm:$0xff]
      %v1128 = vld [vmem:[%s1 + $0x108] sm:$0xff]
      %v1129 = vld [vmem:[%s1 + $0x110] sm:$0xff]
      %v1130 = vld [vmem:[%s1 + $0x118] sm:$0xff]
      %v1131 = vld [vmem:[%s1 + $0x120] sm:$0xff]
      %v1132 = vld [vmem:[%s1 + $0x128] sm:$0xff]
      %v1133 = vld [vmem:[%s1 + $0x130] sm:$0xff]
      %v1134 = vld [vmem:[%s1 + $0x138] sm:$0xff]
      %v1135 = vld [vmem:[%s1 + $0x140] sm:$0xff]
      %v1136 = vld [vmem:[%s1 + $0x148] sm:$0xff]
      %v1137 = vld [vmem:[%s1 + $0x150] sm:$0xff]
      %v1138 = vld [vmem:[%s1 + $0x158] sm:$0xff]
      %v1139 = vld [vmem:[%s1 + $0x160] sm:$0xff]
      %v1140 = vld [vmem:[%s1 + $0x168] sm:$0xff]
      %v1141 = vld [vmem:[%s1 + $0x170] sm:$0xff]
      %v1142 = vld [vmem:[%s1 + $0x178] sm:$0xff]
      %v1143 = vrot.slane %v745, 7
      %v1144 = vrot.slane %v746, 7
      %v1145 = vsel %vm805, %v1143, %v1144
      %v1146 = vsel %vm805, %v804, %v1143
      %v1147 = vsel %vm805, %v1144, %v775
      %v1148 = vsel %vm870, %v1147, 0.0
      %v1149 = vsel %vm871, %v834, 0.0
      %v1150 = vsel %vm872, %v833, 0.0
      %v1151 = vsel %vm873, %v832, 0.0
      %v1152 = vsel %vm874, %v831, 0.0
      %v1153 = vsel %vm875, %v830, 0.0
      %v1154 = vsel %vm876, %v829, 0.0
      %v1155 = vsel %vm877, %v828, 0.0
      %v1156 = vsel %vm878, %v827, 0.0
      %v1157 = vsel %vm879, %v826, 0.0
      %v1158 = vsel %vm880, %v825, 0.0
      %v1159 = vsel %vm881, %v824, 0.0
      %v1160 = vsel %vm882, %v823, 0.0
      %v1161 = vsel %vm883, %v822, 0.0
      %v1162 = vsel %vm884, %v821, 0.0
      %v1163 = vsel %vm885, %v820, 0.0
      %v1164 = vsel %vm886, %v819, 0.0
      %v1165 = vsel %vm887, %v818, 0.0
      %v1166 = vsel %vm888, %v817, 0.0
      %v1167 = vsel %vm889, %v816, 0.0
      %v1168 = vsel %vm890, %v815, 0.0
      %v1169 = vsel %vm891, %v814, 0.0
      %v1170 = vsel %vm892, %v813, 0.0
      %v1171 = vsel %vm893, %v812, 0.0
      %v1172 = vsel %vm894, %v811, 0.0
      %v1173 = vsel %vm895, %v810, 0.0
      %v1174 = vsel %vm896, %v809, 0.0
      %v1175 = vsel %vm897, %v808, 0.0
      %v1176 = vsel %vm898, %v807, 0.0
      %v1177 = vsel %vm899, %v806, 0.0
      %v1178 = vsel %vm900, %v1146, 0.0
      %v1179 = vsel %vm901, %v1145, 0.0
      %v1180 = vrot.slane %v745, 1
      %v1181 = vrot.slane %v746, 1
      %v1182 = vsel %vm966, %v1180, %v1181
      %v1183 = vsel %vm966, %v965, %v1180
      %v1184 = vsel %vm966, %v1181, %v936
      %v1185 = vsel %vm1031, %v995, 0.0
      %v1186 = vsel %vm1032, %v994, 0.0
      %v1187 = vsel %vm1033, %v993, 0.0
      %v1188 = vsel %vm1034, %v992, 0.0
      %v1189 = vsel %vm1035, %v991, 0.0
      %v1190 = vsel %vm1036, %v990, 0.0
      %v1191 = vsel %vm1037, %v989, 0.0
      %v1192 = vsel %vm1038, %v988, 0.0
      %v1193 = vsel %vm1039, %v987, 0.0
      %v1194 = vsel %vm1040, %v986, 0.0
      %v1195 = vsel %vm1041, %v985, 0.0
      %v1196 = vsel %vm1042, %v984, 0.0
      %v1197 = vsel %vm1043, %v983, 0.0
      %v1198 = vsel %vm1044, %v982, 0.0
      %v1199 = vsel %vm1045, %v981, 0.0
      %v1200 = vsel %vm1046, %v980, 0.0
      %v1201 = vsel %vm1047, %v979, 0.0
      %v1202 = vsel %vm1048, %v978, 0.0
      %v1203 = vsel %vm1049, %v977, 0.0
      %v1204 = vsel %vm1050, %v976, 0.0
      %v1205 = vsel %vm1051, %v975, 0.0
      %v1206 = vsel %vm1052, %v974, 0.0
      %v1207 = vsel %vm1053, %v973, 0.0
      %v1208 = vsel %vm1054, %v972, 0.0
      %v1209 = vsel %vm1055, %v971, 0.0
      %v1210 = vsel %vm1056, %v970, 0.0
      %v1211 = vsel %vm1057, %v969, 0.0
      %v1212 = vsel %vm1058, %v968, 0.0
      %v1213 = vsel %vm1059, %v967, 0.0
      %v1214 = vsel %vm1060, %v1183, 0.0
      %v1215 = vsel %vm1061, %v1182, 0.0
      %v1216 = vsel %vm1062, %v1184, 0.0
      %s1217 = scalar_lea.vmem %s1, 384
      %v1218 = vld [vmem:[%s1217] sm:$0xff]
      %v1219 = vld [vmem:[%s1217 + $0x8] sm:$0xff]
      %v1220 = vld [vmem:[%s1217 + $0x10] sm:$0xff]
      %v1221 = vld [vmem:[%s1217 + $0x18] sm:$0xff]
      %v1222 = vld [vmem:[%s1217 + $0x20] sm:$0xff]
      %v1223 = vld [vmem:[%s1217 + $0x28] sm:$0xff]
      %v1224 = vld [vmem:[%s1217 + $0x30] sm:$0xff]
      %v1225 = vld [vmem:[%s1217 + $0x38] sm:$0xff]
      %v1226 = vld [vmem:[%s1217 + $0x40] sm:$0xff]
      %v1227 = vld [vmem:[%s1217 + $0x48] sm:$0xff]
      %v1228 = vld [vmem:[%s1217 + $0x50] sm:$0xff]
      %v1229 = vld [vmem:[%s1217 + $0x58] sm:$0xff]
      %v1230 = vld [vmem:[%s1217 + $0x60] sm:$0xff]
      %v1231 = vld [vmem:[%s1217 + $0x68] sm:$0xff]
      %v1232 = vld [vmem:[%s1217 + $0x70] sm:$0xff]
      %v1233 = vld [vmem:[%s1217 + $0x78] sm:$0xff]
      %v1234 = vld [vmem:[%s1217 + $0x80] sm:$0xff]
      %v1235 = vld [vmem:[%s1217 + $0x88] sm:$0xff]
      %v1236 = vld [vmem:[%s1217 + $0x90] sm:$0xff]
      %v1237 = vld [vmem:[%s1217 + $0x98] sm:$0xff]
      %v1238 = vld [vmem:[%s1217 + $0xa0] sm:$0xff]
      %v1239 = vld [vmem:[%s1217 + $0xa8] sm:$0xff]
      %v1240 = vld [vmem:[%s1217 + $0xb0] sm:$0xff]
      %v1241 = vld [vmem:[%s1217 + $0xb8] sm:$0xff]
      %v1242 = vld [vmem:[%s1217 + $0xc0] sm:$0xff]
      %v1243 = vld [vmem:[%s1217 + $0xc8] sm:$0xff]
      %v1244 = vld [vmem:[%s1217 + $0xd0] sm:$0xff]
      %v1245 = vld [vmem:[%s1217 + $0xd8] sm:$0xff]
      %v1246 = vld [vmem:[%s1217 + $0xe0] sm:$0xff]
      %v1247 = vld [vmem:[%s1217 + $0xe8] sm:$0xff]
      %v1248 = vld [vmem:[%s1217 + $0xf0] sm:$0xff]
      %v1249 = vld [vmem:[%s1217 + $0xf8] sm:$0xff]
      %v1250 = vld [vmem:[%s1217 + $0x100] sm:$0xff]
      %v1251 = vld [vmem:[%s1217 + $0x108] sm:$0xff]
      %v1252 = vld [vmem:[%s1217 + $0x110] sm:$0xff]
      %v1253 = vld [vmem:[%s1217 + $0x118] sm:$0xff]
      %v1254 = vld [vmem:[%s1217 + $0x120] sm:$0xff]
      %v1255 = vld [vmem:[%s1217 + $0x128] sm:$0xff]
      %v1256 = vld [vmem:[%s1217 + $0x130] sm:$0xff]
      %v1257 = vld [vmem:[%s1217 + $0x138] sm:$0xff]
      %v1258 = vld [vmem:[%s1217 + $0x140] sm:$0xff]
      %v1259 = vld [vmem:[%s1217 + $0x148] sm:$0xff]
      %v1260 = vld [vmem:[%s1217 + $0x150] sm:$0xff]
      %v1261 = vld [vmem:[%s1217 + $0x158] sm:$0xff]
      %v1262 = vld [vmem:[%s1217 + $0x160] sm:$0xff]
      %v1263 = vld [vmem:[%s1217 + $0x168] sm:$0xff]
      %v1264 = vld [vmem:[%s1217 + $0x170] sm:$0xff]
      %v1265 = vld [vmem:[%s1217 + $0x178] sm:$0xff]
      %1266 = vmatpush.msra.mxu0 %v1233
      %1267 = vmatpush.msra.mxu0 %v1232
      %1268 = vmatpush.msra.mxu0 %v1231
      %1269 = vmatpush.msra.mxu0 %v1230
      %1270 = vmatpush.msra.mxu0 %v1229
      %1271 = vmatpush.msra.mxu0 %v1228
      %1272 = vmatpush.msra.mxu0 %v1227
      %1273 = vmatpush.msra.mxu0 %v1226
      %1274 = vmatpush.msra.mxu0 %v1225
      %1275 = vmatpush.msra.mxu0 %v1224
      %1276 = vmatpush.msra.mxu0 %v1223
      %1277 = vmatpush.msra.mxu0 %v1222
      %1278 = vmatpush.msra.mxu0 %v1221
      %1279 = vmatpush.msra.mxu0 %v1220
      %1280 = vmatpush.msra.mxu0 %v1219
      %1281 = vmatpush.msra.mxu0 %v1218
      %1282 = vmatmul.f32.gmra.mxu0 %v1148
      %v1283 = vpop.f32.mrf.mxu0
      %v1284 = vadd.f32 0.0, %v1283
      %1285 = vmatmul.f32.gmra.mxu0 %v1149
      %v1286 = vpop.f32.mrf.mxu0
      %v1287 = vadd.f32 0.0, %v1286
      %1288 = vmatmul.f32.gmra.mxu0 %v1150
      %v1289 = vpop.f32.mrf.mxu0
      %v1290 = vadd.f32 0.0, %v1289
      %1291 = vmatmul.f32.gmra.mxu0 %v1151
      %v1292 = vpop.f32.mrf.mxu0
      %v1293 = vadd.f32 0.0, %v1292
      %1294 = vmatmul.f32.gmra.mxu0 %v1152
      %v1295 = vpop.f32.mrf.mxu0
      %v1296 = vadd.f32 0.0, %v1295
      %1297 = vmatmul.f32.gmra.mxu0 %v1153
      %v1298 = vpop.f32.mrf.mxu0
      %v1299 = vadd.f32 0.0, %v1298
      %1300 = vmatmul.f32.gmra.mxu0 %v1154
      %v1301 = vpop.f32.mrf.mxu0
      %v1302 = vadd.f32 0.0, %v1301
      %1303 = vmatmul.f32.gmra.mxu0 %v1155
      %v1304 = vpop.f32.mrf.mxu0
      %v1305 = vadd.f32 0.0, %v1304
      %1306 = vmatmul.f32.gmra.mxu0 %v1156
      %v1307 = vpop.f32.mrf.mxu0
      %v1308 = vadd.f32 0.0, %v1307
      %1309 = vmatmul.f32.gmra.mxu0 %v1157
      %v1310 = vpop.f32.mrf.mxu0
      %v1311 = vadd.f32 0.0, %v1310
      %1312 = vmatmul.f32.gmra.mxu0 %v1158
      %v1313 = vpop.f32.mrf.mxu0
      %v1314 = vadd.f32 0.0, %v1313
      %1315 = vmatmul.f32.gmra.mxu0 %v1159
      %v1316 = vpop.f32.mrf.mxu0
      %v1317 = vadd.f32 0.0, %v1316
      %1318 = vmatmul.f32.gmra.mxu0 %v1160
      %v1319 = vpop.f32.mrf.mxu0
      %v1320 = vadd.f32 0.0, %v1319
      %1321 = vmatmul.f32.gmra.mxu0 %v1161
      %v1322 = vpop.f32.mrf.mxu0
      %v1323 = vadd.f32 0.0, %v1322
      %1324 = vmatmul.f32.gmra.mxu0 %v1162
      %v1325 = vpop.f32.mrf.mxu0
      %v1326 = vadd.f32 0.0, %v1325
      %1327 = vmatmul.f32.gmra.mxu0 %v1163
      %v1328 = vpop.f32.mrf.mxu0
      %v1329 = vadd.f32 0.0, %v1328
      %1330 = vmatmul.f32.gmra.mxu0 %v1164
      %v1331 = vpop.f32.mrf.mxu0
      %v1332 = vadd.f32 0.0, %v1331
      %1333 = vmatmul.f32.gmra.mxu0 %v1165
      %v1334 = vpop.f32.mrf.mxu0
      %v1335 = vadd.f32 0.0, %v1334
      %1336 = vmatmul.f32.gmra.mxu0 %v1166
      %v1337 = vpop.f32.mrf.mxu0
      %v1338 = vadd.f32 0.0, %v1337
      %1339 = vmatmul.f32.gmra.mxu0 %v1167
      %v1340 = vpop.f32.mrf.mxu0
      %v1341 = vadd.f32 0.0, %v1340
      %1342 = vmatmul.f32.gmra.mxu0 %v1168
      %v1343 = vpop.f32.mrf.mxu0
      %v1344 = vadd.f32 0.0, %v1343
      %1345 = vmatmul.f32.gmra.mxu0 %v1169
      %v1346 = vpop.f32.mrf.mxu0
      %v1347 = vadd.f32 0.0, %v1346
      %1348 = vmatmul.f32.gmra.mxu0 %v1170
      %v1349 = vpop.f32.mrf.mxu0
      %v1350 = vadd.f32 0.0, %v1349
      %1351 = vmatmul.f32.gmra.mxu0 %v1171
      %v1352 = vpop.f32.mrf.mxu0
      %v1353 = vadd.f32 0.0, %v1352
      %1354 = vmatmul.f32.gmra.mxu0 %v1172
      %v1355 = vpop.f32.mrf.mxu0
      %v1356 = vadd.f32 0.0, %v1355
      %1357 = vmatmul.f32.gmra.mxu0 %v1173
      %v1358 = vpop.f32.mrf.mxu0
      %v1359 = vadd.f32 0.0, %v1358
      %1360 = vmatmul.f32.gmra.mxu0 %v1174
      %v1361 = vpop.f32.mrf.mxu0
      %v1362 = vadd.f32 0.0, %v1361
      %1363 = vmatmul.f32.gmra.mxu0 %v1175
      %v1364 = vpop.f32.mrf.mxu0
      %v1365 = vadd.f32 0.0, %v1364
      %1366 = vmatmul.f32.gmra.mxu0 %v1176
      %v1367 = vpop.f32.mrf.mxu0
      %v1368 = vadd.f32 0.0, %v1367
      %1369 = vmatmul.f32.gmra.mxu0 %v1177
      %v1370 = vpop.f32.mrf.mxu0
      %v1371 = vadd.f32 0.0, %v1370
      %1372 = vmatmul.f32.gmra.mxu0 %v1178
      %v1373 = vpop.f32.mrf.mxu0
      %v1374 = vadd.f32 0.0, %v1373
      %1375 = vmatmul.f32.gmra.mxu0 %v1179
      %v1376 = vpop.f32.mrf.mxu0
      %v1377 = vadd.f32 0.0, %v1376
      %1378 = vdwg.mxu0
      %1379 = vmatpush.msra.mxu0 %v1249
      %1380 = vmatpush.msra.mxu0 %v1248
      %1381 = vmatpush.msra.mxu0 %v1247
      %1382 = vmatpush.msra.mxu0 %v1246
      %1383 = vmatpush.msra.mxu0 %v1245
      %1384 = vmatpush.msra.mxu0 %v1244
      %1385 = vmatpush.msra.mxu0 %v1243
      %1386 = vmatpush.msra.mxu0 %v1242
      %1387 = vmatpush.msra.mxu0 %v1241
      %1388 = vmatpush.msra.mxu0 %v1240
      %1389 = vmatpush.msra.mxu0 %v1239
      %1390 = vmatpush.msra.mxu0 %v1238
      %1391 = vmatpush.msra.mxu0 %v1237
      %1392 = vmatpush.msra.mxu0 %v1236
      %1393 = vmatpush.msra.mxu0 %v1235
      %1394 = vmatpush.msra.mxu0 %v1234
      %1395 = vmatmul.f32.gmra.mxu0 %v715
      %v1396 = vpop.f32.mrf.mxu0
      %v1397 = vadd.f32 %v1284, %v1396
      %1398 = vmatmul.f32.gmra.mxu0 %v716
      %v1399 = vpop.f32.mrf.mxu0
      %v1400 = vadd.f32 %v1287, %v1399
      %1401 = vmatmul.f32.gmra.mxu0 %v717
      %v1402 = vpop.f32.mrf.mxu0
      %v1403 = vadd.f32 %v1290, %v1402
      %1404 = vmatmul.f32.gmra.mxu0 %v718
      %v1405 = vpop.f32.mrf.mxu0
      %v1406 = vadd.f32 %v1293, %v1405
      %1407 = vmatmul.f32.gmra.mxu0 %v719
      %v1408 = vpop.f32.mrf.mxu0
      %v1409 = vadd.f32 %v1296, %v1408
      %1410 = vmatmul.f32.gmra.mxu0 %v720
      %v1411 = vpop.f32.mrf.mxu0
      %v1412 = vadd.f32 %v1299, %v1411
      %1413 = vmatmul.f32.gmra.mxu0 %v721
      %v1414 = vpop.f32.mrf.mxu0
      %v1415 = vadd.f32 %v1302, %v1414
      %1416 = vmatmul.f32.gmra.mxu0 %v722
      %v1417 = vpop.f32.mrf.mxu0
      %v1418 = vadd.f32 %v1305, %v1417
      %1419 = vmatmul.f32.gmra.mxu0 %v723
      %v1420 = vpop.f32.mrf.mxu0
      %v1421 = vadd.f32 %v1308, %v1420
      %1422 = vmatmul.f32.gmra.mxu0 %v724
      %v1423 = vpop.f32.mrf.mxu0
      %v1424 = vadd.f32 %v1311, %v1423
      %1425 = vmatmul.f32.gmra.mxu0 %v725
      %v1426 = vpop.f32.mrf.mxu0
      %v1427 = vadd.f32 %v1314, %v1426
      %1428 = vmatmul.f32.gmra.mxu0 %v726
      %v1429 = vpop.f32.mrf.mxu0
      %v1430 = vadd.f32 %v1317, %v1429
      %1431 = vmatmul.f32.gmra.mxu0 %v727
      %v1432 = vpop.f32.mrf.mxu0
      %v1433 = vadd.f32 %v1320, %v1432
      %1434 = vmatmul.f32.gmra.mxu0 %v728
      %v1435 = vpop.f32.mrf.mxu0
      %v1436 = vadd.f32 %v1323, %v1435
      %1437 = vmatmul.f32.gmra.mxu0 %v729
      %v1438 = vpop.f32.mrf.mxu0
      %v1439 = vadd.f32 %v1326, %v1438
      %1440 = vmatmul.f32.gmra.mxu0 %v730
      %v1441 = vpop.f32.mrf.mxu0
      %v1442 = vadd.f32 %v1329, %v1441
      %1443 = vmatmul.f32.gmra.mxu0 %v731
      %v1444 = vpop.f32.mrf.mxu0
      %v1445 = vadd.f32 %v1332, %v1444
      %1446 = vmatmul.f32.gmra.mxu0 %v732
      %v1447 = vpop.f32.mrf.mxu0
      %v1448 = vadd.f32 %v1335, %v1447
      %1449 = vmatmul.f32.gmra.mxu0 %v733
      %v1450 = vpop.f32.mrf.mxu0
      %v1451 = vadd.f32 %v1338, %v1450
      %1452 = vmatmul.f32.gmra.mxu0 %v734
      %v1453 = vpop.f32.mrf.mxu0
      %v1454 = vadd.f32 %v1341, %v1453
      %1455 = vmatmul.f32.gmra.mxu0 %v735
      %v1456 = vpop.f32.mrf.mxu0
      %v1457 = vadd.f32 %v1344, %v1456
      %1458 = vmatmul.f32.gmra.mxu0 %v736
      %v1459 = vpop.f32.mrf.mxu0
      %v1460 = vadd.f32 %v1347, %v1459
      %1461 = vmatmul.f32.gmra.mxu0 %v737
      %v1462 = vpop.f32.mrf.mxu0
      %v1463 = vadd.f32 %v1350, %v1462
      %1464 = vmatmul.f32.gmra.mxu0 %v738
      %v1465 = vpop.f32.mrf.mxu0
      %v1466 = vadd.f32 %v1353, %v1465
      %1467 = vmatmul.f32.gmra.mxu0 %v739
      %v1468 = vpop.f32.mrf.mxu0
      %v1469 = vadd.f32 %v1356, %v1468
      %1470 = vmatmul.f32.gmra.mxu0 %v740
      %v1471 = vpop.f32.mrf.mxu0
      %v1472 = vadd.f32 %v1359, %v1471
      %1473 = vmatmul.f32.gmra.mxu0 %v741
      %v1474 = vpop.f32.mrf.mxu0
      %v1475 = vadd.f32 %v1362, %v1474
      %1476 = vmatmul.f32.gmra.mxu0 %v742
      %v1477 = vpop.f32.mrf.mxu0
      %v1478 = vadd.f32 %v1365, %v1477
      %1479 = vmatmul.f32.gmra.mxu0 %v743
      %v1480 = vpop.f32.mrf.mxu0
      %v1481 = vadd.f32 %v1368, %v1480
      %1482 = vmatmul.f32.gmra.mxu0 %v744
      %v1483 = vpop.f32.mrf.mxu0
      %v1484 = vadd.f32 %v1371, %v1483
      %1485 = vmatmul.f32.gmra.mxu0 %v745
      %v1486 = vpop.f32.mrf.mxu0
      %v1487 = vadd.f32 %v1374, %v1486
      %1488 = vmatmul.f32.gmra.mxu0 %v746
      %v1489 = vpop.f32.mrf.mxu0
      %v1490 = vadd.f32 %v1377, %v1489
      %1491 = vdwg.mxu0
      %1492 = vmatpush.msra.mxu0 %v1265
      %1493 = vmatpush.msra.mxu0 %v1264
      %1494 = vmatpush.msra.mxu0 %v1263
      %1495 = vmatpush.msra.mxu0 %v1262
      %1496 = vmatpush.msra.mxu0 %v1261
      %1497 = vmatpush.msra.mxu0 %v1260
      %1498 = vmatpush.msra.mxu0 %v1259
      %1499 = vmatpush.msra.mxu0 %v1258
      %1500 = vmatpush.msra.mxu0 %v1257
      %1501 = vmatpush.msra.mxu0 %v1256
      %1502 = vmatpush.msra.mxu0 %v1255
      %1503 = vmatpush.msra.mxu0 %v1254
      %1504 = vmatpush.msra.mxu0 %v1253
      %1505 = vmatpush.msra.mxu0 %v1252
      %1506 = vmatpush.msra.mxu0 %v1251
      %1507 = vmatpush.msra.mxu0 %v1250
      %1508 = vmatmul.f32.gmra.mxu0 %v1185
      %v1509 = vpop.f32.mrf.mxu0
      %v1510 = vadd.f32 %v1397, %v1509
      %1511 = vmatmul.f32.gmra.mxu0 %v1186
      %v1512 = vpop.f32.mrf.mxu0
      %v1513 = vadd.f32 %v1400, %v1512
      %1514 = vmatmul.f32.gmra.mxu0 %v1187
      %v1515 = vpop.f32.mrf.mxu0
      %v1516 = vadd.f32 %v1403, %v1515
      %1517 = vmatmul.f32.gmra.mxu0 %v1188
      %v1518 = vpop.f32.mrf.mxu0
      %v1519 = vadd.f32 %v1406, %v1518
      %1520 = vmatmul.f32.gmra.mxu0 %v1189
      %v1521 = vpop.f32.mrf.mxu0
      %v1522 = vadd.f32 %v1409, %v1521
      %1523 = vmatmul.f32.gmra.mxu0 %v1190
      %v1524 = vpop.f32.mrf.mxu0
      %v1525 = vadd.f32 %v1412, %v1524
      %1526 = vmatmul.f32.gmra.mxu0 %v1191
      %v1527 = vpop.f32.mrf.mxu0
      %v1528 = vadd.f32 %v1415, %v1527
      %1529 = vmatmul.f32.gmra.mxu0 %v1192
      %v1530 = vpop.f32.mrf.mxu0
      %v1531 = vadd.f32 %v1418, %v1530
      %1532 = vmatmul.f32.gmra.mxu0 %v1193
      %v1533 = vpop.f32.mrf.mxu0
      %v1534 = vadd.f32 %v1421, %v1533
      %1535 = vmatmul.f32.gmra.mxu0 %v1194
      %v1536 = vpop.f32.mrf.mxu0
      %v1537 = vadd.f32 %v1424, %v1536
      %1538 = vmatmul.f32.gmra.mxu0 %v1195
      %v1539 = vpop.f32.mrf.mxu0
      %v1540 = vadd.f32 %v1427, %v1539
      %1541 = vmatmul.f32.gmra.mxu0 %v1196
      %v1542 = vpop.f32.mrf.mxu0
      %v1543 = vadd.f32 %v1430, %v1542
      %1544 = vmatmul.f32.gmra.mxu0 %v1197
      %v1545 = vpop.f32.mrf.mxu0
      %v1546 = vadd.f32 %v1433, %v1545
      %1547 = vmatmul.f32.gmra.mxu0 %v1198
      %v1548 = vpop.f32.mrf.mxu0
      %v1549 = vadd.f32 %v1436, %v1548
      %1550 = vmatmul.f32.gmra.mxu0 %v1199
      %v1551 = vpop.f32.mrf.mxu0
      %v1552 = vadd.f32 %v1439, %v1551
      %1553 = vmatmul.f32.gmra.mxu0 %v1200
      %v1554 = vpop.f32.mrf.mxu0
      %v1555 = vadd.f32 %v1442, %v1554
      %1556 = vmatmul.f32.gmra.mxu0 %v1201
      %v1557 = vpop.f32.mrf.mxu0
      %v1558 = vadd.f32 %v1445, %v1557
      %1559 = vmatmul.f32.gmra.mxu0 %v1202
      %v1560 = vpop.f32.mrf.mxu0
      %v1561 = vadd.f32 %v1448, %v1560
      %1562 = vmatmul.f32.gmra.mxu0 %v1203
      %v1563 = vpop.f32.mrf.mxu0
      %v1564 = vadd.f32 %v1451, %v1563
      %1565 = vmatmul.f32.gmra.mxu0 %v1204
      %v1566 = vpop.f32.mrf.mxu0
      %v1567 = vadd.f32 %v1454, %v1566
      %1568 = vmatmul.f32.gmra.mxu0 %v1205
      %v1569 = vpop.f32.mrf.mxu0
      %v1570 = vadd.f32 %v1457, %v1569
      %1571 = vmatmul.f32.gmra.mxu0 %v1206
      %v1572 = vpop.f32.mrf.mxu0
      %v1573 = vadd.f32 %v1460, %v1572
      %1574 = vmatmul.f32.gmra.mxu0 %v1207
      %v1575 = vpop.f32.mrf.mxu0
      %v1576 = vadd.f32 %v1463, %v1575
      %1577 = vmatmul.f32.gmra.mxu0 %v1208
      %v1578 = vpop.f32.mrf.mxu0
      %v1579 = vadd.f32 %v1466, %v1578
      %1580 = vmatmul.f32.gmra.mxu0 %v1209
      %v1581 = vpop.f32.mrf.mxu0
      %v1582 = vadd.f32 %v1469, %v1581
      %1583 = vmatmul.f32.gmra.mxu0 %v1210
      %v1584 = vpop.f32.mrf.mxu0
      %v1585 = vadd.f32 %v1472, %v1584
      %1586 = vmatmul.f32.gmra.mxu0 %v1211
      %v1587 = vpop.f32.mrf.mxu0
      %v1588 = vadd.f32 %v1475, %v1587
      %1589 = vmatmul.f32.gmra.mxu0 %v1212
      %v1590 = vpop.f32.mrf.mxu0
      %v1591 = vadd.f32 %v1478, %v1590
      %1592 = vmatmul.f32.gmra.mxu0 %v1213
      %v1593 = vpop.f32.mrf.mxu0
      %v1594 = vadd.f32 %v1481, %v1593
      %1595 = vmatmul.f32.gmra.mxu0 %v1214
      %v1596 = vpop.f32.mrf.mxu0
      %v1597 = vadd.f32 %v1484, %v1596
      %1598 = vmatmul.f32.gmra.mxu0 %v1215
      %v1599 = vpop.f32.mrf.mxu0
      %v1600 = vadd.f32 %v1487, %v1599
      %1601 = vmatmul.f32.gmra.mxu0 %v1216
      %v1602 = vpop.f32.mrf.mxu0
      %v1603 = vadd.f32 %v1490, %v1602
      %1604 = vdwg.mxu0
      %1605 = vmatpush.msra.mxu0 %v1110
      %1606 = vmatpush.msra.mxu0 %v1109
      %1607 = vmatpush.msra.mxu0 %v1108
      %1608 = vmatpush.msra.mxu0 %v1107
      %1609 = vmatpush.msra.mxu0 %v1106
      %1610 = vmatpush.msra.mxu0 %v1105
      %1611 = vmatpush.msra.mxu0 %v1104
      %1612 = vmatpush.msra.mxu0 %v1103
      %1613 = vmatpush.msra.mxu0 %v1102
      %1614 = vmatpush.msra.mxu0 %v1101
      %1615 = vmatpush.msra.mxu0 %v1100
      %1616 = vmatpush.msra.mxu0 %v1099
      %1617 = vmatpush.msra.mxu0 %v1098
      %1618 = vmatpush.msra.mxu0 %v1097
      %1619 = vmatpush.msra.mxu0 %v1096
      %1620 = vmatpush.msra.mxu0 %v1095
      %1621 = vmatmul.f32.gmra.mxu0 %v902
      %v1622 = vpop.f32.mrf.mxu0
      %v1623 = vadd.f32 %v1510, %v1622
      %1624 = vmatmul.f32.gmra.mxu0 %v903
      %v1625 = vpop.f32.mrf.mxu0
      %v1626 = vadd.f32 %v1513, %v1625
      %1627 = vmatmul.f32.gmra.mxu0 %v904
      %v1628 = vpop.f32.mrf.mxu0
      %v1629 = vadd.f32 %v1516, %v1628
      %1630 = vmatmul.f32.gmra.mxu0 %v905
      %v1631 = vpop.f32.mrf.mxu0
      %v1632 = vadd.f32 %v1519, %v1631
      %1633 = vmatmul.f32.gmra.mxu0 %v906
      %v1634 = vpop.f32.mrf.mxu0
      %v1635 = vadd.f32 %v1522, %v1634
      %1636 = vmatmul.f32.gmra.mxu0 %v907
      %v1637 = vpop.f32.mrf.mxu0
      %v1638 = vadd.f32 %v1525, %v1637
      %1639 = vmatmul.f32.gmra.mxu0 %v908
      %v1640 = vpop.f32.mrf.mxu0
      %v1641 = vadd.f32 %v1528, %v1640
      %1642 = vmatmul.f32.gmra.mxu0 %v909
      %v1643 = vpop.f32.mrf.mxu0
      %v1644 = vadd.f32 %v1531, %v1643
      %1645 = vmatmul.f32.gmra.mxu0 %v910
      %v1646 = vpop.f32.mrf.mxu0
      %v1647 = vadd.f32 %v1534, %v1646
      %1648 = vmatmul.f32.gmra.mxu0 %v911
      %v1649 = vpop.f32.mrf.mxu0
      %v1650 = vadd.f32 %v1537, %v1649
      %1651 = vmatmul.f32.gmra.mxu0 %v912
      %v1652 = vpop.f32.mrf.mxu0
      %v1653 = vadd.f32 %v1540, %v1652
      %1654 = vmatmul.f32.gmra.mxu0 %v913
      %v1655 = vpop.f32.mrf.mxu0
      %v1656 = vadd.f32 %v1543, %v1655
      %1657 = vmatmul.f32.gmra.mxu0 %v914
      %v1658 = vpop.f32.mrf.mxu0
      %v1659 = vadd.f32 %v1546, %v1658
      %1660 = vmatmul.f32.gmra.mxu0 %v915
      %v1661 = vpop.f32.mrf.mxu0
      %v1662 = vadd.f32 %v1549, %v1661
      %1663 = vmatmul.f32.gmra.mxu0 %v916
      %v1664 = vpop.f32.mrf.mxu0
      %v1665 = vadd.f32 %v1552, %v1664
      %1666 = vmatmul.f32.gmra.mxu0 %v917
      %v1667 = vpop.f32.mrf.mxu0
      %v1668 = vadd.f32 %v1555, %v1667
      %1669 = vmatmul.f32.gmra.mxu0 %v918
      %v1670 = vpop.f32.mrf.mxu0
      %v1671 = vadd.f32 %v1558, %v1670
      %1672 = vmatmul.f32.gmra.mxu0 %v919
      %v1673 = vpop.f32.mrf.mxu0
      %v1674 = vadd.f32 %v1561, %v1673
      %1675 = vmatmul.f32.gmra.mxu0 %v920
      %v1676 = vpop.f32.mrf.mxu0
      %v1677 = vadd.f32 %v1564, %v1676
      %1678 = vmatmul.f32.gmra.mxu0 %v921
      %v1679 = vpop.f32.mrf.mxu0
      %v1680 = vadd.f32 %v1567, %v1679
      %1681 = vmatmul.f32.gmra.mxu0 %v922
      %v1682 = vpop.f32.mrf.mxu0
      %v1683 = vadd.f32 %v1570, %v1682
      %1684 = vmatmul.f32.gmra.mxu0 %v923
      %v1685 = vpop.f32.mrf.mxu0
      %v1686 = vadd.f32 %v1573, %v1685
      %1687 = vmatmul.f32.gmra.mxu0 %v924
      %v1688 = vpop.f32.mrf.mxu0
      %v1689 = vadd.f32 %v1576, %v1688
      %1690 = vmatmul.f32.gmra.mxu0 %v925
      %v1691 = vpop.f32.mrf.mxu0
      %v1692 = vadd.f32 %v1579, %v1691
      %1693 = vmatmul.f32.gmra.mxu0 %v926
      %v1694 = vpop.f32.mrf.mxu0
      %v1695 = vadd.f32 %v1582, %v1694
      %1696 = vmatmul.f32.gmra.mxu0 %v927
      %v1697 = vpop.f32.mrf.mxu0
      %v1698 = vadd.f32 %v1585, %v1697
      %1699 = vmatmul.f32.gmra.mxu0 %v928
      %v1700 = vpop.f32.mrf.mxu0
      %v1701 = vadd.f32 %v1588, %v1700
      %1702 = vmatmul.f32.gmra.mxu0 %v929
      %v1703 = vpop.f32.mrf.mxu0
      %v1704 = vadd.f32 %v1591, %v1703
      %1705 = vmatmul.f32.gmra.mxu0 %v930
      %v1706 = vpop.f32.mrf.mxu0
      %v1707 = vadd.f32 %v1594, %v1706
      %1708 = vmatmul.f32.gmra.mxu0 %v931
      %v1709 = vpop.f32.mrf.mxu0
      %v1710 = vadd.f32 %v1597, %v1709
      %1711 = vmatmul.f32.gmra.mxu0 %v932
      %v1712 = vpop.f32.mrf.mxu0
      %v1713 = vadd.f32 %v1600, %v1712
      %1714 = vmatmul.f32.gmra.mxu0 %v933
      %v1715 = vpop.f32.mrf.mxu0
      %v1716 = vadd.f32 %v1603, %v1715
      %1717 = vdwg.mxu0
      %1718 = vmatpush.msra.mxu0 %v1126
      %1719 = vmatpush.msra.mxu0 %v1125
      %1720 = vmatpush.msra.mxu0 %v1124
      %1721 = vmatpush.msra.mxu0 %v1123
      %1722 = vmatpush.msra.mxu0 %v1122
      %1723 = vmatpush.msra.mxu0 %v1121
      %1724 = vmatpush.msra.mxu0 %v1120
      %1725 = vmatpush.msra.mxu0 %v1119
      %1726 = vmatpush.msra.mxu0 %v1118
      %1727 = vmatpush.msra.mxu0 %v1117
      %1728 = vmatpush.msra.mxu0 %v1116
      %1729 = vmatpush.msra.mxu0 %v1115
      %1730 = vmatpush.msra.mxu0 %v1114
      %1731 = vmatpush.msra.mxu0 %v1113
      %1732 = vmatpush.msra.mxu0 %v1112
      %1733 = vmatpush.msra.mxu0 %v1111
      %1734 = vmatmul.f32.gmra.mxu0 %v758
      %v1735 = vpop.f32.mrf.mxu0
      %v1736 = vadd.f32 %v1623, %v1735
      %1737 = vmatmul.f32.gmra.mxu0 %v759
      %v1738 = vpop.f32.mrf.mxu0
      %v1739 = vadd.f32 %v1626, %v1738
      %1740 = vmatmul.f32.gmra.mxu0 %v715
      %v1741 = vpop.f32.mrf.mxu0
      %v1742 = vadd.f32 %v1629, %v1741
      %1743 = vmatmul.f32.gmra.mxu0 %v716
      %v1744 = vpop.f32.mrf.mxu0
      %v1745 = vadd.f32 %v1632, %v1744
      %1746 = vmatmul.f32.gmra.mxu0 %v717
      %v1747 = vpop.f32.mrf.mxu0
      %v1748 = vadd.f32 %v1635, %v1747
      %1749 = vmatmul.f32.gmra.mxu0 %v718
      %v1750 = vpop.f32.mrf.mxu0
      %v1751 = vadd.f32 %v1638, %v1750
      %1752 = vmatmul.f32.gmra.mxu0 %v719
      %v1753 = vpop.f32.mrf.mxu0
      %v1754 = vadd.f32 %v1641, %v1753
      %1755 = vmatmul.f32.gmra.mxu0 %v720
      %v1756 = vpop.f32.mrf.mxu0
      %v1757 = vadd.f32 %v1644, %v1756
      %1758 = vmatmul.f32.gmra.mxu0 %v721
      %v1759 = vpop.f32.mrf.mxu0
      %v1760 = vadd.f32 %v1647, %v1759
      %1761 = vmatmul.f32.gmra.mxu0 %v722
      %v1762 = vpop.f32.mrf.mxu0
      %v1763 = vadd.f32 %v1650, %v1762
      %1764 = vmatmul.f32.gmra.mxu0 %v723
      %v1765 = vpop.f32.mrf.mxu0
      %v1766 = vadd.f32 %v1653, %v1765
      %1767 = vmatmul.f32.gmra.mxu0 %v724
      %v1768 = vpop.f32.mrf.mxu0
      %v1769 = vadd.f32 %v1656, %v1768
      %1770 = vmatmul.f32.gmra.mxu0 %v725
      %v1771 = vpop.f32.mrf.mxu0
      %v1772 = vadd.f32 %v1659, %v1771
      %1773 = vmatmul.f32.gmra.mxu0 %v726
      %v1774 = vpop.f32.mrf.mxu0
      %v1775 = vadd.f32 %v1662, %v1774
      %1776 = vmatmul.f32.gmra.mxu0 %v727
      %v1777 = vpop.f32.mrf.mxu0
      %v1778 = vadd.f32 %v1665, %v1777
      %1779 = vmatmul.f32.gmra.mxu0 %v728
      %v1780 = vpop.f32.mrf.mxu0
      %v1781 = vadd.f32 %v1668, %v1780
      %1782 = vmatmul.f32.gmra.mxu0 %v729
      %v1783 = vpop.f32.mrf.mxu0
      %v1784 = vadd.f32 %v1671, %v1783
      %1785 = vmatmul.f32.gmra.mxu0 %v730
      %v1786 = vpop.f32.mrf.mxu0
      %v1787 = vadd.f32 %v1674, %v1786
      %1788 = vmatmul.f32.gmra.mxu0 %v731
      %v1789 = vpop.f32.mrf.mxu0
      %v1790 = vadd.f32 %v1677, %v1789
      %1791 = vmatmul.f32.gmra.mxu0 %v732
      %v1792 = vpop.f32.mrf.mxu0
      %v1793 = vadd.f32 %v1680, %v1792
      %1794 = vmatmul.f32.gmra.mxu0 %v733
      %v1795 = vpop.f32.mrf.mxu0
      %v1796 = vadd.f32 %v1683, %v1795
      %1797 = vmatmul.f32.gmra.mxu0 %v734
      %v1798 = vpop.f32.mrf.mxu0
      %v1799 = vadd.f32 %v1686, %v1798
      %1800 = vmatmul.f32.gmra.mxu0 %v735
      %v1801 = vpop.f32.mrf.mxu0
      %v1802 = vadd.f32 %v1689, %v1801
      %1803 = vmatmul.f32.gmra.mxu0 %v736
      %v1804 = vpop.f32.mrf.mxu0
      %v1805 = vadd.f32 %v1692, %v1804
      %1806 = vmatmul.f32.gmra.mxu0 %v737
      %v1807 = vpop.f32.mrf.mxu0
      %v1808 = vadd.f32 %v1695, %v1807
      %1809 = vmatmul.f32.gmra.mxu0 %v738
      %v1810 = vpop.f32.mrf.mxu0
      %v1811 = vadd.f32 %v1698, %v1810
      %1812 = vmatmul.f32.gmra.mxu0 %v739
      %v1813 = vpop.f32.mrf.mxu0
      %v1814 = vadd.f32 %v1701, %v1813
      %1815 = vmatmul.f32.gmra.mxu0 %v740
      %v1816 = vpop.f32.mrf.mxu0
      %v1817 = vadd.f32 %v1704, %v1816
      %1818 = vmatmul.f32.gmra.mxu0 %v741
      %v1819 = vpop.f32.mrf.mxu0
      %v1820 = vadd.f32 %v1707, %v1819
      %1821 = vmatmul.f32.gmra.mxu0 %v742
      %v1822 = vpop.f32.mrf.mxu0
      %v1823 = vadd.f32 %v1710, %v1822
      %1824 = vmatmul.f32.gmra.mxu0 %v743
      %v1825 = vpop.f32.mrf.mxu0
      %v1826 = vadd.f32 %v1713, %v1825
      %1827 = vmatmul.f32.gmra.mxu0 %v744
      %v1828 = vpop.f32.mrf.mxu0
      %v1829 = vadd.f32 %v1716, %v1828
      %1830 = vdwg.mxu0
      %1831 = vmatpush.msra.mxu0 %v1142
      %1832 = vmatpush.msra.mxu0 %v1141
      %1833 = vmatpush.msra.mxu0 %v1140
      %1834 = vmatpush.msra.mxu0 %v1139
      %1835 = vmatpush.msra.mxu0 %v1138
      %1836 = vmatpush.msra.mxu0 %v1137
      %1837 = vmatpush.msra.mxu0 %v1136
      %1838 = vmatpush.msra.mxu0 %v1135
      %1839 = vmatpush.msra.mxu0 %v1134
      %1840 = vmatpush.msra.mxu0 %v1133
      %1841 = vmatpush.msra.mxu0 %v1132
      %1842 = vmatpush.msra.mxu0 %v1131
      %1843 = vmatpush.msra.mxu0 %v1130
      %1844 = vmatpush.msra.mxu0 %v1129
      %1845 = vmatpush.msra.mxu0 %v1128
      %1846 = vmatpush.msra.mxu0 %v1127
      %1847 = vmatmul.f32.gmra.mxu0 %v1063
      %v1848 = vpop.f32.mrf.mxu0
      %v1849 = vadd.f32 %v1736, %v1848
      %1850 = vmatmul.f32.gmra.mxu0 %v1064
      %v1851 = vpop.f32.mrf.mxu0
      %v1852 = vadd.f32 %v1739, %v1851
      %1853 = vmatmul.f32.gmra.mxu0 %v1065
      %v1854 = vpop.f32.mrf.mxu0
      %v1855 = vadd.f32 %v1742, %v1854
      %1856 = vmatmul.f32.gmra.mxu0 %v1066
      %v1857 = vpop.f32.mrf.mxu0
      %v1858 = vadd.f32 %v1745, %v1857
      %1859 = vmatmul.f32.gmra.mxu0 %v1067
      %v1860 = vpop.f32.mrf.mxu0
      %v1861 = vadd.f32 %v1748, %v1860
      %1862 = vmatmul.f32.gmra.mxu0 %v1068
      %v1863 = vpop.f32.mrf.mxu0
      %v1864 = vadd.f32 %v1751, %v1863
      %1865 = vmatmul.f32.gmra.mxu0 %v1069
      %v1866 = vpop.f32.mrf.mxu0
      %v1867 = vadd.f32 %v1754, %v1866
      %1868 = vmatmul.f32.gmra.mxu0 %v1070
      %v1869 = vpop.f32.mrf.mxu0
      %v1870 = vadd.f32 %v1757, %v1869
      %1871 = vmatmul.f32.gmra.mxu0 %v1071
      %v1872 = vpop.f32.mrf.mxu0
      %v1873 = vadd.f32 %v1760, %v1872
      %1874 = vmatmul.f32.gmra.mxu0 %v1072
      %v1875 = vpop.f32.mrf.mxu0
      %v1876 = vadd.f32 %v1763, %v1875
      %1877 = vmatmul.f32.gmra.mxu0 %v1073
      %v1878 = vpop.f32.mrf.mxu0
      %v1879 = vadd.f32 %v1766, %v1878
      %1880 = vmatmul.f32.gmra.mxu0 %v1074
      %v1881 = vpop.f32.mrf.mxu0
      %v1882 = vadd.f32 %v1769, %v1881
      %1883 = vmatmul.f32.gmra.mxu0 %v1075
      %v1884 = vpop.f32.mrf.mxu0
      %v1885 = vadd.f32 %v1772, %v1884
      %1886 = vmatmul.f32.gmra.mxu0 %v1076
      %v1887 = vpop.f32.mrf.mxu0
      %v1888 = vadd.f32 %v1775, %v1887
      %1889 = vmatmul.f32.gmra.mxu0 %v1077
      %v1890 = vpop.f32.mrf.mxu0
      %v1891 = vadd.f32 %v1778, %v1890
      %1892 = vmatmul.f32.gmra.mxu0 %v1078
      %v1893 = vpop.f32.mrf.mxu0
      %v1894 = vadd.f32 %v1781, %v1893
      %1895 = vmatmul.f32.gmra.mxu0 %v1079
      %v1896 = vpop.f32.mrf.mxu0
      %v1897 = vadd.f32 %v1784, %v1896
      %1898 = vmatmul.f32.gmra.mxu0 %v1080
      %v1899 = vpop.f32.mrf.mxu0
      %v1900 = vadd.f32 %v1787, %v1899
      %1901 = vmatmul.f32.gmra.mxu0 %v1081
      %v1902 = vpop.f32.mrf.mxu0
      %v1903 = vadd.f32 %v1790, %v1902
      %1904 = vmatmul.f32.gmra.mxu0 %v1082
      %v1905 = vpop.f32.mrf.mxu0
      %v1906 = vadd.f32 %v1793, %v1905
      %1907 = vmatmul.f32.gmra.mxu0 %v1083
      %v1908 = vpop.f32.mrf.mxu0
      %v1909 = vadd.f32 %v1796, %v1908
      %1910 = vmatmul.f32.gmra.mxu0 %v1084
      %v1911 = vpop.f32.mrf.mxu0
      %v1912 = vadd.f32 %v1799, %v1911
      %1913 = vmatmul.f32.gmra.mxu0 %v1085
      %v1914 = vpop.f32.mrf.mxu0
      %v1915 = vadd.f32 %v1802, %v1914
      %1916 = vmatmul.f32.gmra.mxu0 %v1086
      %v1917 = vpop.f32.mrf.mxu0
      %v1918 = vadd.f32 %v1805, %v1917
      %1919 = vmatmul.f32.gmra.mxu0 %v1087
      %v1920 = vpop.f32.mrf.mxu0
      %v1921 = vadd.f32 %v1808, %v1920
      %1922 = vmatmul.f32.gmra.mxu0 %v1088
      %v1923 = vpop.f32.mrf.mxu0
      %v1924 = vadd.f32 %v1811, %v1923
      %1925 = vmatmul.f32.gmra.mxu0 %v1089
      %v1926 = vpop.f32.mrf.mxu0
      %v1927 = vadd.f32 %v1814, %v1926
      %1928 = vmatmul.f32.gmra.mxu0 %v1090
      %v1929 = vpop.f32.mrf.mxu0
      %v1930 = vadd.f32 %v1817, %v1929
      %1931 = vmatmul.f32.gmra.mxu0 %v1091
      %v1932 = vpop.f32.mrf.mxu0
      %v1933 = vadd.f32 %v1820, %v1932
      %1934 = vmatmul.f32.gmra.mxu0 %v1092
      %v1935 = vpop.f32.mrf.mxu0
      %v1936 = vadd.f32 %v1823, %v1935
      %1937 = vmatmul.f32.gmra.mxu0 %v1093
      %v1938 = vpop.f32.mrf.mxu0
      %v1939 = vadd.f32 %v1826, %v1938
      %1940 = vmatmul.f32.gmra.mxu0 %v1094
      %v1941 = vpop.f32.mrf.mxu0
      %v1942 = vadd.f32 %v1829, %v1941
      %1943 = vdwg.mxu0
      %v1944 = vrot.slane %v771, 7
      %v1945 = vrot.slane %v772, 7
      %v1946 = vsel %vm805, %v1944, %v1945
      %v1947 = vsel %vm805, %v1144, %v1944
      %v1948 = vsel %vm805, %v1945, %v777
      %v1949 = vsel %vm870, %v1948, 0.0
      %v1950 = vsel %vm871, %v832, 0.0
      %v1951 = vsel %vm872, %v831, 0.0
      %v1952 = vsel %vm873, %v830, 0.0
      %v1953 = vsel %vm874, %v829, 0.0
      %v1954 = vsel %vm875, %v828, 0.0
      %v1955 = vsel %vm876, %v827, 0.0
      %v1956 = vsel %vm877, %v826, 0.0
      %v1957 = vsel %vm878, %v825, 0.0
      %v1958 = vsel %vm879, %v824, 0.0
      %v1959 = vsel %vm880, %v823, 0.0
      %v1960 = vsel %vm881, %v822, 0.0
      %v1961 = vsel %vm882, %v821, 0.0
      %v1962 = vsel %vm883, %v820, 0.0
      %v1963 = vsel %vm884, %v819, 0.0
      %v1964 = vsel %vm885, %v818, 0.0
      %v1965 = vsel %vm886, %v817, 0.0
      %v1966 = vsel %vm887, %v816, 0.0
      %v1967 = vsel %vm888, %v815, 0.0
      %v1968 = vsel %vm889, %v814, 0.0
      %v1969 = vsel %vm890, %v813, 0.0
      %v1970 = vsel %vm891, %v812, 0.0
      %v1971 = vsel %vm892, %v811, 0.0
      %v1972 = vsel %vm893, %v810, 0.0
      %v1973 = vsel %vm894, %v809, 0.0
      %v1974 = vsel %vm895, %v808, 0.0
      %v1975 = vsel %vm896, %v807, 0.0
      %v1976 = vsel %vm897, %v806, 0.0
      %v1977 = vsel %vm898, %v1146, 0.0
      %v1978 = vsel %vm899, %v1145, 0.0
      %v1979 = vsel %vm900, %v1947, 0.0
      %v1980 = vsel %vm901, %v1946, 0.0
      %v1981 = vrot.slane %v771, 1
      %v1982 = vrot.slane %v772, 1
      %v1983 = vsel %vm966, %v1981, %v1982
      %v1984 = vsel %vm966, %v1181, %v1981
      %v1985 = vsel %vm966, %v1982, %v938
      %v1986 = vsel %vm1031, %v993, 0.0
      %v1987 = vsel %vm1032, %v992, 0.0
      %v1988 = vsel %vm1033, %v991, 0.0
      %v1989 = vsel %vm1034, %v990, 0.0
      %v1990 = vsel %vm1035, %v989, 0.0
      %v1991 = vsel %vm1036, %v988, 0.0
      %v1992 = vsel %vm1037, %v987, 0.0
      %v1993 = vsel %vm1038, %v986, 0.0
      %v1994 = vsel %vm1039, %v985, 0.0
      %v1995 = vsel %vm1040, %v984, 0.0
      %v1996 = vsel %vm1041, %v983, 0.0
      %v1997 = vsel %vm1042, %v982, 0.0
      %v1998 = vsel %vm1043, %v981, 0.0
      %v1999 = vsel %vm1044, %v980, 0.0
      %v2000 = vsel %vm1045, %v979, 0.0
      %v2001 = vsel %vm1046, %v978, 0.0
      %v2002 = vsel %vm1047, %v977, 0.0
      %v2003 = vsel %vm1048, %v976, 0.0
      %v2004 = vsel %vm1049, %v975, 0.0
      %v2005 = vsel %vm1050, %v974, 0.0
      %v2006 = vsel %vm1051, %v973, 0.0
      %v2007 = vsel %vm1052, %v972, 0.0
      %v2008 = vsel %vm1053, %v971, 0.0
      %v2009 = vsel %vm1054, %v970, 0.0
      %v2010 = vsel %vm1055, %v969, 0.0
      %v2011 = vsel %vm1056, %v968, 0.0
      %v2012 = vsel %vm1057, %v967, 0.0
      %v2013 = vsel %vm1058, %v1183, 0.0
      %v2014 = vsel %vm1059, %v1182, 0.0
      %v2015 = vsel %vm1060, %v1984, 0.0
      %v2016 = vsel %vm1061, %v1983, 0.0
      %v2017 = vsel %vm1062, %v1985, 0.0
      %s2018 = scalar_lea.vmem %s1, 768
      %v2019 = vld [vmem:[%s2018] sm:$0xff]
      %v2020 = vld [vmem:[%s2018 + $0x8] sm:$0xff]
      %v2021 = vld [vmem:[%s2018 + $0x10] sm:$0xff]
      %v2022 = vld [vmem:[%s2018 + $0x18] sm:$0xff]
      %v2023 = vld [vmem:[%s2018 + $0x20] sm:$0xff]
      %v2024 = vld [vmem:[%s2018 + $0x28] sm:$0xff]
      %v2025 = vld [vmem:[%s2018 + $0x30] sm:$0xff]
      %v2026 = vld [vmem:[%s2018 + $0x38] sm:$0xff]
      %v2027 = vld [vmem:[%s2018 + $0x40] sm:$0xff]
      %v2028 = vld [vmem:[%s2018 + $0x48] sm:$0xff]
      %v2029 = vld [vmem:[%s2018 + $0x50] sm:$0xff]
      %v2030 = vld [vmem:[%s2018 + $0x58] sm:$0xff]
      %v2031 = vld [vmem:[%s2018 + $0x60] sm:$0xff]
      %v2032 = vld [vmem:[%s2018 + $0x68] sm:$0xff]
      %v2033 = vld [vmem:[%s2018 + $0x70] sm:$0xff]
      %v2034 = vld [vmem:[%s2018 + $0x78] sm:$0xff]
      %v2035 = vld [vmem:[%s2018 + $0x80] sm:$0xff]
      %v2036 = vld [vmem:[%s2018 + $0x88] sm:$0xff]
      %v2037 = vld [vmem:[%s2018 + $0x90] sm:$0xff]
      %v2038 = vld [vmem:[%s2018 + $0x98] sm:$0xff]
      %v2039 = vld [vmem:[%s2018 + $0xa0] sm:$0xff]
      %v2040 = vld [vmem:[%s2018 + $0xa8] sm:$0xff]
      %v2041 = vld [vmem:[%s2018 + $0xb0] sm:$0xff]
      %v2042 = vld [vmem:[%s2018 + $0xb8] sm:$0xff]
      %v2043 = vld [vmem:[%s2018 + $0xc0] sm:$0xff]
      %v2044 = vld [vmem:[%s2018 + $0xc8] sm:$0xff]
      %v2045 = vld [vmem:[%s2018 + $0xd0] sm:$0xff]
      %v2046 = vld [vmem:[%s2018 + $0xd8] sm:$0xff]
      %v2047 = vld [vmem:[%s2018 + $0xe0] sm:$0xff]
      %v2048 = vld [vmem:[%s2018 + $0xe8] sm:$0xff]
      %v2049 = vld [vmem:[%s2018 + $0xf0] sm:$0xff]
      %v2050 = vld [vmem:[%s2018 + $0xf8] sm:$0xff]
      %v2051 = vld [vmem:[%s2018 + $0x100] sm:$0xff]
      %v2052 = vld [vmem:[%s2018 + $0x108] sm:$0xff]
      %v2053 = vld [vmem:[%s2018 + $0x110] sm:$0xff]
      %v2054 = vld [vmem:[%s2018 + $0x118] sm:$0xff]
      %v2055 = vld [vmem:[%s2018 + $0x120] sm:$0xff]
      %v2056 = vld [vmem:[%s2018 + $0x128] sm:$0xff]
      %v2057 = vld [vmem:[%s2018 + $0x130] sm:$0xff]
      %v2058 = vld [vmem:[%s2018 + $0x138] sm:$0xff]
      %v2059 = vld [vmem:[%s2018 + $0x140] sm:$0xff]
      %v2060 = vld [vmem:[%s2018 + $0x148] sm:$0xff]
      %v2061 = vld [vmem:[%s2018 + $0x150] sm:$0xff]
      %v2062 = vld [vmem:[%s2018 + $0x158] sm:$0xff]
      %v2063 = vld [vmem:[%s2018 + $0x160] sm:$0xff]
      %v2064 = vld [vmem:[%s2018 + $0x168] sm:$0xff]
      %v2065 = vld [vmem:[%s2018 + $0x170] sm:$0xff]
      %v2066 = vld [vmem:[%s2018 + $0x178] sm:$0xff]
      %2067 = vmatpush.msra.mxu0 %v2034
      %2068 = vmatpush.msra.mxu0 %v2033
      %2069 = vmatpush.msra.mxu0 %v2032
      %2070 = vmatpush.msra.mxu0 %v2031
      %2071 = vmatpush.msra.mxu0 %v2030
      %2072 = vmatpush.msra.mxu0 %v2029
      %2073 = vmatpush.msra.mxu0 %v2028
      %2074 = vmatpush.msra.mxu0 %v2027
      %2075 = vmatpush.msra.mxu0 %v2026
      %2076 = vmatpush.msra.mxu0 %v2025
      %2077 = vmatpush.msra.mxu0 %v2024
      %2078 = vmatpush.msra.mxu0 %v2023
      %2079 = vmatpush.msra.mxu0 %v2022
      %2080 = vmatpush.msra.mxu0 %v2021
      %2081 = vmatpush.msra.mxu0 %v2020
      %2082 = vmatpush.msra.mxu0 %v2019
      %2083 = vmatmul.f32.gmra.mxu0 %v1949
      %v2084 = vpop.f32.mrf.mxu0
      %v2085 = vadd.f32 0.0, %v2084
      %2086 = vmatmul.f32.gmra.mxu0 %v1950
      %v2087 = vpop.f32.mrf.mxu0
      %v2088 = vadd.f32 0.0, %v2087
      %2089 = vmatmul.f32.gmra.mxu0 %v1951
      %v2090 = vpop.f32.mrf.mxu0
      %v2091 = vadd.f32 0.0, %v2090
      %2092 = vmatmul.f32.gmra.mxu0 %v1952
      %v2093 = vpop.f32.mrf.mxu0
      %v2094 = vadd.f32 0.0, %v2093
      %2095 = vmatmul.f32.gmra.mxu0 %v1953
      %v2096 = vpop.f32.mrf.mxu0
      %v2097 = vadd.f32 0.0, %v2096
      %2098 = vmatmul.f32.gmra.mxu0 %v1954
      %v2099 = vpop.f32.mrf.mxu0
      %v2100 = vadd.f32 0.0, %v2099
      %2101 = vmatmul.f32.gmra.mxu0 %v1955
      %v2102 = vpop.f32.mrf.mxu0
      %v2103 = vadd.f32 0.0, %v2102
      %2104 = vmatmul.f32.gmra.mxu0 %v1956
      %v2105 = vpop.f32.mrf.mxu0
      %v2106 = vadd.f32 0.0, %v2105
      %2107 = vmatmul.f32.gmra.mxu0 %v1957
      %v2108 = vpop.f32.mrf.mxu0
      %v2109 = vadd.f32 0.0, %v2108
      %2110 = vmatmul.f32.gmra.mxu0 %v1958
      %v2111 = vpop.f32.mrf.mxu0
      %v2112 = vadd.f32 0.0, %v2111
      %2113 = vmatmul.f32.gmra.mxu0 %v1959
      %v2114 = vpop.f32.mrf.mxu0
      %v2115 = vadd.f32 0.0, %v2114
      %2116 = vmatmul.f32.gmra.mxu0 %v1960
      %v2117 = vpop.f32.mrf.mxu0
      %v2118 = vadd.f32 0.0, %v2117
      %2119 = vmatmul.f32.gmra.mxu0 %v1961
      %v2120 = vpop.f32.mrf.mxu0
      %v2121 = vadd.f32 0.0, %v2120
      %2122 = vmatmul.f32.gmra.mxu0 %v1962
      %v2123 = vpop.f32.mrf.mxu0
      %v2124 = vadd.f32 0.0, %v2123
      %2125 = vmatmul.f32.gmra.mxu0 %v1963
      %v2126 = vpop.f32.mrf.mxu0
      %v2127 = vadd.f32 0.0, %v2126
      %2128 = vmatmul.f32.gmra.mxu0 %v1964
      %v2129 = vpop.f32.mrf.mxu0
      %v2130 = vadd.f32 0.0, %v2129
      %2131 = vmatmul.f32.gmra.mxu0 %v1965
      %v2132 = vpop.f32.mrf.mxu0
      %v2133 = vadd.f32 0.0, %v2132
      %2134 = vmatmul.f32.gmra.mxu0 %v1966
      %v2135 = vpop.f32.mrf.mxu0
      %v2136 = vadd.f32 0.0, %v2135
      %2137 = vmatmul.f32.gmra.mxu0 %v1967
      %v2138 = vpop.f32.mrf.mxu0
      %v2139 = vadd.f32 0.0, %v2138
      %2140 = vmatmul.f32.gmra.mxu0 %v1968
      %v2141 = vpop.f32.mrf.mxu0
      %v2142 = vadd.f32 0.0, %v2141
      %2143 = vmatmul.f32.gmra.mxu0 %v1969
      %v2144 = vpop.f32.mrf.mxu0
      %v2145 = vadd.f32 0.0, %v2144
      %2146 = vmatmul.f32.gmra.mxu0 %v1970
      %v2147 = vpop.f32.mrf.mxu0
      %v2148 = vadd.f32 0.0, %v2147
      %2149 = vmatmul.f32.gmra.mxu0 %v1971
      %v2150 = vpop.f32.mrf.mxu0
      %v2151 = vadd.f32 0.0, %v2150
      %2152 = vmatmul.f32.gmra.mxu0 %v1972
      %v2153 = vpop.f32.mrf.mxu0
      %v2154 = vadd.f32 0.0, %v2153
      %2155 = vmatmul.f32.gmra.mxu0 %v1973
      %v2156 = vpop.f32.mrf.mxu0
      %v2157 = vadd.f32 0.0, %v2156
      %2158 = vmatmul.f32.gmra.mxu0 %v1974
      %v2159 = vpop.f32.mrf.mxu0
      %v2160 = vadd.f32 0.0, %v2159
      %2161 = vmatmul.f32.gmra.mxu0 %v1975
      %v2162 = vpop.f32.mrf.mxu0
      %v2163 = vadd.f32 0.0, %v2162
      %2164 = vmatmul.f32.gmra.mxu0 %v1976
      %v2165 = vpop.f32.mrf.mxu0
      %v2166 = vadd.f32 0.0, %v2165
      %2167 = vmatmul.f32.gmra.mxu0 %v1977
      %v2168 = vpop.f32.mrf.mxu0
      %v2169 = vadd.f32 0.0, %v2168
      %2170 = vmatmul.f32.gmra.mxu0 %v1978
      %v2171 = vpop.f32.mrf.mxu0
      %v2172 = vadd.f32 0.0, %v2171
      %2173 = vmatmul.f32.gmra.mxu0 %v1979
      %v2174 = vpop.f32.mrf.mxu0
      %v2175 = vadd.f32 0.0, %v2174
      %2176 = vmatmul.f32.gmra.mxu0 %v1980
      %v2177 = vpop.f32.mrf.mxu0
      %v2178 = vadd.f32 0.0, %v2177
      %2179 = vdwg.mxu0
      %2180 = vmatpush.msra.mxu0 %v2050
      %2181 = vmatpush.msra.mxu0 %v2049
      %2182 = vmatpush.msra.mxu0 %v2048
      %2183 = vmatpush.msra.mxu0 %v2047
      %2184 = vmatpush.msra.mxu0 %v2046
      %2185 = vmatpush.msra.mxu0 %v2045
      %2186 = vmatpush.msra.mxu0 %v2044
      %2187 = vmatpush.msra.mxu0 %v2043
      %2188 = vmatpush.msra.mxu0 %v2042
      %2189 = vmatpush.msra.mxu0 %v2041
      %2190 = vmatpush.msra.mxu0 %v2040
      %2191 = vmatpush.msra.mxu0 %v2039
      %2192 = vmatpush.msra.mxu0 %v2038
      %2193 = vmatpush.msra.mxu0 %v2037
      %2194 = vmatpush.msra.mxu0 %v2036
      %2195 = vmatpush.msra.mxu0 %v2035
      %2196 = vmatmul.f32.gmra.mxu0 %v717
      %v2197 = vpop.f32.mrf.mxu0
      %v2198 = vadd.f32 %v2085, %v2197
      %2199 = vmatmul.f32.gmra.mxu0 %v718
      %v2200 = vpop.f32.mrf.mxu0
      %v2201 = vadd.f32 %v2088, %v2200
      %2202 = vmatmul.f32.gmra.mxu0 %v719
      %v2203 = vpop.f32.mrf.mxu0
      %v2204 = vadd.f32 %v2091, %v2203
      %2205 = vmatmul.f32.gmra.mxu0 %v720
      %v2206 = vpop.f32.mrf.mxu0
      %v2207 = vadd.f32 %v2094, %v2206
      %2208 = vmatmul.f32.gmra.mxu0 %v721
      %v2209 = vpop.f32.mrf.mxu0
      %v2210 = vadd.f32 %v2097, %v2209
      %2211 = vmatmul.f32.gmra.mxu0 %v722
      %v2212 = vpop.f32.mrf.mxu0
      %v2213 = vadd.f32 %v2100, %v2212
      %2214 = vmatmul.f32.gmra.mxu0 %v723
      %v2215 = vpop.f32.mrf.mxu0
      %v2216 = vadd.f32 %v2103, %v2215
      %2217 = vmatmul.f32.gmra.mxu0 %v724
      %v2218 = vpop.f32.mrf.mxu0
      %v2219 = vadd.f32 %v2106, %v2218
      %2220 = vmatmul.f32.gmra.mxu0 %v725
      %v2221 = vpop.f32.mrf.mxu0
      %v2222 = vadd.f32 %v2109, %v2221
      %2223 = vmatmul.f32.gmra.mxu0 %v726
      %v2224 = vpop.f32.mrf.mxu0
      %v2225 = vadd.f32 %v2112, %v2224
      %2226 = vmatmul.f32.gmra.mxu0 %v727
      %v2227 = vpop.f32.mrf.mxu0
      %v2228 = vadd.f32 %v2115, %v2227
      %2229 = vmatmul.f32.gmra.mxu0 %v728
      %v2230 = vpop.f32.mrf.mxu0
      %v2231 = vadd.f32 %v2118, %v2230
      %2232 = vmatmul.f32.gmra.mxu0 %v729
      %v2233 = vpop.f32.mrf.mxu0
      %v2234 = vadd.f32 %v2121, %v2233
      %2235 = vmatmul.f32.gmra.mxu0 %v730
      %v2236 = vpop.f32.mrf.mxu0
      %v2237 = vadd.f32 %v2124, %v2236
      %2238 = vmatmul.f32.gmra.mxu0 %v731
      %v2239 = vpop.f32.mrf.mxu0
      %v2240 = vadd.f32 %v2127, %v2239
      %2241 = vmatmul.f32.gmra.mxu0 %v732
      %v2242 = vpop.f32.mrf.mxu0
      %v2243 = vadd.f32 %v2130, %v2242
      %2244 = vmatmul.f32.gmra.mxu0 %v733
      %v2245 = vpop.f32.mrf.mxu0
      %v2246 = vadd.f32 %v2133, %v2245
      %2247 = vmatmul.f32.gmra.mxu0 %v734
      %v2248 = vpop.f32.mrf.mxu0
      %v2249 = vadd.f32 %v2136, %v2248
      %2250 = vmatmul.f32.gmra.mxu0 %v735
      %v2251 = vpop.f32.mrf.mxu0
      %v2252 = vadd.f32 %v2139, %v2251
      %2253 = vmatmul.f32.gmra.mxu0 %v736
      %v2254 = vpop.f32.mrf.mxu0
      %v2255 = vadd.f32 %v2142, %v2254
      %2256 = vmatmul.f32.gmra.mxu0 %v737
      %v2257 = vpop.f32.mrf.mxu0
      %v2258 = vadd.f32 %v2145, %v2257
      %2259 = vmatmul.f32.gmra.mxu0 %v738
      %v2260 = vpop.f32.mrf.mxu0
      %v2261 = vadd.f32 %v2148, %v2260
      %2262 = vmatmul.f32.gmra.mxu0 %v739
      %v2263 = vpop.f32.mrf.mxu0
      %v2264 = vadd.f32 %v2151, %v2263
      %2265 = vmatmul.f32.gmra.mxu0 %v740
      %v2266 = vpop.f32.mrf.mxu0
      %v2267 = vadd.f32 %v2154, %v2266
      %2268 = vmatmul.f32.gmra.mxu0 %v741
      %v2269 = vpop.f32.mrf.mxu0
      %v2270 = vadd.f32 %v2157, %v2269
      %2271 = vmatmul.f32.gmra.mxu0 %v742
      %v2272 = vpop.f32.mrf.mxu0
      %v2273 = vadd.f32 %v2160, %v2272
      %2274 = vmatmul.f32.gmra.mxu0 %v743
      %v2275 = vpop.f32.mrf.mxu0
      %v2276 = vadd.f32 %v2163, %v2275
      %2277 = vmatmul.f32.gmra.mxu0 %v744
      %v2278 = vpop.f32.mrf.mxu0
      %v2279 = vadd.f32 %v2166, %v2278
      %2280 = vmatmul.f32.gmra.mxu0 %v745
      %v2281 = vpop.f32.mrf.mxu0
      %v2282 = vadd.f32 %v2169, %v2281
      %2283 = vmatmul.f32.gmra.mxu0 %v746
      %v2284 = vpop.f32.mrf.mxu0
      %v2285 = vadd.f32 %v2172, %v2284
      %2286 = vmatmul.f32.gmra.mxu0 %v771
      %v2287 = vpop.f32.mrf.mxu0
      %v2288 = vadd.f32 %v2175, %v2287
      %2289 = vmatmul.f32.gmra.mxu0 %v772
      %v2290 = vpop.f32.mrf.mxu0
      %v2291 = vadd.f32 %v2178, %v2290
      %2292 = vdwg.mxu0
      %2293 = vmatpush.msra.mxu0 %v2066
      %2294 = vmatpush.msra.mxu0 %v2065
      %2295 = vmatpush.msra.mxu0 %v2064
      %2296 = vmatpush.msra.mxu0 %v2063
      %2297 = vmatpush.msra.mxu0 %v2062
      %2298 = vmatpush.msra.mxu0 %v2061
      %2299 = vmatpush.msra.mxu0 %v2060
      %2300 = vmatpush.msra.mxu0 %v2059
      %2301 = vmatpush.msra.mxu0 %v2058
      %2302 = vmatpush.msra.mxu0 %v2057
      %2303 = vmatpush.msra.mxu0 %v2056
      %2304 = vmatpush.msra.mxu0 %v2055
      %2305 = vmatpush.msra.mxu0 %v2054
      %2306 = vmatpush.msra.mxu0 %v2053
      %2307 = vmatpush.msra.mxu0 %v2052
      %2308 = vmatpush.msra.mxu0 %v2051
      %2309 = vmatmul.f32.gmra.mxu0 %v1986
      %v2310 = vpop.f32.mrf.mxu0
      %v2311 = vadd.f32 %v2198, %v2310
      %2312 = vmatmul.f32.gmra.mxu0 %v1987
      %v2313 = vpop.f32.mrf.mxu0
      %v2314 = vadd.f32 %v2201, %v2313
      %2315 = vmatmul.f32.gmra.mxu0 %v1988
      %v2316 = vpop.f32.mrf.mxu0
      %v2317 = vadd.f32 %v2204, %v2316
      %2318 = vmatmul.f32.gmra.mxu0 %v1989
      %v2319 = vpop.f32.mrf.mxu0
      %v2320 = vadd.f32 %v2207, %v2319
      %2321 = vmatmul.f32.gmra.mxu0 %v1990
      %v2322 = vpop.f32.mrf.mxu0
      %v2323 = vadd.f32 %v2210, %v2322
      %2324 = vmatmul.f32.gmra.mxu0 %v1991
      %v2325 = vpop.f32.mrf.mxu0
      %v2326 = vadd.f32 %v2213, %v2325
      %2327 = vmatmul.f32.gmra.mxu0 %v1992
      %v2328 = vpop.f32.mrf.mxu0
      %v2329 = vadd.f32 %v2216, %v2328
      %2330 = vmatmul.f32.gmra.mxu0 %v1993
      %v2331 = vpop.f32.mrf.mxu0
      %v2332 = vadd.f32 %v2219, %v2331
      %2333 = vmatmul.f32.gmra.mxu0 %v1994
      %v2334 = vpop.f32.mrf.mxu0
      %v2335 = vadd.f32 %v2222, %v2334
      %2336 = vmatmul.f32.gmra.mxu0 %v1995
      %v2337 = vpop.f32.mrf.mxu0
      %v2338 = vadd.f32 %v2225, %v2337
      %2339 = vmatmul.f32.gmra.mxu0 %v1996
      %v2340 = vpop.f32.mrf.mxu0
      %v2341 = vadd.f32 %v2228, %v2340
      %2342 = vmatmul.f32.gmra.mxu0 %v1997
      %v2343 = vpop.f32.mrf.mxu0
      %v2344 = vadd.f32 %v2231, %v2343
      %2345 = vmatmul.f32.gmra.mxu0 %v1998
      %v2346 = vpop.f32.mrf.mxu0
      %v2347 = vadd.f32 %v2234, %v2346
      %2348 = vmatmul.f32.gmra.mxu0 %v1999
      %v2349 = vpop.f32.mrf.mxu0
      %v2350 = vadd.f32 %v2237, %v2349
      %2351 = vmatmul.f32.gmra.mxu0 %v2000
      %v2352 = vpop.f32.mrf.mxu0
      %v2353 = vadd.f32 %v2240, %v2352
      %2354 = vmatmul.f32.gmra.mxu0 %v2001
      %v2355 = vpop.f32.mrf.mxu0
      %v2356 = vadd.f32 %v2243, %v2355
      %2357 = vmatmul.f32.gmra.mxu0 %v2002
      %v2358 = vpop.f32.mrf.mxu0
      %v2359 = vadd.f32 %v2246, %v2358
      %2360 = vmatmul.f32.gmra.mxu0 %v2003
      %v2361 = vpop.f32.mrf.mxu0
      %v2362 = vadd.f32 %v2249, %v2361
      %2363 = vmatmul.f32.gmra.mxu0 %v2004
      %v2364 = vpop.f32.mrf.mxu0
      %v2365 = vadd.f32 %v2252, %v2364
      %2366 = vmatmul.f32.gmra.mxu0 %v2005
      %v2367 = vpop.f32.mrf.mxu0
      %v2368 = vadd.f32 %v2255, %v2367
      %2369 = vmatmul.f32.gmra.mxu0 %v2006
      %v2370 = vpop.f32.mrf.mxu0
      %v2371 = vadd.f32 %v2258, %v2370
      %2372 = vmatmul.f32.gmra.mxu0 %v2007
      %v2373 = vpop.f32.mrf.mxu0
      %v2374 = vadd.f32 %v2261, %v2373
      %2375 = vmatmul.f32.gmra.mxu0 %v2008
      %v2376 = vpop.f32.mrf.mxu0
      %v2377 = vadd.f32 %v2264, %v2376
      %2378 = vmatmul.f32.gmra.mxu0 %v2009
      %v2379 = vpop.f32.mrf.mxu0
      %v2380 = vadd.f32 %v2267, %v2379
      %2381 = vmatmul.f32.gmra.mxu0 %v2010
      %v2382 = vpop.f32.mrf.mxu0
      %v2383 = vadd.f32 %v2270, %v2382
      %2384 = vmatmul.f32.gmra.mxu0 %v2011
      %v2385 = vpop.f32.mrf.mxu0
      %v2386 = vadd.f32 %v2273, %v2385
      %2387 = vmatmul.f32.gmra.mxu0 %v2012
      %v2388 = vpop.f32.mrf.mxu0
      %v2389 = vadd.f32 %v2276, %v2388
      %2390 = vmatmul.f32.gmra.mxu0 %v2013
      %v2391 = vpop.f32.mrf.mxu0
      %v2392 = vadd.f32 %v2279, %v2391
      %2393 = vmatmul.f32.gmra.mxu0 %v2014
      %v2394 = vpop.f32.mrf.mxu0
      %v2395 = vadd.f32 %v2282, %v2394
      %2396 = vmatmul.f32.gmra.mxu0 %v2015
      %v2397 = vpop.f32.mrf.mxu0
      %v2398 = vadd.f32 %v2285, %v2397
      %2399 = vmatmul.f32.gmra.mxu0 %v2016
      %v2400 = vpop.f32.mrf.mxu0
      %v2401 = vadd.f32 %v2288, %v2400
      %2402 = vmatmul.f32.gmra.mxu0 %v2017
      %v2403 = vpop.f32.mrf.mxu0
      %v2404 = vadd.f32 %v2291, %v2403
      %2405 = vdwg.mxu0
      %v2406 = vadd.f32 %v1849, %v2311
      %v2407 = vadd.f32 %v1852, %v2314
      %v2408 = vadd.f32 %v1855, %v2317
      %v2409 = vadd.f32 %v1858, %v2320
      %v2410 = vadd.f32 %v1861, %v2323
      %v2411 = vadd.f32 %v1864, %v2326
      %v2412 = vadd.f32 %v1867, %v2329
      %v2413 = vadd.f32 %v1870, %v2332
      %v2414 = vadd.f32 %v1873, %v2335
      %v2415 = vadd.f32 %v1876, %v2338
      %v2416 = vadd.f32 %v1879, %v2341
      %v2417 = vadd.f32 %v1882, %v2344
      %v2418 = vadd.f32 %v1885, %v2347
      %v2419 = vadd.f32 %v1888, %v2350
      %v2420 = vadd.f32 %v1891, %v2353
      %v2421 = vadd.f32 %v1894, %v2356
      %v2422 = vadd.f32 %v1897, %v2359
      %v2423 = vadd.f32 %v1900, %v2362
      %v2424 = vadd.f32 %v1903, %v2365
      %v2425 = vadd.f32 %v1906, %v2368
      %v2426 = vadd.f32 %v1909, %v2371
      %v2427 = vadd.f32 %v1912, %v2374
      %v2428 = vadd.f32 %v1915, %v2377
      %v2429 = vadd.f32 %v1918, %v2380
      %v2430 = vadd.f32 %v1921, %v2383
      %v2431 = vadd.f32 %v1924, %v2386
      %v2432 = vadd.f32 %v1927, %v2389
      %v2433 = vadd.f32 %v1930, %v2392
      %v2434 = vadd.f32 %v1933, %v2395
      %v2435 = vadd.f32 %v1936, %v2398
      %v2436 = vadd.f32 %v1939, %v2401
      %v2437 = vadd.f32 %v1942, %v2404
      %v2439 = vperm.slane %v230, 0
      %v2441 = vadd.f32 %v2406, %v2439
      %v2442 = vadd.f32 %v2407, %v2439
      %v2443 = vadd.f32 %v2408, %v2439
      %v2444 = vadd.f32 %v2409, %v2439
      %v2445 = vadd.f32 %v2410, %v2439
      %v2446 = vadd.f32 %v2411, %v2439
      %v2447 = vadd.f32 %v2412, %v2439
      %v2448 = vadd.f32 %v2413, %v2439
      %v2449 = vadd.f32 %v2414, %v2439
      %v2450 = vadd.f32 %v2415, %v2439
      %v2451 = vadd.f32 %v2416, %v2439
      %v2452 = vadd.f32 %v2417, %v2439
      %v2453 = vadd.f32 %v2418, %v2439
      %v2454 = vadd.f32 %v2419, %v2439
      %v2455 = vadd.f32 %v2420, %v2439
      %v2456 = vadd.f32 %v2421, %v2439
      %v2457 = vadd.f32 %v2422, %v2439
      %v2458 = vadd.f32 %v2423, %v2439
      %v2459 = vadd.f32 %v2424, %v2439
      %v2460 = vadd.f32 %v2425, %v2439
      %v2461 = vadd.f32 %v2426, %v2439
      %v2462 = vadd.f32 %v2427, %v2439
      %v2463 = vadd.f32 %v2428, %v2439
      %v2464 = vadd.f32 %v2429, %v2439
      %v2465 = vadd.f32 %v2430, %v2439
      %v2466 = vadd.f32 %v2431, %v2439
      %v2467 = vadd.f32 %v2432, %v2439
      %v2468 = vadd.f32 %v2433, %v2439
      %v2469 = vadd.f32 %v2434, %v2439
      %v2470 = vadd.f32 %v2435, %v2439
      %v2471 = vadd.f32 %v2436, %v2439
      %v2472 = vadd.f32 %v2437, %v2439
      %v2473 = vmax.f32 %v2441, 0.0
      %v2474 = vmax.f32 %v2442, 0.0
      %v2475 = vmax.f32 %v2443, 0.0
      %v2476 = vmax.f32 %v2444, 0.0
      %v2477 = vmax.f32 %v2445, 0.0
      %v2478 = vmax.f32 %v2446, 0.0
      %v2479 = vmax.f32 %v2447, 0.0
      %v2480 = vmax.f32 %v2448, 0.0
      %v2481 = vmax.f32 %v2449, 0.0
      %v2482 = vmax.f32 %v2450, 0.0
      %v2483 = vmax.f32 %v2451, 0.0
      %v2484 = vmax.f32 %v2452, 0.0
      %v2485 = vmax.f32 %v2453, 0.0
      %v2486 = vmax.f32 %v2454, 0.0
      %v2487 = vmax.f32 %v2455, 0.0
      %v2488 = vmax.f32 %v2456, 0.0
      %v2489 = vmax.f32 %v2457, 0.0
      %v2490 = vmax.f32 %v2458, 0.0
      %v2491 = vmax.f32 %v2459, 0.0
      %v2492 = vmax.f32 %v2460, 0.0
      %v2493 = vmax.f32 %v2461, 0.0
      %v2494 = vmax.f32 %v2462, 0.0
      %v2495 = vmax.f32 %v2463, 0.0
      %v2496 = vmax.f32 %v2464, 0.0
      %v2497 = vmax.f32 %v2465, 0.0
      %v2498 = vmax.f32 %v2466, 0.0
      %v2499 = vmax.f32 %v2467, 0.0
      %v2500 = vmax.f32 %v2468, 0.0
      %v2501 = vmax.f32 %v2469, 0.0
      %v2502 = vmax.f32 %v2470, 0.0
      %v2503 = vmax.f32 %v2471, 0.0
      %v2504 = vmax.f32 %v2472, 0.0
      %s2505 = sadd.s32 0, 1
      %s2506 = smul.u32 %s2505, 16
      %s2507 = scalar_lea.vmem [#allocation2], %s2506
      %2508 = vst [vmem:[%s2507] sm:$0xff] %v2473
      %2509 = vst [vmem:[%s2507 + $0x8] sm:$0xff] %v2474
      %2510 = vst [vmem:[%s2507 + $0x10] sm:$0xff] %v2475
      %2511 = vst [vmem:[%s2507 + $0x18] sm:$0xff] %v2476
      %2512 = vst [vmem:[%s2507 + $0x20] sm:$0xff] %v2477
      %2513 = vst [vmem:[%s2507 + $0x28] sm:$0xff] %v2478
      %2514 = vst [vmem:[%s2507 + $0x30] sm:$0xff] %v2479
      %2515 = vst [vmem:[%s2507 + $0x38] sm:$0xff] %v2480
      %2516 = vst [vmem:[%s2507 + $0x40] sm:$0xff] %v2481
      %2517 = vst [vmem:[%s2507 + $0x48] sm:$0xff] %v2482
      %2518 = vst [vmem:[%s2507 + $0x50] sm:$0xff] %v2483
      %2519 = vst [vmem:[%s2507 + $0x58] sm:$0xff] %v2484
      %2520 = vst [vmem:[%s2507 + $0x60] sm:$0xff] %v2485
      %2521 = vst [vmem:[%s2507 + $0x68] sm:$0xff] %v2486
      %2522 = vst [vmem:[%s2507 + $0x70] sm:$0xff] %v2487
      %2523 = vst [vmem:[%s2507 + $0x78] sm:$0xff] %v2488
      %2524 = vst [vmem:[%s2507 + $0x80] sm:$0xff] %v2489
      %2525 = vst [vmem:[%s2507 + $0x88] sm:$0xff] %v2490
      %2526 = vst [vmem:[%s2507 + $0x90] sm:$0xff] %v2491
      %2527 = vst [vmem:[%s2507 + $0x98] sm:$0xff] %v2492
      %2528 = vst [vmem:[%s2507 + $0xa0] sm:$0xff] %v2493
      %2529 = vst [vmem:[%s2507 + $0xa8] sm:$0xff] %v2494
      %2530 = vst [vmem:[%s2507 + $0xb0] sm:$0xff] %v2495
      %2531 = vst [vmem:[%s2507 + $0xb8] sm:$0xff] %v2496
      %2532 = vst [vmem:[%s2507 + $0xc0] sm:$0xff] %v2497
      %2533 = vst [vmem:[%s2507 + $0xc8] sm:$0xff] %v2498
      %2534 = vst [vmem:[%s2507 + $0xd0] sm:$0xff] %v2499
      %2535 = vst [vmem:[%s2507 + $0xd8] sm:$0xff] %v2500
      %2536 = vst [vmem:[%s2507 + $0xe0] sm:$0xff] %v2501
      %2537 = vst [vmem:[%s2507 + $0xe8] sm:$0xff] %v2502
      %2538 = vst [vmem:[%s2507 + $0xf0] sm:$0xff] %v2503
      %2539 = vst [vmem:[%s2507 + $0xf8] sm:$0xff] %v2504
      %s2540 = scalar_lea.vmem [#allocation2], %s713
      %v2541 = vld [vmem:[%s2540] sm:$0xff]
      %v2542 = vld [vmem:[%s2540 + $0x8] sm:$0xff]
      %v2543 = vld [vmem:[%s2540 + $0x10] sm:$0xff]
      %v2544 = vld [vmem:[%s2540 + $0x18] sm:$0xff]
      %v2545 = vld [vmem:[%s2540 + $0x20] sm:$0xff]
      %v2546 = vld [vmem:[%s2540 + $0x28] sm:$0xff]
      %v2547 = vld [vmem:[%s2540 + $0x30] sm:$0xff]
      %v2548 = vld [vmem:[%s2540 + $0x38] sm:$0xff]
      %v2549 = vld [vmem:[%s2540 + $0x40] sm:$0xff]
      %v2550 = vld [vmem:[%s2540 + $0x48] sm:$0xff]
      %v2551 = vld [vmem:[%s2540 + $0x50] sm:$0xff]
      %v2552 = vld [vmem:[%s2540 + $0x58] sm:$0xff]
      %v2553 = vld [vmem:[%s2540 + $0x60] sm:$0xff]
      %v2554 = vld [vmem:[%s2540 + $0x68] sm:$0xff]
      %v2555 = vld [vmem:[%s2540 + $0x70] sm:$0xff]
      %v2556 = vld [vmem:[%s2540 + $0x78] sm:$0xff]
      %v2557 = vld [vmem:[%s2540 + $0x80] sm:$0xff]
      %v2558 = vld [vmem:[%s2540 + $0x88] sm:$0xff]
      %v2559 = vld [vmem:[%s2540 + $0x90] sm:$0xff]
      %v2560 = vld [vmem:[%s2540 + $0x98] sm:$0xff]
      %v2561 = vld [vmem:[%s2540 + $0xa0] sm:$0xff]
      %v2562 = vld [vmem:[%s2540 + $0xa8] sm:$0xff]
      %v2563 = vld [vmem:[%s2540 + $0xb0] sm:$0xff]
      %v2564 = vld [vmem:[%s2540 + $0xb8] sm:$0xff]
      %v2565 = vld [vmem:[%s2540 + $0xc0] sm:$0xff]
      %v2566 = vld [vmem:[%s2540 + $0xc8] sm:$0xff]
      %v2567 = vld [vmem:[%s2540 + $0xd0] sm:$0xff]
      %v2568 = vld [vmem:[%s2540 + $0xd8] sm:$0xff]
      %v2569 = vld [vmem:[%s2540 + $0xe0] sm:$0xff]
      %v2570 = vld [vmem:[%s2540 + $0xe8] sm:$0xff]
      %v2571 = vld [vmem:[%s2540 + $0xf0] sm:$0xff]
      %v2572 = vld [vmem:[%s2540 + $0xf8] sm:$0xff]
      %v2573 = vld [vmem:[%s2540 + $0x100] sm:$0xff]
      %v2574 = vld [vmem:[%s2540 + $0x108] sm:$0xff]
      %v2575 = vld [vmem:[%s2540 + $0x110] sm:$0xff]
      %v2576 = vld [vmem:[%s2540 + $0x118] sm:$0xff]
      %v2577 = vrot.slane %v2541, 7
      %v2578 = vrot.slane %v2542, 7
      %v2579 = vrot.slane %v2543, 7
      %v2580 = vrot.slane %v2544, 7
      %v2581 = vrot.slane %v2545, 7
      %v2582 = vrot.slane %v2546, 7
      %v2583 = vrot.slane %v2547, 7
      %v2584 = vrot.slane %v2548, 7
      %v2585 = vrot.slane %v2549, 7
      %v2586 = vrot.slane %v2550, 7
      %v2587 = vrot.slane %v2551, 7
      %v2588 = vrot.slane %v2552, 7
      %v2589 = vrot.slane %v2553, 7
      %v2590 = vrot.slane %v2554, 7
      %v2591 = vrot.slane %v2555, 7
      %v2592 = vrot.slane %v2556, 7
      %v2593 = vrot.slane %v2557, 7
      %v2594 = vrot.slane %v2558, 7
      %v2595 = vrot.slane %v2559, 7
      %v2596 = vrot.slane %v2560, 7
      %v2597 = vrot.slane %v2561, 7
      %v2598 = vrot.slane %v2562, 7
      %v2599 = vrot.slane %v2563, 7
      %v2600 = vrot.slane %v2564, 7
      %v2601 = vrot.slane %v2565, 7
      %v2602 = vrot.slane %v2566, 7
      %v2603 = vrot.slane %v2567, 7
      %v2604 = vrot.slane %v2568, 7
      %v2605 = vrot.slane %v2569, 7
      %v2606 = vrot.slane %v2570, 7
      %v2607 = vrot.slane %v2571, 7
      %v2608 = vrot.slane %v2572, 7
      %v2609 = vsel %vm805, %v2607, %v2608
      %v2610 = vsel %vm805, %v2606, %v2607
      %v2611 = vsel %vm805, %v2605, %v2606
      %v2612 = vsel %vm805, %v2604, %v2605
      %v2613 = vsel %vm805, %v2603, %v2604
      %v2614 = vsel %vm805, %v2602, %v2603
      %v2615 = vsel %vm805, %v2601, %v2602
      %v2616 = vsel %vm805, %v2600, %v2601
      %v2617 = vsel %vm805, %v2599, %v2600
      %v2618 = vsel %vm805, %v2598, %v2599
      %v2619 = vsel %vm805, %v2597, %v2598
      %v2620 = vsel %vm805, %v2596, %v2597
      %v2621 = vsel %vm805, %v2595, %v2596
      %v2622 = vsel %vm805, %v2594, %v2595
      %v2623 = vsel %vm805, %v2593, %v2594
      %v2624 = vsel %vm805, %v2592, %v2593
      %v2625 = vsel %vm805, %v2591, %v2592
      %v2626 = vsel %vm805, %v2590, %v2591
      %v2627 = vsel %vm805, %v2589, %v2590
      %v2628 = vsel %vm805, %v2588, %v2589
      %v2629 = vsel %vm805, %v2587, %v2588
      %v2630 = vsel %vm805, %v2586, %v2587
      %v2631 = vsel %vm805, %v2585, %v2586
      %v2632 = vsel %vm805, %v2584, %v2585
      %v2633 = vsel %vm805, %v2583, %v2584
      %v2634 = vsel %vm805, %v2582, %v2583
      %v2635 = vsel %vm805, %v2581, %v2582
      %v2636 = vsel %vm805, %v2580, %v2581
      %v2637 = vsel %vm805, %v2579, %v2580
      %v2638 = vsel %vm805, %v2578, %v2579
      %v2639 = vsel %vm805, %v2577, %v2578
      %v2640 = vsel %vm805, %v2608, %v2577
      %v2641 = vsel %vm870, %v2640, 0.0
      %v2642 = vsel %vm871, %v2639, 0.0
      %v2643 = vsel %vm872, %v2638, 0.0
      %v2644 = vsel %vm873, %v2637, 0.0
      %v2645 = vsel %vm874, %v2636, 0.0
      %v2646 = vsel %vm875, %v2635, 0.0
      %v2647 = vsel %vm876, %v2634, 0.0
      %v2648 = vsel %vm877, %v2633, 0.0
      %v2649 = vsel %vm878, %v2632, 0.0
      %v2650 = vsel %vm879, %v2631, 0.0
      %v2651 = vsel %vm880, %v2630, 0.0
      %v2652 = vsel %vm881, %v2629, 0.0
      %v2653 = vsel %vm882, %v2628, 0.0
      %v2654 = vsel %vm883, %v2627, 0.0
      %v2655 = vsel %vm884, %v2626, 0.0
      %v2656 = vsel %vm885, %v2625, 0.0
      %v2657 = vsel %vm886, %v2624, 0.0
      %v2658 = vsel %vm887, %v2623, 0.0
      %v2659 = vsel %vm888, %v2622, 0.0
      %v2660 = vsel %vm889, %v2621, 0.0
      %v2661 = vsel %vm890, %v2620, 0.0
      %v2662 = vsel %vm891, %v2619, 0.0
      %v2663 = vsel %vm892, %v2618, 0.0
      %v2664 = vsel %vm893, %v2617, 0.0
      %v2665 = vsel %vm894, %v2616, 0.0
      %v2666 = vsel %vm895, %v2615, 0.0
      %v2667 = vsel %vm896, %v2614, 0.0
      %v2668 = vsel %vm897, %v2613, 0.0
      %v2669 = vsel %vm898, %v2612, 0.0
      %v2670 = vsel %vm899, %v2611, 0.0
      %v2671 = vsel %vm900, %v2610, 0.0
      %v2672 = vsel %vm901, %v2609, 0.0
      %v2673 = vrot.slane %v2541, 1
      %v2674 = vrot.slane %v2542, 1
      %v2675 = vrot.slane %v2543, 1
      %v2676 = vrot.slane %v2544, 1
      %v2677 = vrot.slane %v2545, 1
      %v2678 = vrot.slane %v2546, 1
      %v2679 = vrot.slane %v2547, 1
      %v2680 = vrot.slane %v2548, 1
      %v2681 = vrot.slane %v2549, 1
      %v2682 = vrot.slane %v2550, 1
      %v2683 = vrot.slane %v2551, 1
      %v2684 = vrot.slane %v2552, 1
      %v2685 = vrot.slane %v2553, 1
      %v2686 = vrot.slane %v2554, 1
      %v2687 = vrot.slane %v2555, 1
      %v2688 = vrot.slane %v2556, 1
      %v2689 = vrot.slane %v2557, 1
      %v2690 = vrot.slane %v2558, 1
      %v2691 = vrot.slane %v2559, 1
      %v2692 = vrot.slane %v2560, 1
      %v2693 = vrot.slane %v2561, 1
      %v2694 = vrot.slane %v2562, 1
      %v2695 = vrot.slane %v2563, 1
      %v2696 = vrot.slane %v2564, 1
      %v2697 = vrot.slane %v2565, 1
      %v2698 = vrot.slane %v2566, 1
      %v2699 = vrot.slane %v2567, 1
      %v2700 = vrot.slane %v2568, 1
      %v2701 = vrot.slane %v2569, 1
      %v2702 = vrot.slane %v2570, 1
      %v2703 = vrot.slane %v2571, 1
      %v2704 = vrot.slane %v2572, 1
      %v2705 = vsel %vm966, %v2703, %v2704
      %v2706 = vsel %vm966, %v2702, %v2703
      %v2707 = vsel %vm966, %v2701, %v2702
      %v2708 = vsel %vm966, %v2700, %v2701
      %v2709 = vsel %vm966, %v2699, %v2700
      %v2710 = vsel %vm966, %v2698, %v2699
      %v2711 = vsel %vm966, %v2697, %v2698
      %v2712 = vsel %vm966, %v2696, %v2697
      %v2713 = vsel %vm966, %v2695, %v2696
      %v2714 = vsel %vm966, %v2694, %v2695
      %v2715 = vsel %vm966, %v2693, %v2694
      %v2716 = vsel %vm966, %v2692, %v2693
      %v2717 = vsel %vm966, %v2691, %v2692
      %v2718 = vsel %vm966, %v2690, %v2691
      %v2719 = vsel %vm966, %v2689, %v2690
      %v2720 = vsel %vm966, %v2688, %v2689
      %v2721 = vsel %vm966, %v2687, %v2688
      %v2722 = vsel %vm966, %v2686, %v2687
      %v2723 = vsel %vm966, %v2685, %v2686
      %v2724 = vsel %vm966, %v2684, %v2685
      %v2725 = vsel %vm966, %v2683, %v2684
      %v2726 = vsel %vm966, %v2682, %v2683
      %v2727 = vsel %vm966, %v2681, %v2682
      %v2728 = vsel %vm966, %v2680, %v2681
      %v2729 = vsel %vm966, %v2679, %v2680
      %v2730 = vsel %vm966, %v2678, %v2679
      %v2731 = vsel %vm966, %v2677, %v2678
      %v2732 = vsel %vm966, %v2676, %v2677
      %v2733 = vsel %vm966, %v2675, %v2676
      %v2734 = vsel %vm966, %v2674, %v2675
      %v2735 = vsel %vm966, %v2673, %v2674
      %v2736 = vsel %vm966, %v2704, %v2673
      %v2737 = vsel %vm1031, %v2735, 0.0
      %v2738 = vsel %vm1032, %v2734, 0.0
      %v2739 = vsel %vm1033, %v2733, 0.0
      %v2740 = vsel %vm1034, %v2732, 0.0
      %v2741 = vsel %vm1035, %v2731, 0.0
      %v2742 = vsel %vm1036, %v2730, 0.0
      %v2743 = vsel %vm1037, %v2729, 0.0
      %v2744 = vsel %vm1038, %v2728, 0.0
      %v2745 = vsel %vm1039, %v2727, 0.0
      %v2746 = vsel %vm1040, %v2726, 0.0
      %v2747 = vsel %vm1041, %v2725, 0.0
      %v2748 = vsel %vm1042, %v2724, 0.0
      %v2749 = vsel %vm1043, %v2723, 0.0
      %v2750 = vsel %vm1044, %v2722, 0.0
      %v2751 = vsel %vm1045, %v2721, 0.0
      %v2752 = vsel %vm1046, %v2720, 0.0
      %v2753 = vsel %vm1047, %v2719, 0.0
      %v2754 = vsel %vm1048, %v2718, 0.0
      %v2755 = vsel %vm1049, %v2717, 0.0
      %v2756 = vsel %vm1050, %v2716, 0.0
      %v2757 = vsel %vm1051, %v2715, 0.0
      %v2758 = vsel %vm1052, %v2714, 0.0
      %v2759 = vsel %vm1053, %v2713, 0.0
      %v2760 = vsel %vm1054, %v2712, 0.0
      %v2761 = vsel %vm1055, %v2711, 0.0
      %v2762 = vsel %vm1056, %v2710, 0.0
      %v2763 = vsel %vm1057, %v2709, 0.0
      %v2764 = vsel %vm1058, %v2708, 0.0
      %v2765 = vsel %vm1059, %v2707, 0.0
      %v2766 = vsel %vm1060, %v2706, 0.0
      %v2767 = vsel %vm1061, %v2705, 0.0
      %v2768 = vsel %vm1062, %v2736, 0.0
      %v2769 = vld [vmem:[%s3] sm:$0xff]
      %v2770 = vld [vmem:[%s3 + $0x8] sm:$0xff]
      %v2771 = vld [vmem:[%s3 + $0x10] sm:$0xff]
      %v2772 = vld [vmem:[%s3 + $0x18] sm:$0xff]
      %v2773 = vld [vmem:[%s3 + $0x20] sm:$0xff]
      %v2774 = vld [vmem:[%s3 + $0x28] sm:$0xff]
      %v2775 = vld [vmem:[%s3 + $0x30] sm:$0xff]
      %v2776 = vld [vmem:[%s3 + $0x38] sm:$0xff]
      %v2777 = vld [vmem:[%s3 + $0x40] sm:$0xff]
      %v2778 = vld [vmem:[%s3 + $0x48] sm:$0xff]
      %v2779 = vld [vmem:[%s3 + $0x50] sm:$0xff]
      %v2780 = vld [vmem:[%s3 + $0x58] sm:$0xff]
      %v2781 = vld [vmem:[%s3 + $0x60] sm:$0xff]
      %v2782 = vld [vmem:[%s3 + $0x68] sm:$0xff]
      %v2783 = vld [vmem:[%s3 + $0x70] sm:$0xff]
      %v2784 = vld [vmem:[%s3 + $0x78] sm:$0xff]
      %v2785 = vld [vmem:[%s3 + $0x80] sm:$0xff]
      %v2786 = vld [vmem:[%s3 + $0x88] sm:$0xff]
      %v2787 = vld [vmem:[%s3 + $0x90] sm:$0xff]
      %v2788 = vld [vmem:[%s3 + $0x98] sm:$0xff]
      %v2789 = vld [vmem:[%s3 + $0xa0] sm:$0xff]
      %v2790 = vld [vmem:[%s3 + $0xa8] sm:$0xff]
      %v2791 = vld [vmem:[%s3 + $0xb0] sm:$0xff]
      %v2792 = vld [vmem:[%s3 + $0xb8] sm:$0xff]
      %v2793 = vld [vmem:[%s3 + $0xc0] sm:$0xff]
      %v2794 = vld [vmem:[%s3 + $0xc8] sm:$0xff]
      %v2795 = vld [vmem:[%s3 + $0xd0] sm:$0xff]
      %v2796 = vld [vmem:[%s3 + $0xd8] sm:$0xff]
      %v2797 = vld [vmem:[%s3 + $0xe0] sm:$0xff]
      %v2798 = vld [vmem:[%s3 + $0xe8] sm:$0xff]
      %v2799 = vld [vmem:[%s3 + $0xf0] sm:$0xff]
      %v2800 = vld [vmem:[%s3 + $0xf8] sm:$0xff]
      %v2801 = vld [vmem:[%s3 + $0x100] sm:$0xff]
      %v2802 = vld [vmem:[%s3 + $0x108] sm:$0xff]
      %v2803 = vld [vmem:[%s3 + $0x110] sm:$0xff]
      %v2804 = vld [vmem:[%s3 + $0x118] sm:$0xff]
      %v2805 = vld [vmem:[%s3 + $0x120] sm:$0xff]
      %v2806 = vld [vmem:[%s3 + $0x128] sm:$0xff]
      %v2807 = vld [vmem:[%s3 + $0x130] sm:$0xff]
      %v2808 = vld [vmem:[%s3 + $0x138] sm:$0xff]
      %v2809 = vld [vmem:[%s3 + $0x140] sm:$0xff]
      %v2810 = vld [vmem:[%s3 + $0x148] sm:$0xff]
      %v2811 = vld [vmem:[%s3 + $0x150] sm:$0xff]
      %v2812 = vld [vmem:[%s3 + $0x158] sm:$0xff]
      %v2813 = vld [vmem:[%s3 + $0x160] sm:$0xff]
      %v2814 = vld [vmem:[%s3 + $0x168] sm:$0xff]
      %v2815 = vld [vmem:[%s3 + $0x170] sm:$0xff]
      %v2816 = vld [vmem:[%s3 + $0x178] sm:$0xff]
      %v2817 = vrot.slane %v2573, 7
      %v2818 = vrot.slane %v2574, 7
      %v2819 = vsel %vm805, %v2817, %v2818
      %v2820 = vsel %vm805, %v2608, %v2817
      %v2821 = vsel %vm805, %v2818, %v2579
      %v2822 = vsel %vm870, %v2821, 0.0
      %v2823 = vsel %vm871, %v2637, 0.0
      %v2824 = vsel %vm872, %v2636, 0.0
      %v2825 = vsel %vm873, %v2635, 0.0
      %v2826 = vsel %vm874, %v2634, 0.0
      %v2827 = vsel %vm875, %v2633, 0.0
      %v2828 = vsel %vm876, %v2632, 0.0
      %v2829 = vsel %vm877, %v2631, 0.0
      %v2830 = vsel %vm878, %v2630, 0.0
      %v2831 = vsel %vm879, %v2629, 0.0
      %v2832 = vsel %vm880, %v2628, 0.0
      %v2833 = vsel %vm881, %v2627, 0.0
      %v2834 = vsel %vm882, %v2626, 0.0
      %v2835 = vsel %vm883, %v2625, 0.0
      %v2836 = vsel %vm884, %v2624, 0.0
      %v2837 = vsel %vm885, %v2623, 0.0
      %v2838 = vsel %vm886, %v2622, 0.0
      %v2839 = vsel %vm887, %v2621, 0.0
      %v2840 = vsel %vm888, %v2620, 0.0
      %v2841 = vsel %vm889, %v2619, 0.0
      %v2842 = vsel %vm890, %v2618, 0.0
      %v2843 = vsel %vm891, %v2617, 0.0
      %v2844 = vsel %vm892, %v2616, 0.0
      %v2845 = vsel %vm893, %v2615, 0.0
      %v2846 = vsel %vm894, %v2614, 0.0
      %v2847 = vsel %vm895, %v2613, 0.0
      %v2848 = vsel %vm896, %v2612, 0.0
      %v2849 = vsel %vm897, %v2611, 0.0
      %v2850 = vsel %vm898, %v2610, 0.0
      %v2851 = vsel %vm899, %v2609, 0.0
      %v2852 = vsel %vm900, %v2820, 0.0
      %v2853 = vsel %vm901, %v2819, 0.0
      %v2854 = vrot.slane %v2573, 1
      %v2855 = vrot.slane %v2574, 1
      %v2856 = vsel %vm966, %v2854, %v2855
      %v2857 = vsel %vm966, %v2704, %v2854
      %v2858 = vsel %vm966, %v2855, %v2675
      %v2859 = vsel %vm1031, %v2733, 0.0
      %v2860 = vsel %vm1032, %v2732, 0.0
      %v2861 = vsel %vm1033, %v2731, 0.0
      %v2862 = vsel %vm1034, %v2730, 0.0
      %v2863 = vsel %vm1035, %v2729, 0.0
      %v2864 = vsel %vm1036, %v2728, 0.0
      %v2865 = vsel %vm1037, %v2727, 0.0
      %v2866 = vsel %vm1038, %v2726, 0.0
      %v2867 = vsel %vm1039, %v2725, 0.0
      %v2868 = vsel %vm1040, %v2724, 0.0
      %v2869 = vsel %vm1041, %v2723, 0.0
      %v2870 = vsel %vm1042, %v2722, 0.0
      %v2871 = vsel %vm1043, %v2721, 0.0
      %v2872 = vsel %vm1044, %v2720, 0.0
      %v2873 = vsel %vm1045, %v2719, 0.0
      %v2874 = vsel %vm1046, %v2718, 0.0
      %v2875 = vsel %vm1047, %v2717, 0.0
      %v2876 = vsel %vm1048, %v2716, 0.0
      %v2877 = vsel %vm1049, %v2715, 0.0
      %v2878 = vsel %vm1050, %v2714, 0.0
      %v2879 = vsel %vm1051, %v2713, 0.0
      %v2880 = vsel %vm1052, %v2712, 0.0
      %v2881 = vsel %vm1053, %v2711, 0.0
      %v2882 = vsel %vm1054, %v2710, 0.0
      %v2883 = vsel %vm1055, %v2709, 0.0
      %v2884 = vsel %vm1056, %v2708, 0.0
      %v2885 = vsel %vm1057, %v2707, 0.0
      %v2886 = vsel %vm1058, %v2706, 0.0
      %v2887 = vsel %vm1059, %v2705, 0.0
      %v2888 = vsel %vm1060, %v2857, 0.0
      %v2889 = vsel %vm1061, %v2856, 0.0
      %v2890 = vsel %vm1062, %v2858, 0.0
      %s2891 = scalar_lea.vmem %s3, 384
      %v2892 = vld [vmem:[%s2891] sm:$0xff]
      %v2893 = vld [vmem:[%s2891 + $0x8] sm:$0xff]
      %v2894 = vld [vmem:[%s2891 + $0x10] sm:$0xff]
      %v2895 = vld [vmem:[%s2891 + $0x18] sm:$0xff]
      %v2896 = vld [vmem:[%s2891 + $0x20] sm:$0xff]
      %v2897 = vld [vmem:[%s2891 + $0x28] sm:$0xff]
      %v2898 = vld [vmem:[%s2891 + $0x30] sm:$0xff]
      %v2899 = vld [vmem:[%s2891 + $0x38] sm:$0xff]
      %v2900 = vld [vmem:[%s2891 + $0x40] sm:$0xff]
      %v2901 = vld [vmem:[%s2891 + $0x48] sm:$0xff]
      %v2902 = vld [vmem:[%s2891 + $0x50] sm:$0xff]
      %v2903 = vld [vmem:[%s2891 + $0x58] sm:$0xff]
      %v2904 = vld [vmem:[%s2891 + $0x60] sm:$0xff]
      %v2905 = vld [vmem:[%s2891 + $0x68] sm:$0xff]
      %v2906 = vld [vmem:[%s2891 + $0x70] sm:$0xff]
      %v2907 = vld [vmem:[%s2891 + $0x78] sm:$0xff]
      %v2908 = vld [vmem:[%s2891 + $0x80] sm:$0xff]
      %v2909 = vld [vmem:[%s2891 + $0x88] sm:$0xff]
      %v2910 = vld [vmem:[%s2891 + $0x90] sm:$0xff]
      %v2911 = vld [vmem:[%s2891 + $0x98] sm:$0xff]
      %v2912 = vld [vmem:[%s2891 + $0xa0] sm:$0xff]
      %v2913 = vld [vmem:[%s2891 + $0xa8] sm:$0xff]
      %v2914 = vld [vmem:[%s2891 + $0xb0] sm:$0xff]
      %v2915 = vld [vmem:[%s2891 + $0xb8] sm:$0xff]
      %v2916 = vld [vmem:[%s2891 + $0xc0] sm:$0xff]
      %v2917 = vld [vmem:[%s2891 + $0xc8] sm:$0xff]
      %v2918 = vld [vmem:[%s2891 + $0xd0] sm:$0xff]
      %v2919 = vld [vmem:[%s2891 + $0xd8] sm:$0xff]
      %v2920 = vld [vmem:[%s2891 + $0xe0] sm:$0xff]
      %v2921 = vld [vmem:[%s2891 + $0xe8] sm:$0xff]
      %v2922 = vld [vmem:[%s2891 + $0xf0] sm:$0xff]
      %v2923 = vld [vmem:[%s2891 + $0xf8] sm:$0xff]
      %v2924 = vld [vmem:[%s2891 + $0x100] sm:$0xff]
      %v2925 = vld [vmem:[%s2891 + $0x108] sm:$0xff]
      %v2926 = vld [vmem:[%s2891 + $0x110] sm:$0xff]
      %v2927 = vld [vmem:[%s2891 + $0x118] sm:$0xff]
      %v2928 = vld [vmem:[%s2891 + $0x120] sm:$0xff]
      %v2929 = vld [vmem:[%s2891 + $0x128] sm:$0xff]
      %v2930 = vld [vmem:[%s2891 + $0x130] sm:$0xff]
      %v2931 = vld [vmem:[%s2891 + $0x138] sm:$0xff]
      %v2932 = vld [vmem:[%s2891 + $0x140] sm:$0xff]
      %v2933 = vld [vmem:[%s2891 + $0x148] sm:$0xff]
      %v2934 = vld [vmem:[%s2891 + $0x150] sm:$0xff]
      %v2935 = vld [vmem:[%s2891 + $0x158] sm:$0xff]
      %v2936 = vld [vmem:[%s2891 + $0x160] sm:$0xff]
      %v2937 = vld [vmem:[%s2891 + $0x168] sm:$0xff]
      %v2938 = vld [vmem:[%s2891 + $0x170] sm:$0xff]
      %v2939 = vld [vmem:[%s2891 + $0x178] sm:$0xff]
      %2940 = vmatpush.msra.mxu0 %v2907
      %2941 = vmatpush.msra.mxu0 %v2906
      %2942 = vmatpush.msra.mxu0 %v2905
      %2943 = vmatpush.msra.mxu0 %v2904
      %2944 = vmatpush.msra.mxu0 %v2903
      %2945 = vmatpush.msra.mxu0 %v2902
      %2946 = vmatpush.msra.mxu0 %v2901
      %2947 = vmatpush.msra.mxu0 %v2900
      %2948 = vmatpush.msra.mxu0 %v2899
      %2949 = vmatpush.msra.mxu0 %v2898
      %2950 = vmatpush.msra.mxu0 %v2897
      %2951 = vmatpush.msra.mxu0 %v2896
      %2952 = vmatpush.msra.mxu0 %v2895
      %2953 = vmatpush.msra.mxu0 %v2894
      %2954 = vmatpush.msra.mxu0 %v2893
      %2955 = vmatpush.msra.mxu0 %v2892
      %2956 = vmatmul.f32.gmra.mxu0 %v2822
      %v2957 = vpop.f32.mrf.mxu0
      %v2958 = vadd.f32 0.0, %v2957
      %2959 = vmatmul.f32.gmra.mxu0 %v2823
      %v2960 = vpop.f32.mrf.mxu0
      %v2961 = vadd.f32 0.0, %v2960
      %2962 = vmatmul.f32.gmra.mxu0 %v2824
      %v2963 = vpop.f32.mrf.mxu0
      %v2964 = vadd.f32 0.0, %v2963
      %2965 = vmatmul.f32.gmra.mxu0 %v2825
      %v2966 = vpop.f32.mrf.mxu0
      %v2967 = vadd.f32 0.0, %v2966
      %2968 = vmatmul.f32.gmra.mxu0 %v2826
      %v2969 = vpop.f32.mrf.mxu0
      %v2970 = vadd.f32 0.0, %v2969
      %2971 = vmatmul.f32.gmra.mxu0 %v2827
      %v2972 = vpop.f32.mrf.mxu0
      %v2973 = vadd.f32 0.0, %v2972
      %2974 = vmatmul.f32.gmra.mxu0 %v2828
      %v2975 = vpop.f32.mrf.mxu0
      %v2976 = vadd.f32 0.0, %v2975
      %2977 = vmatmul.f32.gmra.mxu0 %v2829
      %v2978 = vpop.f32.mrf.mxu0
      %v2979 = vadd.f32 0.0, %v2978
      %2980 = vmatmul.f32.gmra.mxu0 %v2830
      %v2981 = vpop.f32.mrf.mxu0
      %v2982 = vadd.f32 0.0, %v2981
      %2983 = vmatmul.f32.gmra.mxu0 %v2831
      %v2984 = vpop.f32.mrf.mxu0
      %v2985 = vadd.f32 0.0, %v2984
      %2986 = vmatmul.f32.gmra.mxu0 %v2832
      %v2987 = vpop.f32.mrf.mxu0
      %v2988 = vadd.f32 0.0, %v2987
      %2989 = vmatmul.f32.gmra.mxu0 %v2833
      %v2990 = vpop.f32.mrf.mxu0
      %v2991 = vadd.f32 0.0, %v2990
      %2992 = vmatmul.f32.gmra.mxu0 %v2834
      %v2993 = vpop.f32.mrf.mxu0
      %v2994 = vadd.f32 0.0, %v2993
      %2995 = vmatmul.f32.gmra.mxu0 %v2835
      %v2996 = vpop.f32.mrf.mxu0
      %v2997 = vadd.f32 0.0, %v2996
      %2998 = vmatmul.f32.gmra.mxu0 %v2836
      %v2999 = vpop.f32.mrf.mxu0
      %v3000 = vadd.f32 0.0, %v2999
      %3001 = vmatmul.f32.gmra.mxu0 %v2837
      %v3002 = vpop.f32.mrf.mxu0
      %v3003 = vadd.f32 0.0, %v3002
      %3004 = vmatmul.f32.gmra.mxu0 %v2838
      %v3005 = vpop.f32.mrf.mxu0
      %v3006 = vadd.f32 0.0, %v3005
      %3007 = vmatmul.f32.gmra.mxu0 %v2839
      %v3008 = vpop.f32.mrf.mxu0
      %v3009 = vadd.f32 0.0, %v3008
      %3010 = vmatmul.f32.gmra.mxu0 %v2840
      %v3011 = vpop.f32.mrf.mxu0
      %v3012 = vadd.f32 0.0, %v3011
      %3013 = vmatmul.f32.gmra.mxu0 %v2841
      %v3014 = vpop.f32.mrf.mxu0
      %v3015 = vadd.f32 0.0, %v3014
      %3016 = vmatmul.f32.gmra.mxu0 %v2842
      %v3017 = vpop.f32.mrf.mxu0
      %v3018 = vadd.f32 0.0, %v3017
      %3019 = vmatmul.f32.gmra.mxu0 %v2843
      %v3020 = vpop.f32.mrf.mxu0
      %v3021 = vadd.f32 0.0, %v3020
      %3022 = vmatmul.f32.gmra.mxu0 %v2844
      %v3023 = vpop.f32.mrf.mxu0
      %v3024 = vadd.f32 0.0, %v3023
      %3025 = vmatmul.f32.gmra.mxu0 %v2845
      %v3026 = vpop.f32.mrf.mxu0
      %v3027 = vadd.f32 0.0, %v3026
      %3028 = vmatmul.f32.gmra.mxu0 %v2846
      %v3029 = vpop.f32.mrf.mxu0
      %v3030 = vadd.f32 0.0, %v3029
      %3031 = vmatmul.f32.gmra.mxu0 %v2847
      %v3032 = vpop.f32.mrf.mxu0
      %v3033 = vadd.f32 0.0, %v3032
      %3034 = vmatmul.f32.gmra.mxu0 %v2848
      %v3035 = vpop.f32.mrf.mxu0
      %v3036 = vadd.f32 0.0, %v3035
      %3037 = vmatmul.f32.gmra.mxu0 %v2849
      %v3038 = vpop.f32.mrf.mxu0
      %v3039 = vadd.f32 0.0, %v3038
      %3040 = vmatmul.f32.gmra.mxu0 %v2850
      %v3041 = vpop.f32.mrf.mxu0
      %v3042 = vadd.f32 0.0, %v3041
      %3043 = vmatmul.f32.gmra.mxu0 %v2851
      %v3044 = vpop.f32.mrf.mxu0
      %v3045 = vadd.f32 0.0, %v3044
      %3046 = vmatmul.f32.gmra.mxu0 %v2852
      %v3047 = vpop.f32.mrf.mxu0
      %v3048 = vadd.f32 0.0, %v3047
      %3049 = vmatmul.f32.gmra.mxu0 %v2853
      %v3050 = vpop.f32.mrf.mxu0
      %v3051 = vadd.f32 0.0, %v3050
      %3052 = vdwg.mxu0
      %3053 = vmatpush.msra.mxu0 %v2923
      %3054 = vmatpush.msra.mxu0 %v2922
      %3055 = vmatpush.msra.mxu0 %v2921
      %3056 = vmatpush.msra.mxu0 %v2920
      %3057 = vmatpush.msra.mxu0 %v2919
      %3058 = vmatpush.msra.mxu0 %v2918
      %3059 = vmatpush.msra.mxu0 %v2917
      %3060 = vmatpush.msra.mxu0 %v2916
      %3061 = vmatpush.msra.mxu0 %v2915
      %3062 = vmatpush.msra.mxu0 %v2914
      %3063 = vmatpush.msra.mxu0 %v2913
      %3064 = vmatpush.msra.mxu0 %v2912
      %3065 = vmatpush.msra.mxu0 %v2911
      %3066 = vmatpush.msra.mxu0 %v2910
      %3067 = vmatpush.msra.mxu0 %v2909
      %3068 = vmatpush.msra.mxu0 %v2908
      %3069 = vmatmul.f32.gmra.mxu0 %v2543
      %v3070 = vpop.f32.mrf.mxu0
      %v3071 = vadd.f32 %v2958, %v3070
      %3072 = vmatmul.f32.gmra.mxu0 %v2544
      %v3073 = vpop.f32.mrf.mxu0
      %v3074 = vadd.f32 %v2961, %v3073
      %3075 = vmatmul.f32.gmra.mxu0 %v2545
      %v3076 = vpop.f32.mrf.mxu0
      %v3077 = vadd.f32 %v2964, %v3076
      %3078 = vmatmul.f32.gmra.mxu0 %v2546
      %v3079 = vpop.f32.mrf.mxu0
      %v3080 = vadd.f32 %v2967, %v3079
      %3081 = vmatmul.f32.gmra.mxu0 %v2547
      %v3082 = vpop.f32.mrf.mxu0
      %v3083 = vadd.f32 %v2970, %v3082
      %3084 = vmatmul.f32.gmra.mxu0 %v2548
      %v3085 = vpop.f32.mrf.mxu0
      %v3086 = vadd.f32 %v2973, %v3085
      %3087 = vmatmul.f32.gmra.mxu0 %v2549
      %v3088 = vpop.f32.mrf.mxu0
      %v3089 = vadd.f32 %v2976, %v3088
      %3090 = vmatmul.f32.gmra.mxu0 %v2550
      %v3091 = vpop.f32.mrf.mxu0
      %v3092 = vadd.f32 %v2979, %v3091
      %3093 = vmatmul.f32.gmra.mxu0 %v2551
      %v3094 = vpop.f32.mrf.mxu0
      %v3095 = vadd.f32 %v2982, %v3094
      %3096 = vmatmul.f32.gmra.mxu0 %v2552
      %v3097 = vpop.f32.mrf.mxu0
      %v3098 = vadd.f32 %v2985, %v3097
      %3099 = vmatmul.f32.gmra.mxu0 %v2553
      %v3100 = vpop.f32.mrf.mxu0
      %v3101 = vadd.f32 %v2988, %v3100
      %3102 = vmatmul.f32.gmra.mxu0 %v2554
      %v3103 = vpop.f32.mrf.mxu0
      %v3104 = vadd.f32 %v2991, %v3103
      %3105 = vmatmul.f32.gmra.mxu0 %v2555
      %v3106 = vpop.f32.mrf.mxu0
      %v3107 = vadd.f32 %v2994, %v3106
      %3108 = vmatmul.f32.gmra.mxu0 %v2556
      %v3109 = vpop.f32.mrf.mxu0
      %v3110 = vadd.f32 %v2997, %v3109
      %3111 = vmatmul.f32.gmra.mxu0 %v2557
      %v3112 = vpop.f32.mrf.mxu0
      %v3113 = vadd.f32 %v3000, %v3112
      %3114 = vmatmul.f32.gmra.mxu0 %v2558
      %v3115 = vpop.f32.mrf.mxu0
      %v3116 = vadd.f32 %v3003, %v3115
      %3117 = vmatmul.f32.gmra.mxu0 %v2559
      %v3118 = vpop.f32.mrf.mxu0
      %v3119 = vadd.f32 %v3006, %v3118
      %3120 = vmatmul.f32.gmra.mxu0 %v2560
      %v3121 = vpop.f32.mrf.mxu0
      %v3122 = vadd.f32 %v3009, %v3121
      %3123 = vmatmul.f32.gmra.mxu0 %v2561
      %v3124 = vpop.f32.mrf.mxu0
      %v3125 = vadd.f32 %v3012, %v3124
      %3126 = vmatmul.f32.gmra.mxu0 %v2562
      %v3127 = vpop.f32.mrf.mxu0
      %v3128 = vadd.f32 %v3015, %v3127
      %3129 = vmatmul.f32.gmra.mxu0 %v2563
      %v3130 = vpop.f32.mrf.mxu0
      %v3131 = vadd.f32 %v3018, %v3130
      %3132 = vmatmul.f32.gmra.mxu0 %v2564
      %v3133 = vpop.f32.mrf.mxu0
      %v3134 = vadd.f32 %v3021, %v3133
      %3135 = vmatmul.f32.gmra.mxu0 %v2565
      %v3136 = vpop.f32.mrf.mxu0
      %v3137 = vadd.f32 %v3024, %v3136
      %3138 = vmatmul.f32.gmra.mxu0 %v2566
      %v3139 = vpop.f32.mrf.mxu0
      %v3140 = vadd.f32 %v3027, %v3139
      %3141 = vmatmul.f32.gmra.mxu0 %v2567
      %v3142 = vpop.f32.mrf.mxu0
      %v3143 = vadd.f32 %v3030, %v3142
      %3144 = vmatmul.f32.gmra.mxu0 %v2568
      %v3145 = vpop.f32.mrf.mxu0
      %v3146 = vadd.f32 %v3033, %v3145
      %3147 = vmatmul.f32.gmra.mxu0 %v2569
      %v3148 = vpop.f32.mrf.mxu0
      %v3149 = vadd.f32 %v3036, %v3148
      %3150 = vmatmul.f32.gmra.mxu0 %v2570
      %v3151 = vpop.f32.mrf.mxu0
      %v3152 = vadd.f32 %v3039, %v3151
      %3153 = vmatmul.f32.gmra.mxu0 %v2571
      %v3154 = vpop.f32.mrf.mxu0
      %v3155 = vadd.f32 %v3042, %v3154
      %3156 = vmatmul.f32.gmra.mxu0 %v2572
      %v3157 = vpop.f32.mrf.mxu0
      %v3158 = vadd.f32 %v3045, %v3157
      %3159 = vmatmul.f32.gmra.mxu0 %v2573
      %v3160 = vpop.f32.mrf.mxu0
      %v3161 = vadd.f32 %v3048, %v3160
      %3162 = vmatmul.f32.gmra.mxu0 %v2574
      %v3163 = vpop.f32.mrf.mxu0
      %v3164 = vadd.f32 %v3051, %v3163
      %3165 = vdwg.mxu0
      %3166 = vmatpush.msra.mxu0 %v2939
      %3167 = vmatpush.msra.mxu0 %v2938
      %3168 = vmatpush.msra.mxu0 %v2937
      %3169 = vmatpush.msra.mxu0 %v2936
      %3170 = vmatpush.msra.mxu0 %v2935
      %3171 = vmatpush.msra.mxu0 %v2934
      %3172 = vmatpush.msra.mxu0 %v2933
      %3173 = vmatpush.msra.mxu0 %v2932
      %3174 = vmatpush.msra.mxu0 %v2931
      %3175 = vmatpush.msra.mxu0 %v2930
      %3176 = vmatpush.msra.mxu0 %v2929
      %3177 = vmatpush.msra.mxu0 %v2928
      %3178 = vmatpush.msra.mxu0 %v2927
      %3179 = vmatpush.msra.mxu0 %v2926
      %3180 = vmatpush.msra.mxu0 %v2925
      %3181 = vmatpush.msra.mxu0 %v2924
      %3182 = vmatmul.f32.gmra.mxu0 %v2859
      %v3183 = vpop.f32.mrf.mxu0
      %v3184 = vadd.f32 %v3071, %v3183
      %3185 = vmatmul.f32.gmra.mxu0 %v2860
      %v3186 = vpop.f32.mrf.mxu0
      %v3187 = vadd.f32 %v3074, %v3186
      %3188 = vmatmul.f32.gmra.mxu0 %v2861
      %v3189 = vpop.f32.mrf.mxu0
      %v3190 = vadd.f32 %v3077, %v3189
      %3191 = vmatmul.f32.gmra.mxu0 %v2862
      %v3192 = vpop.f32.mrf.mxu0
      %v3193 = vadd.f32 %v3080, %v3192
      %3194 = vmatmul.f32.gmra.mxu0 %v2863
      %v3195 = vpop.f32.mrf.mxu0
      %v3196 = vadd.f32 %v3083, %v3195
      %3197 = vmatmul.f32.gmra.mxu0 %v2864
      %v3198 = vpop.f32.mrf.mxu0
      %v3199 = vadd.f32 %v3086, %v3198
      %3200 = vmatmul.f32.gmra.mxu0 %v2865
      %v3201 = vpop.f32.mrf.mxu0
      %v3202 = vadd.f32 %v3089, %v3201
      %3203 = vmatmul.f32.gmra.mxu0 %v2866
      %v3204 = vpop.f32.mrf.mxu0
      %v3205 = vadd.f32 %v3092, %v3204
      %3206 = vmatmul.f32.gmra.mxu0 %v2867
      %v3207 = vpop.f32.mrf.mxu0
      %v3208 = vadd.f32 %v3095, %v3207
      %3209 = vmatmul.f32.gmra.mxu0 %v2868
      %v3210 = vpop.f32.mrf.mxu0
      %v3211 = vadd.f32 %v3098, %v3210
      %3212 = vmatmul.f32.gmra.mxu0 %v2869
      %v3213 = vpop.f32.mrf.mxu0
      %v3214 = vadd.f32 %v3101, %v3213
      %3215 = vmatmul.f32.gmra.mxu0 %v2870
      %v3216 = vpop.f32.mrf.mxu0
      %v3217 = vadd.f32 %v3104, %v3216
      %3218 = vmatmul.f32.gmra.mxu0 %v2871
      %v3219 = vpop.f32.mrf.mxu0
      %v3220 = vadd.f32 %v3107, %v3219
      %3221 = vmatmul.f32.gmra.mxu0 %v2872
      %v3222 = vpop.f32.mrf.mxu0
      %v3223 = vadd.f32 %v3110, %v3222
      %3224 = vmatmul.f32.gmra.mxu0 %v2873
      %v3225 = vpop.f32.mrf.mxu0
      %v3226 = vadd.f32 %v3113, %v3225
      %3227 = vmatmul.f32.gmra.mxu0 %v2874
      %v3228 = vpop.f32.mrf.mxu0
      %v3229 = vadd.f32 %v3116, %v3228
      %3230 = vmatmul.f32.gmra.mxu0 %v2875
      %v3231 = vpop.f32.mrf.mxu0
      %v3232 = vadd.f32 %v3119, %v3231
      %3233 = vmatmul.f32.gmra.mxu0 %v2876
      %v3234 = vpop.f32.mrf.mxu0
      %v3235 = vadd.f32 %v3122, %v3234
      %3236 = vmatmul.f32.gmra.mxu0 %v2877
      %v3237 = vpop.f32.mrf.mxu0
      %v3238 = vadd.f32 %v3125, %v3237
      %3239 = vmatmul.f32.gmra.mxu0 %v2878
      %v3240 = vpop.f32.mrf.mxu0
      %v3241 = vadd.f32 %v3128, %v3240
      %3242 = vmatmul.f32.gmra.mxu0 %v2879
      %v3243 = vpop.f32.mrf.mxu0
      %v3244 = vadd.f32 %v3131, %v3243
      %3245 = vmatmul.f32.gmra.mxu0 %v2880
      %v3246 = vpop.f32.mrf.mxu0
      %v3247 = vadd.f32 %v3134, %v3246
      %3248 = vmatmul.f32.gmra.mxu0 %v2881
      %v3249 = vpop.f32.mrf.mxu0
      %v3250 = vadd.f32 %v3137, %v3249
      %3251 = vmatmul.f32.gmra.mxu0 %v2882
      %v3252 = vpop.f32.mrf.mxu0
      %v3253 = vadd.f32 %v3140, %v3252
      %3254 = vmatmul.f32.gmra.mxu0 %v2883
      %v3255 = vpop.f32.mrf.mxu0
      %v3256 = vadd.f32 %v3143, %v3255
      %3257 = vmatmul.f32.gmra.mxu0 %v2884
      %v3258 = vpop.f32.mrf.mxu0
      %v3259 = vadd.f32 %v3146, %v3258
      %3260 = vmatmul.f32.gmra.mxu0 %v2885
      %v3261 = vpop.f32.mrf.mxu0
      %v3262 = vadd.f32 %v3149, %v3261
      %3263 = vmatmul.f32.gmra.mxu0 %v2886
      %v3264 = vpop.f32.mrf.mxu0
      %v3265 = vadd.f32 %v3152, %v3264
      %3266 = vmatmul.f32.gmra.mxu0 %v2887
      %v3267 = vpop.f32.mrf.mxu0
      %v3268 = vadd.f32 %v3155, %v3267
      %3269 = vmatmul.f32.gmra.mxu0 %v2888
      %v3270 = vpop.f32.mrf.mxu0
      %v3271 = vadd.f32 %v3158, %v3270
      %3272 = vmatmul.f32.gmra.mxu0 %v2889
      %v3273 = vpop.f32.mrf.mxu0
      %v3274 = vadd.f32 %v3161, %v3273
      %3275 = vmatmul.f32.gmra.mxu0 %v2890
      %v3276 = vpop.f32.mrf.mxu0
      %v3277 = vadd.f32 %v3164, %v3276
      %3278 = vdwg.mxu0
      %3279 = vmatpush.msra.mxu0 %v2784
      %3280 = vmatpush.msra.mxu0 %v2783
      %3281 = vmatpush.msra.mxu0 %v2782
      %3282 = vmatpush.msra.mxu0 %v2781
      %3283 = vmatpush.msra.mxu0 %v2780
      %3284 = vmatpush.msra.mxu0 %v2779
      %3285 = vmatpush.msra.mxu0 %v2778
      %3286 = vmatpush.msra.mxu0 %v2777
      %3287 = vmatpush.msra.mxu0 %v2776
      %3288 = vmatpush.msra.mxu0 %v2775
      %3289 = vmatpush.msra.mxu0 %v2774
      %3290 = vmatpush.msra.mxu0 %v2773
      %3291 = vmatpush.msra.mxu0 %v2772
      %3292 = vmatpush.msra.mxu0 %v2771
      %3293 = vmatpush.msra.mxu0 %v2770
      %3294 = vmatpush.msra.mxu0 %v2769
      %3295 = vmatmul.f32.gmra.mxu0 %v2641
      %v3296 = vpop.f32.mrf.mxu0
      %v3297 = vadd.f32 %v3184, %v3296
      %3298 = vmatmul.f32.gmra.mxu0 %v2642
      %v3299 = vpop.f32.mrf.mxu0
      %v3300 = vadd.f32 %v3187, %v3299
      %3301 = vmatmul.f32.gmra.mxu0 %v2643
      %v3302 = vpop.f32.mrf.mxu0
      %v3303 = vadd.f32 %v3190, %v3302
      %3304 = vmatmul.f32.gmra.mxu0 %v2644
      %v3305 = vpop.f32.mrf.mxu0
      %v3306 = vadd.f32 %v3193, %v3305
      %3307 = vmatmul.f32.gmra.mxu0 %v2645
      %v3308 = vpop.f32.mrf.mxu0
      %v3309 = vadd.f32 %v3196, %v3308
      %3310 = vmatmul.f32.gmra.mxu0 %v2646
      %v3311 = vpop.f32.mrf.mxu0
      %v3312 = vadd.f32 %v3199, %v3311
      %3313 = vmatmul.f32.gmra.mxu0 %v2647
      %v3314 = vpop.f32.mrf.mxu0
      %v3315 = vadd.f32 %v3202, %v3314
      %3316 = vmatmul.f32.gmra.mxu0 %v2648
      %v3317 = vpop.f32.mrf.mxu0
      %v3318 = vadd.f32 %v3205, %v3317
      %3319 = vmatmul.f32.gmra.mxu0 %v2649
      %v3320 = vpop.f32.mrf.mxu0
      %v3321 = vadd.f32 %v3208, %v3320
      %3322 = vmatmul.f32.gmra.mxu0 %v2650
      %v3323 = vpop.f32.mrf.mxu0
      %v3324 = vadd.f32 %v3211, %v3323
      %3325 = vmatmul.f32.gmra.mxu0 %v2651
      %v3326 = vpop.f32.mrf.mxu0
      %v3327 = vadd.f32 %v3214, %v3326
      %3328 = vmatmul.f32.gmra.mxu0 %v2652
      %v3329 = vpop.f32.mrf.mxu0
      %v3330 = vadd.f32 %v3217, %v3329
      %3331 = vmatmul.f32.gmra.mxu0 %v2653
      %v3332 = vpop.f32.mrf.mxu0
      %v3333 = vadd.f32 %v3220, %v3332
      %3334 = vmatmul.f32.gmra.mxu0 %v2654
      %v3335 = vpop.f32.mrf.mxu0
      %v3336 = vadd.f32 %v3223, %v3335
      %3337 = vmatmul.f32.gmra.mxu0 %v2655
      %v3338 = vpop.f32.mrf.mxu0
      %v3339 = vadd.f32 %v3226, %v3338
      %3340 = vmatmul.f32.gmra.mxu0 %v2656
      %v3341 = vpop.f32.mrf.mxu0
      %v3342 = vadd.f32 %v3229, %v3341
      %3343 = vmatmul.f32.gmra.mxu0 %v2657
      %v3344 = vpop.f32.mrf.mxu0
      %v3345 = vadd.f32 %v3232, %v3344
      %3346 = vmatmul.f32.gmra.mxu0 %v2658
      %v3347 = vpop.f32.mrf.mxu0
      %v3348 = vadd.f32 %v3235, %v3347
      %3349 = vmatmul.f32.gmra.mxu0 %v2659
      %v3350 = vpop.f32.mrf.mxu0
      %v3351 = vadd.f32 %v3238, %v3350
      %3352 = vmatmul.f32.gmra.mxu0 %v2660
      %v3353 = vpop.f32.mrf.mxu0
      %v3354 = vadd.f32 %v3241, %v3353
      %3355 = vmatmul.f32.gmra.mxu0 %v2661
      %v3356 = vpop.f32.mrf.mxu0
      %v3357 = vadd.f32 %v3244, %v3356
      %3358 = vmatmul.f32.gmra.mxu0 %v2662
      %v3359 = vpop.f32.mrf.mxu0
      %v3360 = vadd.f32 %v3247, %v3359
      %3361 = vmatmul.f32.gmra.mxu0 %v2663
      %v3362 = vpop.f32.mrf.mxu0
      %v3363 = vadd.f32 %v3250, %v3362
      %3364 = vmatmul.f32.gmra.mxu0 %v2664
      %v3365 = vpop.f32.mrf.mxu0
      %v3366 = vadd.f32 %v3253, %v3365
      %3367 = vmatmul.f32.gmra.mxu0 %v2665
      %v3368 = vpop.f32.mrf.mxu0
      %v3369 = vadd.f32 %v3256, %v3368
      %3370 = vmatmul.f32.gmra.mxu0 %v2666
      %v3371 = vpop.f32.mrf.mxu0
      %v3372 = vadd.f32 %v3259, %v3371
      %3373 = vmatmul.f32.gmra.mxu0 %v2667
      %v3374 = vpop.f32.mrf.mxu0
      %v3375 = vadd.f32 %v3262, %v3374
      %3376 = vmatmul.f32.gmra.mxu0 %v2668
      %v3377 = vpop.f32.mrf.mxu0
      %v3378 = vadd.f32 %v3265, %v3377
      %3379 = vmatmul.f32.gmra.mxu0 %v2669
      %v3380 = vpop.f32.mrf.mxu0
      %v3381 = vadd.f32 %v3268, %v3380
      %3382 = vmatmul.f32.gmra.mxu0 %v2670
      %v3383 = vpop.f32.mrf.mxu0
      %v3384 = vadd.f32 %v3271, %v3383
      %3385 = vmatmul.f32.gmra.mxu0 %v2671
      %v3386 = vpop.f32.mrf.mxu0
      %v3387 = vadd.f32 %v3274, %v3386
      %3388 = vmatmul.f32.gmra.mxu0 %v2672
      %v3389 = vpop.f32.mrf.mxu0
      %v3390 = vadd.f32 %v3277, %v3389
      %3391 = vdwg.mxu0
      %3392 = vmatpush.msra.mxu0 %v2800
      %3393 = vmatpush.msra.mxu0 %v2799
      %3394 = vmatpush.msra.mxu0 %v2798
      %3395 = vmatpush.msra.mxu0 %v2797
      %3396 = vmatpush.msra.mxu0 %v2796
      %3397 = vmatpush.msra.mxu0 %v2795
      %3398 = vmatpush.msra.mxu0 %v2794
      %3399 = vmatpush.msra.mxu0 %v2793
      %3400 = vmatpush.msra.mxu0 %v2792
      %3401 = vmatpush.msra.mxu0 %v2791
      %3402 = vmatpush.msra.mxu0 %v2790
      %3403 = vmatpush.msra.mxu0 %v2789
      %3404 = vmatpush.msra.mxu0 %v2788
      %3405 = vmatpush.msra.mxu0 %v2787
      %3406 = vmatpush.msra.mxu0 %v2786
      %3407 = vmatpush.msra.mxu0 %v2785
      %3408 = vmatmul.f32.gmra.mxu0 %v2541
      %v3409 = vpop.f32.mrf.mxu0
      %v3410 = vadd.f32 %v3297, %v3409
      %3411 = vmatmul.f32.gmra.mxu0 %v2542
      %v3412 = vpop.f32.mrf.mxu0
      %v3413 = vadd.f32 %v3300, %v3412
      %3414 = vmatmul.f32.gmra.mxu0 %v2543
      %v3415 = vpop.f32.mrf.mxu0
      %v3416 = vadd.f32 %v3303, %v3415
      %3417 = vmatmul.f32.gmra.mxu0 %v2544
      %v3418 = vpop.f32.mrf.mxu0
      %v3419 = vadd.f32 %v3306, %v3418
      %3420 = vmatmul.f32.gmra.mxu0 %v2545
      %v3421 = vpop.f32.mrf.mxu0
      %v3422 = vadd.f32 %v3309, %v3421
      %3423 = vmatmul.f32.gmra.mxu0 %v2546
      %v3424 = vpop.f32.mrf.mxu0
      %v3425 = vadd.f32 %v3312, %v3424
      %3426 = vmatmul.f32.gmra.mxu0 %v2547
      %v3427 = vpop.f32.mrf.mxu0
      %v3428 = vadd.f32 %v3315, %v3427
      %3429 = vmatmul.f32.gmra.mxu0 %v2548
      %v3430 = vpop.f32.mrf.mxu0
      %v3431 = vadd.f32 %v3318, %v3430
      %3432 = vmatmul.f32.gmra.mxu0 %v2549
      %v3433 = vpop.f32.mrf.mxu0
      %v3434 = vadd.f32 %v3321, %v3433
      %3435 = vmatmul.f32.gmra.mxu0 %v2550
      %v3436 = vpop.f32.mrf.mxu0
      %v3437 = vadd.f32 %v3324, %v3436
      %3438 = vmatmul.f32.gmra.mxu0 %v2551
      %v3439 = vpop.f32.mrf.mxu0
      %v3440 = vadd.f32 %v3327, %v3439
      %3441 = vmatmul.f32.gmra.mxu0 %v2552
      %v3442 = vpop.f32.mrf.mxu0
      %v3443 = vadd.f32 %v3330, %v3442
      %3444 = vmatmul.f32.gmra.mxu0 %v2553
      %v3445 = vpop.f32.mrf.mxu0
      %v3446 = vadd.f32 %v3333, %v3445
      %3447 = vmatmul.f32.gmra.mxu0 %v2554
      %v3448 = vpop.f32.mrf.mxu0
      %v3449 = vadd.f32 %v3336, %v3448
      %3450 = vmatmul.f32.gmra.mxu0 %v2555
      %v3451 = vpop.f32.mrf.mxu0
      %v3452 = vadd.f32 %v3339, %v3451
      %3453 = vmatmul.f32.gmra.mxu0 %v2556
      %v3454 = vpop.f32.mrf.mxu0
      %v3455 = vadd.f32 %v3342, %v3454
      %3456 = vmatmul.f32.gmra.mxu0 %v2557
      %v3457 = vpop.f32.mrf.mxu0
      %v3458 = vadd.f32 %v3345, %v3457
      %3459 = vmatmul.f32.gmra.mxu0 %v2558
      %v3460 = vpop.f32.mrf.mxu0
      %v3461 = vadd.f32 %v3348, %v3460
      %3462 = vmatmul.f32.gmra.mxu0 %v2559
      %v3463 = vpop.f32.mrf.mxu0
      %v3464 = vadd.f32 %v3351, %v3463
      %3465 = vmatmul.f32.gmra.mxu0 %v2560
      %v3466 = vpop.f32.mrf.mxu0
      %v3467 = vadd.f32 %v3354, %v3466
      %3468 = vmatmul.f32.gmra.mxu0 %v2561
      %v3469 = vpop.f32.mrf.mxu0
      %v3470 = vadd.f32 %v3357, %v3469
      %3471 = vmatmul.f32.gmra.mxu0 %v2562
      %v3472 = vpop.f32.mrf.mxu0
      %v3473 = vadd.f32 %v3360, %v3472
      %3474 = vmatmul.f32.gmra.mxu0 %v2563
      %v3475 = vpop.f32.mrf.mxu0
      %v3476 = vadd.f32 %v3363, %v3475
      %3477 = vmatmul.f32.gmra.mxu0 %v2564
      %v3478 = vpop.f32.mrf.mxu0
      %v3479 = vadd.f32 %v3366, %v3478
      %3480 = vmatmul.f32.gmra.mxu0 %v2565
      %v3481 = vpop.f32.mrf.mxu0
      %v3482 = vadd.f32 %v3369, %v3481
      %3483 = vmatmul.f32.gmra.mxu0 %v2566
      %v3484 = vpop.f32.mrf.mxu0
      %v3485 = vadd.f32 %v3372, %v3484
      %3486 = vmatmul.f32.gmra.mxu0 %v2567
      %v3487 = vpop.f32.mrf.mxu0
      %v3488 = vadd.f32 %v3375, %v3487
      %3489 = vmatmul.f32.gmra.mxu0 %v2568
      %v3490 = vpop.f32.mrf.mxu0
      %v3491 = vadd.f32 %v3378, %v3490
      %3492 = vmatmul.f32.gmra.mxu0 %v2569
      %v3493 = vpop.f32.mrf.mxu0
      %v3494 = vadd.f32 %v3381, %v3493
      %3495 = vmatmul.f32.gmra.mxu0 %v2570
      %v3496 = vpop.f32.mrf.mxu0
      %v3497 = vadd.f32 %v3384, %v3496
      %3498 = vmatmul.f32.gmra.mxu0 %v2571
      %v3499 = vpop.f32.mrf.mxu0
      %v3500 = vadd.f32 %v3387, %v3499
      %3501 = vmatmul.f32.gmra.mxu0 %v2572
      %v3502 = vpop.f32.mrf.mxu0
      %v3503 = vadd.f32 %v3390, %v3502
      %3504 = vdwg.mxu0
      %3505 = vmatpush.msra.mxu0 %v2816
      %3506 = vmatpush.msra.mxu0 %v2815
      %3507 = vmatpush.msra.mxu0 %v2814
      %3508 = vmatpush.msra.mxu0 %v2813
      %3509 = vmatpush.msra.mxu0 %v2812
      %3510 = vmatpush.msra.mxu0 %v2811
      %3511 = vmatpush.msra.mxu0 %v2810
      %3512 = vmatpush.msra.mxu0 %v2809
      %3513 = vmatpush.msra.mxu0 %v2808
      %3514 = vmatpush.msra.mxu0 %v2807
      %3515 = vmatpush.msra.mxu0 %v2806
      %3516 = vmatpush.msra.mxu0 %v2805
      %3517 = vmatpush.msra.mxu0 %v2804
      %3518 = vmatpush.msra.mxu0 %v2803
      %3519 = vmatpush.msra.mxu0 %v2802
      %3520 = vmatpush.msra.mxu0 %v2801
      %3521 = vmatmul.f32.gmra.mxu0 %v2737
      %v3522 = vpop.f32.mrf.mxu0
      %v3523 = vadd.f32 %v3410, %v3522
      %3524 = vmatmul.f32.gmra.mxu0 %v2738
      %v3525 = vpop.f32.mrf.mxu0
      %v3526 = vadd.f32 %v3413, %v3525
      %3527 = vmatmul.f32.gmra.mxu0 %v2739
      %v3528 = vpop.f32.mrf.mxu0
      %v3529 = vadd.f32 %v3416, %v3528
      %3530 = vmatmul.f32.gmra.mxu0 %v2740
      %v3531 = vpop.f32.mrf.mxu0
      %v3532 = vadd.f32 %v3419, %v3531
      %3533 = vmatmul.f32.gmra.mxu0 %v2741
      %v3534 = vpop.f32.mrf.mxu0
      %v3535 = vadd.f32 %v3422, %v3534
      %3536 = vmatmul.f32.gmra.mxu0 %v2742
      %v3537 = vpop.f32.mrf.mxu0
      %v3538 = vadd.f32 %v3425, %v3537
      %3539 = vmatmul.f32.gmra.mxu0 %v2743
      %v3540 = vpop.f32.mrf.mxu0
      %v3541 = vadd.f32 %v3428, %v3540
      %3542 = vmatmul.f32.gmra.mxu0 %v2744
      %v3543 = vpop.f32.mrf.mxu0
      %v3544 = vadd.f32 %v3431, %v3543
      %3545 = vmatmul.f32.gmra.mxu0 %v2745
      %v3546 = vpop.f32.mrf.mxu0
      %v3547 = vadd.f32 %v3434, %v3546
      %3548 = vmatmul.f32.gmra.mxu0 %v2746
      %v3549 = vpop.f32.mrf.mxu0
      %v3550 = vadd.f32 %v3437, %v3549
      %3551 = vmatmul.f32.gmra.mxu0 %v2747
      %v3552 = vpop.f32.mrf.mxu0
      %v3553 = vadd.f32 %v3440, %v3552
      %3554 = vmatmul.f32.gmra.mxu0 %v2748
      %v3555 = vpop.f32.mrf.mxu0
      %v3556 = vadd.f32 %v3443, %v3555
      %3557 = vmatmul.f32.gmra.mxu0 %v2749
      %v3558 = vpop.f32.mrf.mxu0
      %v3559 = vadd.f32 %v3446, %v3558
      %3560 = vmatmul.f32.gmra.mxu0 %v2750
      %v3561 = vpop.f32.mrf.mxu0
      %v3562 = vadd.f32 %v3449, %v3561
      %3563 = vmatmul.f32.gmra.mxu0 %v2751
      %v3564 = vpop.f32.mrf.mxu0
      %v3565 = vadd.f32 %v3452, %v3564
      %3566 = vmatmul.f32.gmra.mxu0 %v2752
      %v3567 = vpop.f32.mrf.mxu0
      %v3568 = vadd.f32 %v3455, %v3567
      %3569 = vmatmul.f32.gmra.mxu0 %v2753
      %v3570 = vpop.f32.mrf.mxu0
      %v3571 = vadd.f32 %v3458, %v3570
      %3572 = vmatmul.f32.gmra.mxu0 %v2754
      %v3573 = vpop.f32.mrf.mxu0
      %v3574 = vadd.f32 %v3461, %v3573
      %3575 = vmatmul.f32.gmra.mxu0 %v2755
      %v3576 = vpop.f32.mrf.mxu0
      %v3577 = vadd.f32 %v3464, %v3576
      %3578 = vmatmul.f32.gmra.mxu0 %v2756
      %v3579 = vpop.f32.mrf.mxu0
      %v3580 = vadd.f32 %v3467, %v3579
      %3581 = vmatmul.f32.gmra.mxu0 %v2757
      %v3582 = vpop.f32.mrf.mxu0
      %v3583 = vadd.f32 %v3470, %v3582
      %3584 = vmatmul.f32.gmra.mxu0 %v2758
      %v3585 = vpop.f32.mrf.mxu0
      %v3586 = vadd.f32 %v3473, %v3585
      %3587 = vmatmul.f32.gmra.mxu0 %v2759
      %v3588 = vpop.f32.mrf.mxu0
      %v3589 = vadd.f32 %v3476, %v3588
      %3590 = vmatmul.f32.gmra.mxu0 %v2760
      %v3591 = vpop.f32.mrf.mxu0
      %v3592 = vadd.f32 %v3479, %v3591
      %3593 = vmatmul.f32.gmra.mxu0 %v2761
      %v3594 = vpop.f32.mrf.mxu0
      %v3595 = vadd.f32 %v3482, %v3594
      %3596 = vmatmul.f32.gmra.mxu0 %v2762
      %v3597 = vpop.f32.mrf.mxu0
      %v3598 = vadd.f32 %v3485, %v3597
      %3599 = vmatmul.f32.gmra.mxu0 %v2763
      %v3600 = vpop.f32.mrf.mxu0
      %v3601 = vadd.f32 %v3488, %v3600
      %3602 = vmatmul.f32.gmra.mxu0 %v2764
      %v3603 = vpop.f32.mrf.mxu0
      %v3604 = vadd.f32 %v3491, %v3603
      %3605 = vmatmul.f32.gmra.mxu0 %v2765
      %v3606 = vpop.f32.mrf.mxu0
      %v3607 = vadd.f32 %v3494, %v3606
      %3608 = vmatmul.f32.gmra.mxu0 %v2766
      %v3609 = vpop.f32.mrf.mxu0
      %v3610 = vadd.f32 %v3497, %v3609
      %3611 = vmatmul.f32.gmra.mxu0 %v2767
      %v3612 = vpop.f32.mrf.mxu0
      %v3613 = vadd.f32 %v3500, %v3612
      %3614 = vmatmul.f32.gmra.mxu0 %v2768
      %v3615 = vpop.f32.mrf.mxu0
      %v3616 = vadd.f32 %v3503, %v3615
      %3617 = vdwg.mxu0
      %v3618 = vrot.slane %v2575, 7
      %v3619 = vrot.slane %v2576, 7
      %v3620 = vsel %vm805, %v3618, %v3619
      %v3621 = vsel %vm805, %v2818, %v3618
      %v3622 = vsel %vm805, %v3619, %v2581
      %v3623 = vsel %vm870, %v3622, 0.0
      %v3624 = vsel %vm871, %v2635, 0.0
      %v3625 = vsel %vm872, %v2634, 0.0
      %v3626 = vsel %vm873, %v2633, 0.0
      %v3627 = vsel %vm874, %v2632, 0.0
      %v3628 = vsel %vm875, %v2631, 0.0
      %v3629 = vsel %vm876, %v2630, 0.0
      %v3630 = vsel %vm877, %v2629, 0.0
      %v3631 = vsel %vm878, %v2628, 0.0
      %v3632 = vsel %vm879, %v2627, 0.0
      %v3633 = vsel %vm880, %v2626, 0.0
      %v3634 = vsel %vm881, %v2625, 0.0
      %v3635 = vsel %vm882, %v2624, 0.0
      %v3636 = vsel %vm883, %v2623, 0.0
      %v3637 = vsel %vm884, %v2622, 0.0
      %v3638 = vsel %vm885, %v2621, 0.0
      %v3639 = vsel %vm886, %v2620, 0.0
      %v3640 = vsel %vm887, %v2619, 0.0
      %v3641 = vsel %vm888, %v2618, 0.0
      %v3642 = vsel %vm889, %v2617, 0.0
      %v3643 = vsel %vm890, %v2616, 0.0
      %v3644 = vsel %vm891, %v2615, 0.0
      %v3645 = vsel %vm892, %v2614, 0.0
      %v3646 = vsel %vm893, %v2613, 0.0
      %v3647 = vsel %vm894, %v2612, 0.0
      %v3648 = vsel %vm895, %v2611, 0.0
      %v3649 = vsel %vm896, %v2610, 0.0
      %v3650 = vsel %vm897, %v2609, 0.0
      %v3651 = vsel %vm898, %v2820, 0.0
      %v3652 = vsel %vm899, %v2819, 0.0
      %v3653 = vsel %vm900, %v3621, 0.0
      %v3654 = vsel %vm901, %v3620, 0.0
      %v3655 = vrot.slane %v2575, 1
      %v3656 = vrot.slane %v2576, 1
      %v3657 = vsel %vm966, %v3655, %v3656
      %v3658 = vsel %vm966, %v2855, %v3655
      %v3659 = vsel %vm966, %v3656, %v2677
      %v3660 = vsel %vm1031, %v2731, 0.0
      %v3661 = vsel %vm1032, %v2730, 0.0
      %v3662 = vsel %vm1033, %v2729, 0.0
      %v3663 = vsel %vm1034, %v2728, 0.0
      %v3664 = vsel %vm1035, %v2727, 0.0
      %v3665 = vsel %vm1036, %v2726, 0.0
      %v3666 = vsel %vm1037, %v2725, 0.0
      %v3667 = vsel %vm1038, %v2724, 0.0
      %v3668 = vsel %vm1039, %v2723, 0.0
      %v3669 = vsel %vm1040, %v2722, 0.0
      %v3670 = vsel %vm1041, %v2721, 0.0
      %v3671 = vsel %vm1042, %v2720, 0.0
      %v3672 = vsel %vm1043, %v2719, 0.0
      %v3673 = vsel %vm1044, %v2718, 0.0
      %v3674 = vsel %vm1045, %v2717, 0.0
      %v3675 = vsel %vm1046, %v2716, 0.0
      %v3676 = vsel %vm1047, %v2715, 0.0
      %v3677 = vsel %vm1048, %v2714, 0.0
      %v3678 = vsel %vm1049, %v2713, 0.0
      %v3679 = vsel %vm1050, %v2712, 0.0
      %v3680 = vsel %vm1051, %v2711, 0.0
      %v3681 = vsel %vm1052, %v2710, 0.0
      %v3682 = vsel %vm1053, %v2709, 0.0
      %v3683 = vsel %vm1054, %v2708, 0.0
      %v3684 = vsel %vm1055, %v2707, 0.0
      %v3685 = vsel %vm1056, %v2706, 0.0
      %v3686 = vsel %vm1057, %v2705, 0.0
      %v3687 = vsel %vm1058, %v2857, 0.0
      %v3688 = vsel %vm1059, %v2856, 0.0
      %v3689 = vsel %vm1060, %v3658, 0.0
      %v3690 = vsel %vm1061, %v3657, 0.0
      %v3691 = vsel %vm1062, %v3659, 0.0
      %s3692 = scalar_lea.vmem %s3, 768
      %v3693 = vld [vmem:[%s3692] sm:$0xff]
      %v3694 = vld [vmem:[%s3692 + $0x8] sm:$0xff]
      %v3695 = vld [vmem:[%s3692 + $0x10] sm:$0xff]
      %v3696 = vld [vmem:[%s3692 + $0x18] sm:$0xff]
      %v3697 = vld [vmem:[%s3692 + $0x20] sm:$0xff]
      %v3698 = vld [vmem:[%s3692 + $0x28] sm:$0xff]
      %v3699 = vld [vmem:[%s3692 + $0x30] sm:$0xff]
      %v3700 = vld [vmem:[%s3692 + $0x38] sm:$0xff]
      %v3701 = vld [vmem:[%s3692 + $0x40] sm:$0xff]
      %v3702 = vld [vmem:[%s3692 + $0x48] sm:$0xff]
      %v3703 = vld [vmem:[%s3692 + $0x50] sm:$0xff]
      %v3704 = vld [vmem:[%s3692 + $0x58] sm:$0xff]
      %v3705 = vld [vmem:[%s3692 + $0x60] sm:$0xff]
      %v3706 = vld [vmem:[%s3692 + $0x68] sm:$0xff]
      %v3707 = vld [vmem:[%s3692 + $0x70] sm:$0xff]
      %v3708 = vld [vmem:[%s3692 + $0x78] sm:$0xff]
      %v3709 = vld [vmem:[%s3692 + $0x80] sm:$0xff]
      %v3710 = vld [vmem:[%s3692 + $0x88] sm:$0xff]
      %v3711 = vld [vmem:[%s3692 + $0x90] sm:$0xff]
      %v3712 = vld [vmem:[%s3692 + $0x98] sm:$0xff]
      %v3713 = vld [vmem:[%s3692 + $0xa0] sm:$0xff]
      %v3714 = vld [vmem:[%s3692 + $0xa8] sm:$0xff]
      %v3715 = vld [vmem:[%s3692 + $0xb0] sm:$0xff]
      %v3716 = vld [vmem:[%s3692 + $0xb8] sm:$0xff]
      %v3717 = vld [vmem:[%s3692 + $0xc0] sm:$0xff]
      %v3718 = vld [vmem:[%s3692 + $0xc8] sm:$0xff]
      %v3719 = vld [vmem:[%s3692 + $0xd0] sm:$0xff]
      %v3720 = vld [vmem:[%s3692 + $0xd8] sm:$0xff]
      %v3721 = vld [vmem:[%s3692 + $0xe0] sm:$0xff]
      %v3722 = vld [vmem:[%s3692 + $0xe8] sm:$0xff]
      %v3723 = vld [vmem:[%s3692 + $0xf0] sm:$0xff]
      %v3724 = vld [vmem:[%s3692 + $0xf8] sm:$0xff]
      %v3725 = vld [vmem:[%s3692 + $0x100] sm:$0xff]
      %v3726 = vld [vmem:[%s3692 + $0x108] sm:$0xff]
      %v3727 = vld [vmem:[%s3692 + $0x110] sm:$0xff]
      %v3728 = vld [vmem:[%s3692 + $0x118] sm:$0xff]
      %v3729 = vld [vmem:[%s3692 + $0x120] sm:$0xff]
      %v3730 = vld [vmem:[%s3692 + $0x128] sm:$0xff]
      %v3731 = vld [vmem:[%s3692 + $0x130] sm:$0xff]
      %v3732 = vld [vmem:[%s3692 + $0x138] sm:$0xff]
      %v3733 = vld [vmem:[%s3692 + $0x140] sm:$0xff]
      %v3734 = vld [vmem:[%s3692 + $0x148] sm:$0xff]
      %v3735 = vld [vmem:[%s3692 + $0x150] sm:$0xff]
      %v3736 = vld [vmem:[%s3692 + $0x158] sm:$0xff]
      %v3737 = vld [vmem:[%s3692 + $0x160] sm:$0xff]
      %v3738 = vld [vmem:[%s3692 + $0x168] sm:$0xff]
      %v3739 = vld [vmem:[%s3692 + $0x170] sm:$0xff]
      %v3740 = vld [vmem:[%s3692 + $0x178] sm:$0xff]
      %3741 = vmatpush.msra.mxu0 %v3708
      %3742 = vmatpush.msra.mxu0 %v3707
      %3743 = vmatpush.msra.mxu0 %v3706
      %3744 = vmatpush.msra.mxu0 %v3705
      %3745 = vmatpush.msra.mxu0 %v3704
      %3746 = vmatpush.msra.mxu0 %v3703
      %3747 = vmatpush.msra.mxu0 %v3702
      %3748 = vmatpush.msra.mxu0 %v3701
      %3749 = vmatpush.msra.mxu0 %v3700
      %3750 = vmatpush.msra.mxu0 %v3699
      %3751 = vmatpush.msra.mxu0 %v3698
      %3752 = vmatpush.msra.mxu0 %v3697
      %3753 = vmatpush.msra.mxu0 %v3696
      %3754 = vmatpush.msra.mxu0 %v3695
      %3755 = vmatpush.msra.mxu0 %v3694
      %3756 = vmatpush.msra.mxu0 %v3693
      %3757 = vmatmul.f32.gmra.mxu0 %v3623
      %v3758 = vpop.f32.mrf.mxu0
      %v3759 = vadd.f32 0.0, %v3758
      %3760 = vmatmul.f32.gmra.mxu0 %v3624
      %v3761 = vpop.f32.mrf.mxu0
      %v3762 = vadd.f32 0.0, %v3761
      %3763 = vmatmul.f32.gmra.mxu0 %v3625
      %v3764 = vpop.f32.mrf.mxu0
      %v3765 = vadd.f32 0.0, %v3764
      %3766 = vmatmul.f32.gmra.mxu0 %v3626
      %v3767 = vpop.f32.mrf.mxu0
      %v3768 = vadd.f32 0.0, %v3767
      %3769 = vmatmul.f32.gmra.mxu0 %v3627
      %v3770 = vpop.f32.mrf.mxu0
      %v3771 = vadd.f32 0.0, %v3770
      %3772 = vmatmul.f32.gmra.mxu0 %v3628
      %v3773 = vpop.f32.mrf.mxu0
      %v3774 = vadd.f32 0.0, %v3773
      %3775 = vmatmul.f32.gmra.mxu0 %v3629
      %v3776 = vpop.f32.mrf.mxu0
      %v3777 = vadd.f32 0.0, %v3776
      %3778 = vmatmul.f32.gmra.mxu0 %v3630
      %v3779 = vpop.f32.mrf.mxu0
      %v3780 = vadd.f32 0.0, %v3779
      %3781 = vmatmul.f32.gmra.mxu0 %v3631
      %v3782 = vpop.f32.mrf.mxu0
      %v3783 = vadd.f32 0.0, %v3782
      %3784 = vmatmul.f32.gmra.mxu0 %v3632
      %v3785 = vpop.f32.mrf.mxu0
      %v3786 = vadd.f32 0.0, %v3785
      %3787 = vmatmul.f32.gmra.mxu0 %v3633
      %v3788 = vpop.f32.mrf.mxu0
      %v3789 = vadd.f32 0.0, %v3788
      %3790 = vmatmul.f32.gmra.mxu0 %v3634
      %v3791 = vpop.f32.mrf.mxu0
      %v3792 = vadd.f32 0.0, %v3791
      %3793 = vmatmul.f32.gmra.mxu0 %v3635
      %v3794 = vpop.f32.mrf.mxu0
      %v3795 = vadd.f32 0.0, %v3794
      %3796 = vmatmul.f32.gmra.mxu0 %v3636
      %v3797 = vpop.f32.mrf.mxu0
      %v3798 = vadd.f32 0.0, %v3797
      %3799 = vmatmul.f32.gmra.mxu0 %v3637
      %v3800 = vpop.f32.mrf.mxu0
      %v3801 = vadd.f32 0.0, %v3800
      %3802 = vmatmul.f32.gmra.mxu0 %v3638
      %v3803 = vpop.f32.mrf.mxu0
      %v3804 = vadd.f32 0.0, %v3803
      %3805 = vmatmul.f32.gmra.mxu0 %v3639
      %v3806 = vpop.f32.mrf.mxu0
      %v3807 = vadd.f32 0.0, %v3806
      %3808 = vmatmul.f32.gmra.mxu0 %v3640
      %v3809 = vpop.f32.mrf.mxu0
      %v3810 = vadd.f32 0.0, %v3809
      %3811 = vmatmul.f32.gmra.mxu0 %v3641
      %v3812 = vpop.f32.mrf.mxu0
      %v3813 = vadd.f32 0.0, %v3812
      %3814 = vmatmul.f32.gmra.mxu0 %v3642
      %v3815 = vpop.f32.mrf.mxu0
      %v3816 = vadd.f32 0.0, %v3815
      %3817 = vmatmul.f32.gmra.mxu0 %v3643
      %v3818 = vpop.f32.mrf.mxu0
      %v3819 = vadd.f32 0.0, %v3818
      %3820 = vmatmul.f32.gmra.mxu0 %v3644
      %v3821 = vpop.f32.mrf.mxu0
      %v3822 = vadd.f32 0.0, %v3821
      %3823 = vmatmul.f32.gmra.mxu0 %v3645
      %v3824 = vpop.f32.mrf.mxu0
      %v3825 = vadd.f32 0.0, %v3824
      %3826 = vmatmul.f32.gmra.mxu0 %v3646
      %v3827 = vpop.f32.mrf.mxu0
      %v3828 = vadd.f32 0.0, %v3827
      %3829 = vmatmul.f32.gmra.mxu0 %v3647
      %v3830 = vpop.f32.mrf.mxu0
      %v3831 = vadd.f32 0.0, %v3830
      %3832 = vmatmul.f32.gmra.mxu0 %v3648
      %v3833 = vpop.f32.mrf.mxu0
      %v3834 = vadd.f32 0.0, %v3833
      %3835 = vmatmul.f32.gmra.mxu0 %v3649
      %v3836 = vpop.f32.mrf.mxu0
      %v3837 = vadd.f32 0.0, %v3836
      %3838 = vmatmul.f32.gmra.mxu0 %v3650
      %v3839 = vpop.f32.mrf.mxu0
      %v3840 = vadd.f32 0.0, %v3839
      %3841 = vmatmul.f32.gmra.mxu0 %v3651
      %v3842 = vpop.f32.mrf.mxu0
      %v3843 = vadd.f32 0.0, %v3842
      %3844 = vmatmul.f32.gmra.mxu0 %v3652
      %v3845 = vpop.f32.mrf.mxu0
      %v3846 = vadd.f32 0.0, %v3845
      %3847 = vmatmul.f32.gmra.mxu0 %v3653
      %v3848 = vpop.f32.mrf.mxu0
      %v3849 = vadd.f32 0.0, %v3848
      %3850 = vmatmul.f32.gmra.mxu0 %v3654
      %v3851 = vpop.f32.mrf.mxu0
      %v3852 = vadd.f32 0.0, %v3851
      %3853 = vdwg.mxu0
      %3854 = vmatpush.msra.mxu0 %v3724
      %3855 = vmatpush.msra.mxu0 %v3723
      %3856 = vmatpush.msra.mxu0 %v3722
      %3857 = vmatpush.msra.mxu0 %v3721
      %3858 = vmatpush.msra.mxu0 %v3720
      %3859 = vmatpush.msra.mxu0 %v3719
      %3860 = vmatpush.msra.mxu0 %v3718
      %3861 = vmatpush.msra.mxu0 %v3717
      %3862 = vmatpush.msra.mxu0 %v3716
      %3863 = vmatpush.msra.mxu0 %v3715
      %3864 = vmatpush.msra.mxu0 %v3714
      %3865 = vmatpush.msra.mxu0 %v3713
      %3866 = vmatpush.msra.mxu0 %v3712
      %3867 = vmatpush.msra.mxu0 %v3711
      %3868 = vmatpush.msra.mxu0 %v3710
      %3869 = vmatpush.msra.mxu0 %v3709
      %3870 = vmatmul.f32.gmra.mxu0 %v2545
      %v3871 = vpop.f32.mrf.mxu0
      %v3872 = vadd.f32 %v3759, %v3871
      %3873 = vmatmul.f32.gmra.mxu0 %v2546
      %v3874 = vpop.f32.mrf.mxu0
      %v3875 = vadd.f32 %v3762, %v3874
      %3876 = vmatmul.f32.gmra.mxu0 %v2547
      %v3877 = vpop.f32.mrf.mxu0
      %v3878 = vadd.f32 %v3765, %v3877
      %3879 = vmatmul.f32.gmra.mxu0 %v2548
      %v3880 = vpop.f32.mrf.mxu0
      %v3881 = vadd.f32 %v3768, %v3880
      %3882 = vmatmul.f32.gmra.mxu0 %v2549
      %v3883 = vpop.f32.mrf.mxu0
      %v3884 = vadd.f32 %v3771, %v3883
      %3885 = vmatmul.f32.gmra.mxu0 %v2550
      %v3886 = vpop.f32.mrf.mxu0
      %v3887 = vadd.f32 %v3774, %v3886
      %3888 = vmatmul.f32.gmra.mxu0 %v2551
      %v3889 = vpop.f32.mrf.mxu0
      %v3890 = vadd.f32 %v3777, %v3889
      %3891 = vmatmul.f32.gmra.mxu0 %v2552
      %v3892 = vpop.f32.mrf.mxu0
      %v3893 = vadd.f32 %v3780, %v3892
      %3894 = vmatmul.f32.gmra.mxu0 %v2553
      %v3895 = vpop.f32.mrf.mxu0
      %v3896 = vadd.f32 %v3783, %v3895
      %3897 = vmatmul.f32.gmra.mxu0 %v2554
      %v3898 = vpop.f32.mrf.mxu0
      %v3899 = vadd.f32 %v3786, %v3898
      %3900 = vmatmul.f32.gmra.mxu0 %v2555
      %v3901 = vpop.f32.mrf.mxu0
      %v3902 = vadd.f32 %v3789, %v3901
      %3903 = vmatmul.f32.gmra.mxu0 %v2556
      %v3904 = vpop.f32.mrf.mxu0
      %v3905 = vadd.f32 %v3792, %v3904
      %3906 = vmatmul.f32.gmra.mxu0 %v2557
      %v3907 = vpop.f32.mrf.mxu0
      %v3908 = vadd.f32 %v3795, %v3907
      %3909 = vmatmul.f32.gmra.mxu0 %v2558
      %v3910 = vpop.f32.mrf.mxu0
      %v3911 = vadd.f32 %v3798, %v3910
      %3912 = vmatmul.f32.gmra.mxu0 %v2559
      %v3913 = vpop.f32.mrf.mxu0
      %v3914 = vadd.f32 %v3801, %v3913
      %3915 = vmatmul.f32.gmra.mxu0 %v2560
      %v3916 = vpop.f32.mrf.mxu0
      %v3917 = vadd.f32 %v3804, %v3916
      %3918 = vmatmul.f32.gmra.mxu0 %v2561
      %v3919 = vpop.f32.mrf.mxu0
      %v3920 = vadd.f32 %v3807, %v3919
      %3921 = vmatmul.f32.gmra.mxu0 %v2562
      %v3922 = vpop.f32.mrf.mxu0
      %v3923 = vadd.f32 %v3810, %v3922
      %3924 = vmatmul.f32.gmra.mxu0 %v2563
      %v3925 = vpop.f32.mrf.mxu0
      %v3926 = vadd.f32 %v3813, %v3925
      %3927 = vmatmul.f32.gmra.mxu0 %v2564
      %v3928 = vpop.f32.mrf.mxu0
      %v3929 = vadd.f32 %v3816, %v3928
      %3930 = vmatmul.f32.gmra.mxu0 %v2565
      %v3931 = vpop.f32.mrf.mxu0
      %v3932 = vadd.f32 %v3819, %v3931
      %3933 = vmatmul.f32.gmra.mxu0 %v2566
      %v3934 = vpop.f32.mrf.mxu0
      %v3935 = vadd.f32 %v3822, %v3934
      %3936 = vmatmul.f32.gmra.mxu0 %v2567
      %v3937 = vpop.f32.mrf.mxu0
      %v3938 = vadd.f32 %v3825, %v3937
      %3939 = vmatmul.f32.gmra.mxu0 %v2568
      %v3940 = vpop.f32.mrf.mxu0
      %v3941 = vadd.f32 %v3828, %v3940
      %3942 = vmatmul.f32.gmra.mxu0 %v2569
      %v3943 = vpop.f32.mrf.mxu0
      %v3944 = vadd.f32 %v3831, %v3943
      %3945 = vmatmul.f32.gmra.mxu0 %v2570
      %v3946 = vpop.f32.mrf.mxu0
      %v3947 = vadd.f32 %v3834, %v3946
      %3948 = vmatmul.f32.gmra.mxu0 %v2571
      %v3949 = vpop.f32.mrf.mxu0
      %v3950 = vadd.f32 %v3837, %v3949
      %3951 = vmatmul.f32.gmra.mxu0 %v2572
      %v3952 = vpop.f32.mrf.mxu0
      %v3953 = vadd.f32 %v3840, %v3952
      %3954 = vmatmul.f32.gmra.mxu0 %v2573
      %v3955 = vpop.f32.mrf.mxu0
      %v3956 = vadd.f32 %v3843, %v3955
      %3957 = vmatmul.f32.gmra.mxu0 %v2574
      %v3958 = vpop.f32.mrf.mxu0
      %v3959 = vadd.f32 %v3846, %v3958
      %3960 = vmatmul.f32.gmra.mxu0 %v2575
      %v3961 = vpop.f32.mrf.mxu0
      %v3962 = vadd.f32 %v3849, %v3961
      %3963 = vmatmul.f32.gmra.mxu0 %v2576
      %v3964 = vpop.f32.mrf.mxu0
      %v3965 = vadd.f32 %v3852, %v3964
      %3966 = vdwg.mxu0
      %3967 = vmatpush.msra.mxu0 %v3740
      %3968 = vmatpush.msra.mxu0 %v3739
      %3969 = vmatpush.msra.mxu0 %v3738
      %3970 = vmatpush.msra.mxu0 %v3737
      %3971 = vmatpush.msra.mxu0 %v3736
      %3972 = vmatpush.msra.mxu0 %v3735
      %3973 = vmatpush.msra.mxu0 %v3734
      %3974 = vmatpush.msra.mxu0 %v3733
      %3975 = vmatpush.msra.mxu0 %v3732
      %3976 = vmatpush.msra.mxu0 %v3731
      %3977 = vmatpush.msra.mxu0 %v3730
      %3978 = vmatpush.msra.mxu0 %v3729
      %3979 = vmatpush.msra.mxu0 %v3728
      %3980 = vmatpush.msra.mxu0 %v3727
      %3981 = vmatpush.msra.mxu0 %v3726
      %3982 = vmatpush.msra.mxu0 %v3725
      %3983 = vmatmul.f32.gmra.mxu0 %v3660
      %v3984 = vpop.f32.mrf.mxu0
      %v3985 = vadd.f32 %v3872, %v3984
      %3986 = vmatmul.f32.gmra.mxu0 %v3661
      %v3987 = vpop.f32.mrf.mxu0
      %v3988 = vadd.f32 %v3875, %v3987
      %3989 = vmatmul.f32.gmra.mxu0 %v3662
      %v3990 = vpop.f32.mrf.mxu0
      %v3991 = vadd.f32 %v3878, %v3990
      %3992 = vmatmul.f32.gmra.mxu0 %v3663
      %v3993 = vpop.f32.mrf.mxu0
      %v3994 = vadd.f32 %v3881, %v3993
      %3995 = vmatmul.f32.gmra.mxu0 %v3664
      %v3996 = vpop.f32.mrf.mxu0
      %v3997 = vadd.f32 %v3884, %v3996
      %3998 = vmatmul.f32.gmra.mxu0 %v3665
      %v3999 = vpop.f32.mrf.mxu0
      %v4000 = vadd.f32 %v3887, %v3999
      %4001 = vmatmul.f32.gmra.mxu0 %v3666
      %v4002 = vpop.f32.mrf.mxu0
      %v4003 = vadd.f32 %v3890, %v4002
      %4004 = vmatmul.f32.gmra.mxu0 %v3667
      %v4005 = vpop.f32.mrf.mxu0
      %v4006 = vadd.f32 %v3893, %v4005
      %4007 = vmatmul.f32.gmra.mxu0 %v3668
      %v4008 = vpop.f32.mrf.mxu0
      %v4009 = vadd.f32 %v3896, %v4008
      %4010 = vmatmul.f32.gmra.mxu0 %v3669
      %v4011 = vpop.f32.mrf.mxu0
      %v4012 = vadd.f32 %v3899, %v4011
      %4013 = vmatmul.f32.gmra.mxu0 %v3670
      %v4014 = vpop.f32.mrf.mxu0
      %v4015 = vadd.f32 %v3902, %v4014
      %4016 = vmatmul.f32.gmra.mxu0 %v3671
      %v4017 = vpop.f32.mrf.mxu0
      %v4018 = vadd.f32 %v3905, %v4017
      %4019 = vmatmul.f32.gmra.mxu0 %v3672
      %v4020 = vpop.f32.mrf.mxu0
      %v4021 = vadd.f32 %v3908, %v4020
      %4022 = vmatmul.f32.gmra.mxu0 %v3673
      %v4023 = vpop.f32.mrf.mxu0
      %v4024 = vadd.f32 %v3911, %v4023
      %4025 = vmatmul.f32.gmra.mxu0 %v3674
      %v4026 = vpop.f32.mrf.mxu0
      %v4027 = vadd.f32 %v3914, %v4026
      %4028 = vmatmul.f32.gmra.mxu0 %v3675
      %v4029 = vpop.f32.mrf.mxu0
      %v4030 = vadd.f32 %v3917, %v4029
      %4031 = vmatmul.f32.gmra.mxu0 %v3676
      %v4032 = vpop.f32.mrf.mxu0
      %v4033 = vadd.f32 %v3920, %v4032
      %4034 = vmatmul.f32.gmra.mxu0 %v3677
      %v4035 = vpop.f32.mrf.mxu0
      %v4036 = vadd.f32 %v3923, %v4035
      %4037 = vmatmul.f32.gmra.mxu0 %v3678
      %v4038 = vpop.f32.mrf.mxu0
      %v4039 = vadd.f32 %v3926, %v4038
      %4040 = vmatmul.f32.gmra.mxu0 %v3679
      %v4041 = vpop.f32.mrf.mxu0
      %v4042 = vadd.f32 %v3929, %v4041
      %4043 = vmatmul.f32.gmra.mxu0 %v3680
      %v4044 = vpop.f32.mrf.mxu0
      %v4045 = vadd.f32 %v3932, %v4044
      %4046 = vmatmul.f32.gmra.mxu0 %v3681
      %v4047 = vpop.f32.mrf.mxu0
      %v4048 = vadd.f32 %v3935, %v4047
      %4049 = vmatmul.f32.gmra.mxu0 %v3682
      %v4050 = vpop.f32.mrf.mxu0
      %v4051 = vadd.f32 %v3938, %v4050
      %4052 = vmatmul.f32.gmra.mxu0 %v3683
      %v4053 = vpop.f32.mrf.mxu0
      %v4054 = vadd.f32 %v3941, %v4053
      %4055 = vmatmul.f32.gmra.mxu0 %v3684
      %v4056 = vpop.f32.mrf.mxu0
      %v4057 = vadd.f32 %v3944, %v4056
      %4058 = vmatmul.f32.gmra.mxu0 %v3685
      %v4059 = vpop.f32.mrf.mxu0
      %v4060 = vadd.f32 %v3947, %v4059
      %4061 = vmatmul.f32.gmra.mxu0 %v3686
      %v4062 = vpop.f32.mrf.mxu0
      %v4063 = vadd.f32 %v3950, %v4062
      %4064 = vmatmul.f32.gmra.mxu0 %v3687
      %v4065 = vpop.f32.mrf.mxu0
      %v4066 = vadd.f32 %v3953, %v4065
      %4067 = vmatmul.f32.gmra.mxu0 %v3688
      %v4068 = vpop.f32.mrf.mxu0
      %v4069 = vadd.f32 %v3956, %v4068
      %4070 = vmatmul.f32.gmra.mxu0 %v3689
      %v4071 = vpop.f32.mrf.mxu0
      %v4072 = vadd.f32 %v3959, %v4071
      %4073 = vmatmul.f32.gmra.mxu0 %v3690
      %v4074 = vpop.f32.mrf.mxu0
      %v4075 = vadd.f32 %v3962, %v4074
      %4076 = vmatmul.f32.gmra.mxu0 %v3691
      %v4077 = vpop.f32.mrf.mxu0
      %v4078 = vadd.f32 %v3965, %v4077
      %4079 = vdwg.mxu0
      %v4080 = vadd.f32 %v3523, %v3985
      %v4081 = vadd.f32 %v3526, %v3988
      %v4082 = vadd.f32 %v3529, %v3991
      %v4083 = vadd.f32 %v3532, %v3994
      %v4084 = vadd.f32 %v3535, %v3997
      %v4085 = vadd.f32 %v3538, %v4000
      %v4086 = vadd.f32 %v3541, %v4003
      %v4087 = vadd.f32 %v3544, %v4006
      %v4088 = vadd.f32 %v3547, %v4009
      %v4089 = vadd.f32 %v3550, %v4012
      %v4090 = vadd.f32 %v3553, %v4015
      %v4091 = vadd.f32 %v3556, %v4018
      %v4092 = vadd.f32 %v3559, %v4021
      %v4093 = vadd.f32 %v3562, %v4024
      %v4094 = vadd.f32 %v3565, %v4027
      %v4095 = vadd.f32 %v3568, %v4030
      %v4096 = vadd.f32 %v3571, %v4033
      %v4097 = vadd.f32 %v3574, %v4036
      %v4098 = vadd.f32 %v3577, %v4039
      %v4099 = vadd.f32 %v3580, %v4042
      %v4100 = vadd.f32 %v3583, %v4045
      %v4101 = vadd.f32 %v3586, %v4048
      %v4102 = vadd.f32 %v3589, %v4051
      %v4103 = vadd.f32 %v3592, %v4054
      %v4104 = vadd.f32 %v3595, %v4057
      %v4105 = vadd.f32 %v3598, %v4060
      %v4106 = vadd.f32 %v3601, %v4063
      %v4107 = vadd.f32 %v3604, %v4066
      %v4108 = vadd.f32 %v3607, %v4069
      %v4109 = vadd.f32 %v3610, %v4072
      %v4110 = vadd.f32 %v3613, %v4075
      %v4111 = vadd.f32 %v3616, %v4078
      %v4113 = vperm.slane %v231, 0
      %v4115 = vadd.f32 %v4080, %v4113
      %v4116 = vadd.f32 %v4081, %v4113
      %v4117 = vadd.f32 %v4082, %v4113
      %v4118 = vadd.f32 %v4083, %v4113
      %v4119 = vadd.f32 %v4084, %v4113
      %v4120 = vadd.f32 %v4085, %v4113
      %v4121 = vadd.f32 %v4086, %v4113
      %v4122 = vadd.f32 %v4087, %v4113
      %v4123 = vadd.f32 %v4088, %v4113
      %v4124 = vadd.f32 %v4089, %v4113
      %v4125 = vadd.f32 %v4090, %v4113
      %v4126 = vadd.f32 %v4091, %v4113
      %v4127 = vadd.f32 %v4092, %v4113
      %v4128 = vadd.f32 %v4093, %v4113
      %v4129 = vadd.f32 %v4094, %v4113
      %v4130 = vadd.f32 %v4095, %v4113
      %v4131 = vadd.f32 %v4096, %v4113
      %v4132 = vadd.f32 %v4097, %v4113
      %v4133 = vadd.f32 %v4098, %v4113
      %v4134 = vadd.f32 %v4099, %v4113
      %v4135 = vadd.f32 %v4100, %v4113
      %v4136 = vadd.f32 %v4101, %v4113
      %v4137 = vadd.f32 %v4102, %v4113
      %v4138 = vadd.f32 %v4103, %v4113
      %v4139 = vadd.f32 %v4104, %v4113
      %v4140 = vadd.f32 %v4105, %v4113
      %v4141 = vadd.f32 %v4106, %v4113
      %v4142 = vadd.f32 %v4107, %v4113
      %v4143 = vadd.f32 %v4108, %v4113
      %v4144 = vadd.f32 %v4109, %v4113
      %v4145 = vadd.f32 %v4110, %v4113
      %v4146 = vadd.f32 %v4111, %v4113
      %v4147 = vld [vmem:[%s714] sm:$0xff]
      %v4148 = vld [vmem:[%s714 + $0x8] sm:$0xff]
      %v4149 = vld [vmem:[%s714 + $0x10] sm:$0xff]
      %v4150 = vld [vmem:[%s714 + $0x18] sm:$0xff]
      %v4151 = vld [vmem:[%s714 + $0x20] sm:$0xff]
      %v4152 = vld [vmem:[%s714 + $0x28] sm:$0xff]
      %v4153 = vld [vmem:[%s714 + $0x30] sm:$0xff]
      %v4154 = vld [vmem:[%s714 + $0x38] sm:$0xff]
      %v4155 = vld [vmem:[%s714 + $0x40] sm:$0xff]
      %v4156 = vld [vmem:[%s714 + $0x48] sm:$0xff]
      %v4157 = vld [vmem:[%s714 + $0x50] sm:$0xff]
      %v4158 = vld [vmem:[%s714 + $0x58] sm:$0xff]
      %v4159 = vld [vmem:[%s714 + $0x60] sm:$0xff]
      %v4160 = vld [vmem:[%s714 + $0x68] sm:$0xff]
      %v4161 = vld [vmem:[%s714 + $0x70] sm:$0xff]
      %v4162 = vld [vmem:[%s714 + $0x78] sm:$0xff]
      %v4163 = vld [vmem:[%s714 + $0x80] sm:$0xff]
      %v4164 = vld [vmem:[%s714 + $0x88] sm:$0xff]
      %v4165 = vld [vmem:[%s714 + $0x90] sm:$0xff]
      %v4166 = vld [vmem:[%s714 + $0x98] sm:$0xff]
      %v4167 = vld [vmem:[%s714 + $0xa0] sm:$0xff]
      %v4168 = vld [vmem:[%s714 + $0xa8] sm:$0xff]
      %v4169 = vld [vmem:[%s714 + $0xb0] sm:$0xff]
      %v4170 = vld [vmem:[%s714 + $0xb8] sm:$0xff]
      %v4171 = vld [vmem:[%s714 + $0xc0] sm:$0xff]
      %v4172 = vld [vmem:[%s714 + $0xc8] sm:$0xff]
      %v4173 = vld [vmem:[%s714 + $0xd0] sm:$0xff]
      %v4174 = vld [vmem:[%s714 + $0xd8] sm:$0xff]
      %v4175 = vld [vmem:[%s714 + $0xe0] sm:$0xff]
      %v4176 = vld [vmem:[%s714 + $0xe8] sm:$0xff]
      %v4177 = vld [vmem:[%s714 + $0xf0] sm:$0xff]
      %v4178 = vld [vmem:[%s714 + $0xf8] sm:$0xff]
      %v4179 = vadd.f32 %v4115, %v4147
      %v4180 = vadd.f32 %v4116, %v4148
      %v4181 = vadd.f32 %v4117, %v4149
      %v4182 = vadd.f32 %v4118, %v4150
      %v4183 = vadd.f32 %v4119, %v4151
      %v4184 = vadd.f32 %v4120, %v4152
      %v4185 = vadd.f32 %v4121, %v4153
      %v4186 = vadd.f32 %v4122, %v4154
      %v4187 = vadd.f32 %v4123, %v4155
      %v4188 = vadd.f32 %v4124, %v4156
      %v4189 = vadd.f32 %v4125, %v4157
      %v4190 = vadd.f32 %v4126, %v4158
      %v4191 = vadd.f32 %v4127, %v4159
      %v4192 = vadd.f32 %v4128, %v4160
      %v4193 = vadd.f32 %v4129, %v4161
      %v4194 = vadd.f32 %v4130, %v4162
      %v4195 = vadd.f32 %v4131, %v4163
      %v4196 = vadd.f32 %v4132, %v4164
      %v4197 = vadd.f32 %v4133, %v4165
      %v4198 = vadd.f32 %v4134, %v4166
      %v4199 = vadd.f32 %v4135, %v4167
      %v4200 = vadd.f32 %v4136, %v4168
      %v4201 = vadd.f32 %v4137, %v4169
      %v4202 = vadd.f32 %v4138, %v4170
      %v4203 = vadd.f32 %v4139, %v4171
      %v4204 = vadd.f32 %v4140, %v4172
      %v4205 = vadd.f32 %v4141, %v4173
      %v4206 = vadd.f32 %v4142, %v4174
      %v4207 = vadd.f32 %v4143, %v4175
      %v4208 = vadd.f32 %v4144, %v4176
      %v4209 = vadd.f32 %v4145, %v4177
      %v4210 = vadd.f32 %v4146, %v4178
      %v4211 = vmax.f32 %v4179, 0.0
      %v4212 = vmax.f32 %v4180, 0.0
      %v4213 = vmax.f32 %v4181, 0.0
      %v4214 = vmax.f32 %v4182, 0.0
      %v4215 = vmax.f32 %v4183, 0.0
      %v4216 = vmax.f32 %v4184, 0.0
      %v4217 = vmax.f32 %v4185, 0.0
      %v4218 = vmax.f32 %v4186, 0.0
      %v4219 = vmax.f32 %v4187, 0.0
      %v4220 = vmax.f32 %v4188, 0.0
      %v4221 = vmax.f32 %v4189, 0.0
      %v4222 = vmax.f32 %v4190, 0.0
      %v4223 = vmax.f32 %v4191, 0.0
      %v4224 = vmax.f32 %v4192, 0.0
      %v4225 = vmax.f32 %v4193, 0.0
      %v4226 = vmax.f32 %v4194, 0.0
      %v4227 = vmax.f32 %v4195, 0.0
      %v4228 = vmax.f32 %v4196, 0.0
      %v4229 = vmax.f32 %v4197, 0.0
      %v4230 = vmax.f32 %v4198, 0.0
      %v4231 = vmax.f32 %v4199, 0.0
      %v4232 = vmax.f32 %v4200, 0.0
      %v4233 = vmax.f32 %v4201, 0.0
      %v4234 = vmax.f32 %v4202, 0.0
      %v4235 = vmax.f32 %v4203, 0.0
      %v4236 = vmax.f32 %v4204, 0.0
      %v4237 = vmax.f32 %v4205, 0.0
      %v4238 = vmax.f32 %v4206, 0.0
      %v4239 = vmax.f32 %v4207, 0.0
      %v4240 = vmax.f32 %v4208, 0.0
      %v4241 = vmax.f32 %v4209, 0.0
      %v4242 = vmax.f32 %v4210, 0.0
      %s4243 = scalar_lea.vmem %s224, %s713
      %4244 = vst [vmem:[%s4243] sm:$0xff] %v4211
      %4245 = vst [vmem:[%s4243 + $0x8] sm:$0xff] %v4212
      %4246 = vst [vmem:[%s4243 + $0x10] sm:$0xff] %v4213
      %4247 = vst [vmem:[%s4243 + $0x18] sm:$0xff] %v4214
      %4248 = vst [vmem:[%s4243 + $0x20] sm:$0xff] %v4215
      %4249 = vst [vmem:[%s4243 + $0x28] sm:$0xff] %v4216
      %4250 = vst [vmem:[%s4243 + $0x30] sm:$0xff] %v4217
      %4251 = vst [vmem:[%s4243 + $0x38] sm:$0xff] %v4218
      %4252 = vst [vmem:[%s4243 + $0x40] sm:$0xff] %v4219
      %4253 = vst [vmem:[%s4243 + $0x48] sm:$0xff] %v4220
      %4254 = vst [vmem:[%s4243 + $0x50] sm:$0xff] %v4221
      %4255 = vst [vmem:[%s4243 + $0x58] sm:$0xff] %v4222
      %4256 = vst [vmem:[%s4243 + $0x60] sm:$0xff] %v4223
      %4257 = vst [vmem:[%s4243 + $0x68] sm:$0xff] %v4224
      %4258 = vst [vmem:[%s4243 + $0x70] sm:$0xff] %v4225
      %4259 = vst [vmem:[%s4243 + $0x78] sm:$0xff] %v4226
      %4260 = vst [vmem:[%s4243 + $0x80] sm:$0xff] %v4227
      %4261 = vst [vmem:[%s4243 + $0x88] sm:$0xff] %v4228
      %4262 = vst [vmem:[%s4243 + $0x90] sm:$0xff] %v4229
      %4263 = vst [vmem:[%s4243 + $0x98] sm:$0xff] %v4230
      %4264 = vst [vmem:[%s4243 + $0xa0] sm:$0xff] %v4231
      %4265 = vst [vmem:[%s4243 + $0xa8] sm:$0xff] %v4232
      %4266 = vst [vmem:[%s4243 + $0xb0] sm:$0xff] %v4233
      %4267 = vst [vmem:[%s4243 + $0xb8] sm:$0xff] %v4234
      %4268 = vst [vmem:[%s4243 + $0xc0] sm:$0xff] %v4235
      %4269 = vst [vmem:[%s4243 + $0xc8] sm:$0xff] %v4236
      %4270 = vst [vmem:[%s4243 + $0xd0] sm:$0xff] %v4237
      %4271 = vst [vmem:[%s4243 + $0xd8] sm:$0xff] %v4238
      %4272 = vst [vmem:[%s4243 + $0xe0] sm:$0xff] %v4239
      %4273 = vst [vmem:[%s4243 + $0xe8] sm:$0xff] %v4240
      %4274 = vst [vmem:[%s4243 + $0xf0] sm:$0xff] %v4241
      %4275 = vst [vmem:[%s4243 + $0xf8] sm:$0xff] %v4242
      %p4276 = scmp.lt.s32.totalorder %s16, 1
      %s4277 = scalar_select %p4276, %s16, 1
      %s4278 = smul.addr %s4277, 32
      %s4279 = smul.addr %s4278, 8
      %s4280 = scalar_lea.vmem %s5, %s4279
      // Predicated region
      $region41: #{resblock_forward.1} parent=39 // pred_check
        %p4281 = pneg %p144
      $region42: #{resblock_forward.1} parent=39 // pred_check_branch
        %4283 = sbr.rel (%p4281) target = $region44
      $region43: #{resblock_forward.1} parent=39 // pred_region
        _
      $region44: #{resblock_forward.1} parent=39 // pred_fallthru
        _
    $region40: #{resblock_forward.1} parent=5 // pred_fallthru
      _
    %p4284 = scmp.le.s32.totalorder 2, %s11
    // Predicated region
    $region45: #{resblock_forward.1} parent=5 // pred_check
      %p4285 = pneg %p4284
    $region46: #{resblock_forward.1} parent=5 // pred_check_branch
      %4287 = sbr.rel (%p4285) target = $region48
    $region47: #{resblock_forward.1} parent=5 // pred_region
      %s4288 = ssub.s32 %s11, 2
      // Predicated region
      $region49: #{resblock_forward.1} parent=47 // pred_check
        %p4289 = pneg %p150
      $region50: #{resblock_forward.1} parent=47 // pred_check_branch
        %4291 = sbr.rel (%p4289) target = $region52
      $region51: #{resblock_forward.1} parent=47 // pred_region
        %p4292 = scmp.lt.s32.totalorder %s17, 1
        %s4293 = scalar_select %p4292, %s17, 1
        %s4294 = smul.addr %s4293, 32
        %s4295 = smul.addr %s4294, 8
        %s4296 = scalar_lea.vmem %s5, %s4295
      $region52: #{resblock_forward.1} parent=47 // pred_fallthru
        _
    $region48: #{resblock_forward.1} parent=5 // pred_fallthru
      _
  $region6: #{resblock_forward.1} parent=0 // loop_footer
    %s15 = sadd.s32 1, %s11
  $region7: #{resblock_forward.1} parent=0 // loop_footer_branch
    %10 = sbr.rel target = $region3
  $region8: #{resblock_forward.1} parent=0 // loop_exit
    _

</llo_original>
